<compile_context>
chip_gen: v5e
topology: v5e:2x2
jax: 0.10.0
libtpu: 0.0.40
codegen_flags: <defaults>
</compile_context>

<pallas_src>
import math

import jax
import jax.numpy as jnp
from jax.experimental import pallas as pl
from jax.experimental.pallas import tpu as pltpu

# ---- small test configuration (consistent with the module's forward) ----
HIDDEN = 32            # hidden_size
NUM_HEADS = 4          # num_heads
HEAD_DIM = HIDDEN // NUM_HEADS
FF = HIDDEN * 4        # dim_feedforward
NUM_LAYERS = 2         # decoder layers
NUM_EMB = 16           # vocab size
EPS = 1e-5             # LayerNorm eps (PyTorch default)
OUT_PAD = 128          # lane-dense padded fc_out width (sliced back in wrapper)
LAYER_OPERANDS = 20    # prepped tensors passed per decoder layer
ATTN_SCALE = 1.0 / math.sqrt(HEAD_DIM)


# ----------------------------- kernel helpers -----------------------------
def _layernorm(x, g, b):
    mu = jnp.mean(x, axis=-1, keepdims=True)
    var = jnp.mean((x - mu) ** 2, axis=-1, keepdims=True)
    return (x - mu) * jax.lax.rsqrt(var + EPS) * g + b


def make_decoder_kernel(B, L, S, num_layers):

    def split_heads(x2d, Lx):
        # (B*Lx, H) -> (NH*B, Lx, HD); leading order (head, batch).
        parts = [x2d[:, h * HEAD_DIM:(h + 1) * HEAD_DIM].reshape(1, B, Lx, HEAD_DIM)
                 for h in range(NUM_HEADS)]
        return jnp.concatenate(parts, axis=0).reshape(NUM_HEADS * B, Lx, HEAD_DIM)

    def mha(qh, kh, vh, Lq, mask):
        # qh: (NH*B, Lq, HD), kh/vh: (NH*B, Lk, HD).  Scale already folded in Wq.
        s = jnp.einsum('cqd,ckd->cqk', qh, kh,
                       preferred_element_type=jnp.float32)
        if mask is not None:
            s = jnp.where(mask, -1e30, s)
        s = s - jnp.max(s, axis=-1, keepdims=True)
        p = jnp.exp(s)
        p = p * pl.reciprocal(jnp.sum(p, axis=-1, keepdims=True), approx=True)
        ctx = jnp.einsum('cqk,ckd->cqd', p, vh,
                         preferred_element_type=jnp.float32)   # (NH*B, Lq, HD)
        # merge heads back into the lane dim: head h -> lanes [h*HD, (h+1)*HD)
        ctx = ctx.reshape(NUM_HEADS, B * Lq, HEAD_DIM)
        return jnp.concatenate([ctx[h] for h in range(NUM_HEADS)], axis=-1)

    def kernel(*refs):
        out_ref = refs[-1]
        x_ref, mem_ref = refs[0], refs[1]
        fcw_ref, fcb_ref = refs[-3], refs[-2]
        layer_refs = refs[2:-3]

        x = x_ref[...]          # (B*L, H)
        mem = mem_ref[...]      # (B*S, H)

        # Causal mask built once, reused by every layer's self-attention.
        row = jax.lax.broadcasted_iota(jnp.int32, (L, L), 0)
        col = jax.lax.broadcasted_iota(jnp.int32, (L, L), 1)
        causal = (col > row).reshape(1, L, L)

        for li in range(num_layers):
            p = layer_refs[li * LAYER_OPERANDS:(li + 1) * LAYER_OPERANDS]
            (sa_wqkv, sa_bqkv, sa_wo, sa_bo,
             ca_wq, ca_bq, ca_wkv, ca_bkv, ca_wo, ca_bo,
             w1, b1, w2, b2,
             g1, be1, g2, be2, g3, be3) = [r[...] for r in p]

            # ---- causal self-attention (single fused QKV matmul) ----
            qkv = jnp.dot(x, sa_wqkv,
                          preferred_element_type=jnp.float32) + sa_bqkv
            qh = split_heads(qkv[:, 0 * HIDDEN:1 * HIDDEN], L)
            kh = split_heads(qkv[:, 1 * HIDDEN:2 * HIDDEN], L)
            vh = split_heads(qkv[:, 2 * HIDDEN:3 * HIDDEN], L)
            ctx = mha(qh, kh, vh, L, causal)
            sa = jnp.dot(ctx, sa_wo,
                         preferred_element_type=jnp.float32) + sa_bo
            x = _layernorm(x + sa, g1, be1)

            # ---- cross-attention (fused KV matmul on the memory) ----
            q = jnp.dot(x, ca_wq, preferred_element_type=jnp.float32) + ca_bq
            kv = jnp.dot(mem, ca_wkv,
                         preferred_element_type=jnp.float32) + ca_bkv
            qh = split_heads(q, L)
            kh = split_heads(kv[:, :HIDDEN], S)
            vh = split_heads(kv[:, HIDDEN:], S)
            ctx = mha(qh, kh, vh, L, None)
            ca = jnp.dot(ctx, ca_wo,
                         preferred_element_type=jnp.float32) + ca_bo
            x = _layernorm(x + ca, g2, be2)

            # ---- feed-forward (ReLU) + residual + norm3 ----
            h1 = jnp.maximum(
                jnp.dot(x, w1, preferred_element_type=jnp.float32) + b1, 0.0)
            ff = jnp.dot(h1, w2, preferred_element_type=jnp.float32) + b2
            x = _layernorm(x + ff, g3, be3)

        # fc_out (padded to 128 lanes -> unmasked, lane-dense stores)
        out_ref[...] = (jnp.dot(x, fcw_ref[...],
                                preferred_element_type=jnp.float32)
                        + fcb_ref[...])

    return kernel


# -------- one-time wrapper-side weight preparation (outside the jit) --------
def _prep_self_attn(w_in, b_in, w_out, b_out):
    # torch in_proj_weight (3H, H) -> fused (H, 3H); fold 1/sqrt(hd) into Wq/bq.
    wqkv = jnp.transpose(w_in).astype(jnp.float32)
    wqkv = wqkv.at[:, :HIDDEN].multiply(ATTN_SCALE)
    bqkv = (b_in.astype(jnp.float32).at[:HIDDEN].multiply(ATTN_SCALE)
            .reshape(1, 3 * HIDDEN))
    wo = jnp.transpose(w_out).astype(jnp.float32)            # (NH*HD, H)
    bo = b_out.astype(jnp.float32).reshape(1, HIDDEN)
    return [wqkv, bqkv, wo, bo]


def _prep_cross_attn(w_in, b_in, w_out, b_out):
    wq = jnp.transpose(w_in[:HIDDEN]).astype(jnp.float32) * ATTN_SCALE
    bq = (b_in[:HIDDEN].astype(jnp.float32) * ATTN_SCALE).reshape(1, HIDDEN)
    wkv = jnp.transpose(w_in[HIDDEN:]).astype(jnp.float32)   # (H, 2H)
    bkv = b_in[HIDDEN:].astype(jnp.float32).reshape(1, 2 * HIDDEN)
    wo = jnp.transpose(w_out).astype(jnp.float32)
    bo = b_out.astype(jnp.float32).reshape(1, HIDDEN)
    return [wq, bq, wkv, bkv, wo, bo]


def _prep_fc(fc_w, fc_b):
    wt = jnp.transpose(fc_w).astype(jnp.float32)             # (H, NUM_EMB)
    w_pad = jnp.zeros((HIDDEN, OUT_PAD), jnp.float32).at[:, :NUM_EMB].set(wt)
    b_pad = jnp.zeros((1, OUT_PAD), jnp.float32).at[:, :NUM_EMB].set(
        fc_b.astype(jnp.float32).reshape(1, NUM_EMB))
    return w_pad, b_pad


def prepare_params(params):
    """Run once: all relayouts / fusions / padding happen here, not per call."""
    ops = []
    for layer in params["layers"]:
        lops = []
        lops += _prep_self_attn(layer["sa_w_in"], layer["sa_b_in"],
                                layer["sa_w_out"], layer["sa_b_out"])
        lops += _prep_cross_attn(layer["ca_w_in"], layer["ca_b_in"],
                                 layer["ca_w_out"], layer["ca_b_out"])
        lops += [jnp.transpose(layer["w1"]), layer["b1"].reshape(1, FF),
                 jnp.transpose(layer["w2"]), layer["b2"].reshape(1, HIDDEN)]
        lops += [layer[k].reshape(1, HIDDEN)
                 for k in ("g1", "be1", "g2", "be2", "g3", "be3")]
        assert len(lops) == LAYER_OPERANDS
        ops += lops
    fc_w, fc_b = _prep_fc(params["fc_w"], params["fc_b"])
    return {"embedding": params["embedding"].astype(jnp.float32),
            "layer_ops": tuple(ops), "fc_w": fc_w, "fc_b": fc_b}


def sinusoidal_pos_emb(length, dim):
    half = dim // 2
    emb = math.log(10000.0) / (half - 1)
    emb = jnp.exp(jnp.arange(half, dtype=jnp.float32) * -emb)
    pos = jnp.arange(length, dtype=jnp.float32)
    e = pos[:, None] * emb[None, :]
    return jnp.concatenate([jnp.sin(e), jnp.cos(e)], axis=-1)  # (length, dim)


def init_params(key):
    def nrm(k, shape, scale=0.05):
        return (scale * jax.random.normal(k, shape)).astype(jnp.float32)

    keys = jax.random.split(key, 3 + NUM_LAYERS)
    params = {
        "embedding": nrm(keys[0], (NUM_EMB, HIDDEN), 1.0),
        "fc_w": nrm(keys[1], (NUM_EMB, HIDDEN)),
        "fc_b": nrm(keys[2], (NUM_EMB,)),
        "layers": [],
    }
    ones = jnp.ones((HIDDEN,), jnp.float32)
    zeros = jnp.zeros((HIDDEN,), jnp.float32)
    for li in range(NUM_LAYERS):
        lk = jax.random.split(keys[3 + li], 12)
        params["layers"].append(dict(
            sa_w_in=nrm(lk[0], (3 * HIDDEN, HIDDEN)),
            sa_b_in=nrm(lk[1], (3 * HIDDEN,), 0.02),
            sa_w_out=nrm(lk[2], (HIDDEN, HIDDEN)),
            sa_b_out=nrm(lk[3], (HIDDEN,), 0.02),
            ca_w_in=nrm(lk[4], (3 * HIDDEN, HIDDEN)),
            ca_b_in=nrm(lk[5], (3 * HIDDEN,), 0.02),
            ca_w_out=nrm(lk[6], (HIDDEN, HIDDEN)),
            ca_b_out=nrm(lk[7], (HIDDEN,), 0.02),
            w1=nrm(lk[8], (FF, HIDDEN)), b1=nrm(lk[9], (FF,), 0.02),
            w2=nrm(lk[10], (HIDDEN, FF)), b2=nrm(lk[11], (HIDDEN,), 0.02),
            g1=ones, be1=zeros, g2=ones, be2=zeros, g3=ones, be3=zeros,
        ))
    return params


@jax.jit
def decoder_forward(prepped, input_seq, encoder_output):
    # embedding gather + sinusoidal positional embedding: glue in the wrapper
    emb = prepped["embedding"][input_seq]                      # (B, L, H)
    B, L, H = emb.shape
    S = encoder_output.shape[1]
    num_layers = len(prepped["layer_ops"]) // LAYER_OPERANDS

    pos = sinusoidal_pos_emb(L, H)[None, :, :]
    x2d = (emb + pos).reshape(B * L, H).astype(jnp.float32)
    mem2d = encoder_output.astype(jnp.float32).reshape(B * S, H)

    args = [x2d, mem2d, *prepped["layer_ops"], prepped["fc_w"], prepped["fc_b"]]

    out = pl.pallas_call(
        make_decoder_kernel(B, L, S, num_layers),
        out_shape=jax.ShapeDtypeStruct((B * L, OUT_PAD), jnp.float32),
        in_specs=[pl.BlockSpec(memory_space=pltpu.MemorySpace.VMEM)] * len(args),
        out_specs=pl.BlockSpec(memory_space=pltpu.MemorySpace.VMEM),
    )(*args)
    return out[:, :NUM_EMB].reshape(B, L, NUM_EMB)


if __name__ == "__main__":
    key = jax.random.PRNGKey(0)
    k_p, k_seq, k_mem = jax.random.split(key, 3)

    params = init_params(k_p)
    prepped = prepare_params(params)            # one-time weight relayout

    B, L, S = 2, 8, 8
    input_seq = jax.random.randint(k_seq, (B, L), 0, NUM_EMB, dtype=jnp.int32)
    encoder_output = jax.random.normal(k_mem, (B, S, HIDDEN), dtype=jnp.float32)

    logits = decoder_forward(prepped, input_seq, encoder_output)
    jax.block_until_ready(logits)

    assert logits.shape == (B, L, NUM_EMB)
    assert bool(jnp.all(jnp.isfinite(logits)))
    print("KERNEL_OK")
</pallas_src>

<mosaic_0001>
module attributes {stable_mosaic.version = 11 : i64} {
  func.func @kernel(%arg0: memref<16x32xf32, #tpu.memory_space<vmem>>, %arg1: memref<16x32xf32, #tpu.memory_space<vmem>>, %arg2: memref<32x96xf32, #tpu.memory_space<vmem>>, %arg3: memref<1x96xf32, #tpu.memory_space<vmem>>, %arg4: memref<32x32xf32, #tpu.memory_space<vmem>>, %arg5: memref<1x32xf32, #tpu.memory_space<vmem>>, %arg6: memref<32x32xf32, #tpu.memory_space<vmem>>, %arg7: memref<1x32xf32, #tpu.memory_space<vmem>>, %arg8: memref<32x64xf32, #tpu.memory_space<vmem>>, %arg9: memref<1x64xf32, #tpu.memory_space<vmem>>, %arg10: memref<32x32xf32, #tpu.memory_space<vmem>>, %arg11: memref<1x32xf32, #tpu.memory_space<vmem>>, %arg12: memref<32x128xf32, #tpu.memory_space<vmem>>, %arg13: memref<1x128xf32, #tpu.memory_space<vmem>>, %arg14: memref<128x32xf32, #tpu.memory_space<vmem>>, %arg15: memref<1x32xf32, #tpu.memory_space<vmem>>, %arg16: memref<1x32xf32, #tpu.memory_space<vmem>>, %arg17: memref<1x32xf32, #tpu.memory_space<vmem>>, %arg18: memref<1x32xf32, #tpu.memory_space<vmem>>, %arg19: memref<1x32xf32, #tpu.memory_space<vmem>>, %arg20: memref<1x32xf32, #tpu.memory_space<vmem>>, %arg21: memref<1x32xf32, #tpu.memory_space<vmem>>, %arg22: memref<32x96xf32, #tpu.memory_space<vmem>>, %arg23: memref<1x96xf32, #tpu.memory_space<vmem>>, %arg24: memref<32x32xf32, #tpu.memory_space<vmem>>, %arg25: memref<1x32xf32, #tpu.memory_space<vmem>>, %arg26: memref<32x32xf32, #tpu.memory_space<vmem>>, %arg27: memref<1x32xf32, #tpu.memory_space<vmem>>, %arg28: memref<32x64xf32, #tpu.memory_space<vmem>>, %arg29: memref<1x64xf32, #tpu.memory_space<vmem>>, %arg30: memref<32x32xf32, #tpu.memory_space<vmem>>, %arg31: memref<1x32xf32, #tpu.memory_space<vmem>>, %arg32: memref<32x128xf32, #tpu.memory_space<vmem>>, %arg33: memref<1x128xf32, #tpu.memory_space<vmem>>, %arg34: memref<128x32xf32, #tpu.memory_space<vmem>>, %arg35: memref<1x32xf32, #tpu.memory_space<vmem>>, %arg36: memref<1x32xf32, #tpu.memory_space<vmem>>, %arg37: memref<1x32xf32, #tpu.memory_space<vmem>>, %arg38: memref<1x32xf32, #tpu.memory_space<vmem>>, %arg39: memref<1x32xf32, #tpu.memory_space<vmem>>, %arg40: memref<1x32xf32, #tpu.memory_space<vmem>>, %arg41: memref<1x32xf32, #tpu.memory_space<vmem>>, %arg42: memref<32x128xf32, #tpu.memory_space<vmem>>, %arg43: memref<1x128xf32, #tpu.memory_space<vmem>>, %arg44: memref<16x128xf32, #tpu.memory_space<vmem>>) attributes {dimension_semantics = [], scalar_prefetch = 0 : i64, scratch_operands = 0 : i64, tpu.core_type = #tpu.core_type<tc>} {
    %c0 = arith.constant 0 : index
    %c0_0 = arith.constant 0 : index
    %0 = vector.load %arg0[%c0, %c0_0] : memref<16x32xf32, #tpu.memory_space<vmem>>, vector<16x32xf32>
    %c0_1 = arith.constant 0 : index
    %c0_2 = arith.constant 0 : index
    %1 = vector.load %arg1[%c0_1, %c0_2] : memref<16x32xf32, #tpu.memory_space<vmem>>, vector<16x32xf32>
    %2 = tpu.iota {dimensions = array<i32: 0>} : vector<8x8xi32>
    %3 = tpu.iota {dimensions = array<i32: 1>} : vector<8x8xi32>
    %4 = arith.cmpi sgt, %3, %2 : vector<8x8xi32>
    %5 = vector.shape_cast %4 : vector<8x8xi1> to vector<1x8x8xi1>
    %c0_3 = arith.constant 0 : index
    %c0_4 = arith.constant 0 : index
    %6 = vector.load %arg2[%c0_3, %c0_4] : memref<32x96xf32, #tpu.memory_space<vmem>>, vector<32x96xf32>
    %c0_5 = arith.constant 0 : index
    %c0_6 = arith.constant 0 : index
    %7 = vector.load %arg3[%c0_5, %c0_6] : memref<1x96xf32, #tpu.memory_space<vmem>>, vector<1x96xf32>
    %c0_7 = arith.constant 0 : index
    %c0_8 = arith.constant 0 : index
    %8 = vector.load %arg4[%c0_7, %c0_8] : memref<32x32xf32, #tpu.memory_space<vmem>>, vector<32x32xf32>
    %c0_9 = arith.constant 0 : index
    %c0_10 = arith.constant 0 : index
    %9 = vector.load %arg5[%c0_9, %c0_10] : memref<1x32xf32, #tpu.memory_space<vmem>>, vector<1x32xf32>
    %c0_11 = arith.constant 0 : index
    %c0_12 = arith.constant 0 : index
    %10 = vector.load %arg6[%c0_11, %c0_12] : memref<32x32xf32, #tpu.memory_space<vmem>>, vector<32x32xf32>
    %c0_13 = arith.constant 0 : index
    %c0_14 = arith.constant 0 : index
    %11 = vector.load %arg7[%c0_13, %c0_14] : memref<1x32xf32, #tpu.memory_space<vmem>>, vector<1x32xf32>
    %c0_15 = arith.constant 0 : index
    %c0_16 = arith.constant 0 : index
    %12 = vector.load %arg8[%c0_15, %c0_16] : memref<32x64xf32, #tpu.memory_space<vmem>>, vector<32x64xf32>
    %c0_17 = arith.constant 0 : index
    %c0_18 = arith.constant 0 : index
    %13 = vector.load %arg9[%c0_17, %c0_18] : memref<1x64xf32, #tpu.memory_space<vmem>>, vector<1x64xf32>
    %c0_19 = arith.constant 0 : index
    %c0_20 = arith.constant 0 : index
    %14 = vector.load %arg10[%c0_19, %c0_20] : memref<32x32xf32, #tpu.memory_space<vmem>>, vector<32x32xf32>
    %c0_21 = arith.constant 0 : index
    %c0_22 = arith.constant 0 : index
    %15 = vector.load %arg11[%c0_21, %c0_22] : memref<1x32xf32, #tpu.memory_space<vmem>>, vector<1x32xf32>
    %c0_23 = arith.constant 0 : index
    %c0_24 = arith.constant 0 : index
    %16 = vector.load %arg12[%c0_23, %c0_24] : memref<32x128xf32, #tpu.memory_space<vmem>>, vector<32x128xf32>
    %c0_25 = arith.constant 0 : index
    %c0_26 = arith.constant 0 : index
    %17 = vector.load %arg13[%c0_25, %c0_26] : memref<1x128xf32, #tpu.memory_space<vmem>>, vector<1x128xf32>
    %c0_27 = arith.constant 0 : index
    %c0_28 = arith.constant 0 : index
    %18 = vector.load %arg14[%c0_27, %c0_28] : memref<128x32xf32, #tpu.memory_space<vmem>>, vector<128x32xf32>
    %c0_29 = arith.constant 0 : index
    %c0_30 = arith.constant 0 : index
    %19 = vector.load %arg15[%c0_29, %c0_30] : memref<1x32xf32, #tpu.memory_space<vmem>>, vector<1x32xf32>
    %c0_31 = arith.constant 0 : index
    %c0_32 = arith.constant 0 : index
    %20 = vector.load %arg16[%c0_31, %c0_32] : memref<1x32xf32, #tpu.memory_space<vmem>>, vector<1x32xf32>
    %c0_33 = arith.constant 0 : index
    %c0_34 = arith.constant 0 : index
    %21 = vector.load %arg17[%c0_33, %c0_34] : memref<1x32xf32, #tpu.memory_space<vmem>>, vector<1x32xf32>
    %c0_35 = arith.constant 0 : index
    %c0_36 = arith.constant 0 : index
    %22 = vector.load %arg18[%c0_35, %c0_36] : memref<1x32xf32, #tpu.memory_space<vmem>>, vector<1x32xf32>
    %c0_37 = arith.constant 0 : index
    %c0_38 = arith.constant 0 : index
    %23 = vector.load %arg19[%c0_37, %c0_38] : memref<1x32xf32, #tpu.memory_space<vmem>>, vector<1x32xf32>
    %c0_39 = arith.constant 0 : index
    %c0_40 = arith.constant 0 : index
    %24 = vector.load %arg20[%c0_39, %c0_40] : memref<1x32xf32, #tpu.memory_space<vmem>>, vector<1x32xf32>
    %c0_41 = arith.constant 0 : index
    %c0_42 = arith.constant 0 : index
    %25 = vector.load %arg21[%c0_41, %c0_42] : memref<1x32xf32, #tpu.memory_space<vmem>>, vector<1x32xf32>
    %cst = arith.constant dense<0.000000e+00> : vector<16x96xf32>
    %26 = tpu.matmul %0, %6, %cst {dimension_numbers = #tpu.dot_dimension_numbers<[1], [0], [0], [1], [0, 0, 1, 1], [], []>} : vector<16x32xf32>, vector<32x96xf32>, vector<16x96xf32> -> vector<16x96xf32>
    %27 = vector.broadcast %7 : vector<1x96xf32> to vector<16x96xf32>
    %28 = arith.addf %26, %27 : vector<16x96xf32>
    %29 = vector.extract_strided_slice %28 {offsets = [0, 0], sizes = [16, 32], strides = [1, 1]} : vector<16x96xf32> to vector<16x32xf32>
    %30 = vector.extract_strided_slice %29 {offsets = [0, 0], sizes = [16, 8], strides = [1, 1]} : vector<16x32xf32> to vector<16x8xf32>
    %31 = vector.shape_cast %30 : vector<16x8xf32> to vector<1x2x8x8xf32>
    %32 = vector.extract_strided_slice %29 {offsets = [0, 8], sizes = [16, 8], strides = [1, 1]} : vector<16x32xf32> to vector<16x8xf32>
    %33 = vector.shape_cast %32 : vector<16x8xf32> to vector<1x2x8x8xf32>
    %34 = vector.extract_strided_slice %29 {offsets = [0, 16], sizes = [16, 8], strides = [1, 1]} : vector<16x32xf32> to vector<16x8xf32>
    %35 = vector.shape_cast %34 : vector<16x8xf32> to vector<1x2x8x8xf32>
    %36 = vector.extract_strided_slice %29 {offsets = [0, 24], sizes = [16, 8], strides = [1, 1]} : vector<16x32xf32> to vector<16x8xf32>
    %37 = vector.shape_cast %36 : vector<16x8xf32> to vector<1x2x8x8xf32>
    %38 = tpu.concatenate %31, %33, %35, %37 in 0 : vector<1x2x8x8xf32>, vector<1x2x8x8xf32>, vector<1x2x8x8xf32>, vector<1x2x8x8xf32> -> vector<4x2x8x8xf32>
    %39 = vector.shape_cast %38 : vector<4x2x8x8xf32> to vector<8x8x8xf32>
    %40 = vector.extract_strided_slice %28 {offsets = [0, 32], sizes = [16, 32], strides = [1, 1]} : vector<16x96xf32> to vector<16x32xf32>
    %41 = vector.extract_strided_slice %40 {offsets = [0, 0], sizes = [16, 8], strides = [1, 1]} : vector<16x32xf32> to vector<16x8xf32>
    %42 = vector.shape_cast %41 : vector<16x8xf32> to vector<1x2x8x8xf32>
    %43 = vector.extract_strided_slice %40 {offsets = [0, 8], sizes = [16, 8], strides = [1, 1]} : vector<16x32xf32> to vector<16x8xf32>
    %44 = vector.shape_cast %43 : vector<16x8xf32> to vector<1x2x8x8xf32>
    %45 = vector.extract_strided_slice %40 {offsets = [0, 16], sizes = [16, 8], strides = [1, 1]} : vector<16x32xf32> to vector<16x8xf32>
    %46 = vector.shape_cast %45 : vector<16x8xf32> to vector<1x2x8x8xf32>
    %47 = vector.extract_strided_slice %40 {offsets = [0, 24], sizes = [16, 8], strides = [1, 1]} : vector<16x32xf32> to vector<16x8xf32>
    %48 = vector.shape_cast %47 : vector<16x8xf32> to vector<1x2x8x8xf32>
    %49 = tpu.concatenate %42, %44, %46, %48 in 0 : vector<1x2x8x8xf32>, vector<1x2x8x8xf32>, vector<1x2x8x8xf32>, vector<1x2x8x8xf32> -> vector<4x2x8x8xf32>
    %50 = vector.shape_cast %49 : vector<4x2x8x8xf32> to vector<8x8x8xf32>
    %51 = vector.extract_strided_slice %28 {offsets = [0, 64], sizes = [16, 32], strides = [1, 1]} : vector<16x96xf32> to vector<16x32xf32>
    %52 = vector.extract_strided_slice %51 {offsets = [0, 0], sizes = [16, 8], strides = [1, 1]} : vector<16x32xf32> to vector<16x8xf32>
    %53 = vector.shape_cast %52 : vector<16x8xf32> to vector<1x2x8x8xf32>
    %54 = vector.extract_strided_slice %51 {offsets = [0, 8], sizes = [16, 8], strides = [1, 1]} : vector<16x32xf32> to vector<16x8xf32>
    %55 = vector.shape_cast %54 : vector<16x8xf32> to vector<1x2x8x8xf32>
    %56 = vector.extract_strided_slice %51 {offsets = [0, 16], sizes = [16, 8], strides = [1, 1]} : vector<16x32xf32> to vector<16x8xf32>
    %57 = vector.shape_cast %56 : vector<16x8xf32> to vector<1x2x8x8xf32>
    %58 = vector.extract_strided_slice %51 {offsets = [0, 24], sizes = [16, 8], strides = [1, 1]} : vector<16x32xf32> to vector<16x8xf32>
    %59 = vector.shape_cast %58 : vector<16x8xf32> to vector<1x2x8x8xf32>
    %60 = tpu.concatenate %53, %55, %57, %59 in 0 : vector<1x2x8x8xf32>, vector<1x2x8x8xf32>, vector<1x2x8x8xf32>, vector<1x2x8x8xf32> -> vector<4x2x8x8xf32>
    %61 = vector.shape_cast %60 : vector<4x2x8x8xf32> to vector<8x8x8xf32>
    "tpu.trace_start"() <{level = 10 : i32, message = "cqd,ckd->cqk"}> : () -> ()
    %cst_43 = arith.constant dense<0.000000e+00> : vector<8x8x8xf32>
    %62 = tpu.matmul %39, %50, %cst_43 {dimension_numbers = #tpu.dot_dimension_numbers<[2], [2], [1], [1], [0, 0, 0, 1, 1, 1], [0], [0]>} : vector<8x8x8xf32>, vector<8x8x8xf32>, vector<8x8x8xf32> -> vector<8x8x8xf32>
    %cst_44 = arith.constant -1.000000e+30 : f32
    "tpu.trace_stop"() : () -> ()
    %63 = vector.shape_cast %5 : vector<1x8x8xi1> to vector<1x8x8xi1>
    %64 = vector.broadcast %63 : vector<1x8x8xi1> to vector<8x8x8xi1>
    %65 = vector.broadcast %cst_44 : f32 to vector<8x8x8xf32>
    %66 = arith.select %64, %65, %62 : vector<8x8x8xi1>, vector<8x8x8xf32>
    %cst_45 = arith.constant dense<0xFF800000> : vector<8x8xf32>
    %67 = vector.multi_reduction <maximumf>, %66, %cst_45 [2] : vector<8x8x8xf32> to vector<8x8xf32>
    %68 = vector.shape_cast %67 : vector<8x8xf32> to vector<8x8x1xf32>
    %69 = vector.broadcast %68 : vector<8x8x1xf32> to vector<8x8x8xf32>
    %70 = arith.subf %66, %69 : vector<8x8x8xf32>
    %71 = math.exp %70 : vector<8x8x8xf32>
    %cst_46 = arith.constant dense<0.000000e+00> : vector<8x8xf32>
    %72 = vector.multi_reduction <add>, %71, %cst_46 [2] : vector<8x8x8xf32> to vector<8x8xf32>
    %73 = vector.shape_cast %72 : vector<8x8xf32> to vector<8x8x1xf32>
    %74 = tpu.reciprocal %73 {approx = true} : vector<8x8x1xf32> -> vector<8x8x1xf32>
    %75 = vector.broadcast %74 : vector<8x8x1xf32> to vector<8x8x8xf32>
    %76 = arith.mulf %71, %75 : vector<8x8x8xf32>
    "tpu.trace_start"() <{level = 10 : i32, message = "cqk,ckd->cqd"}> : () -> ()
    %cst_47 = arith.constant dense<0.000000e+00> : vector<8x8x8xf32>
    %77 = tpu.matmul %76, %61, %cst_47 {dimension_numbers = #tpu.dot_dimension_numbers<[2], [1], [1], [2], [0, 0, 0, 1, 1, 2], [0], [0]>} : vector<8x8x8xf32>, vector<8x8x8xf32>, vector<8x8x8xf32> -> vector<8x8x8xf32>
    "tpu.trace_stop"() : () -> ()
    %78 = vector.shape_cast %77 : vector<8x8x8xf32> to vector<4x16x8xf32>
    %79 = vector.extract_strided_slice %78 {offsets = [0, 0, 0], sizes = [1, 16, 8], strides = [1, 1, 1]} : vector<4x16x8xf32> to vector<1x16x8xf32>
    %80 = vector.shape_cast %79 : vector<1x16x8xf32> to vector<16x8xf32>
    %81 = vector.extract_strided_slice %78 {offsets = [1, 0, 0], sizes = [1, 16, 8], strides = [1, 1, 1]} : vector<4x16x8xf32> to vector<1x16x8xf32>
    %82 = vector.shape_cast %81 : vector<1x16x8xf32> to vector<16x8xf32>
    %83 = vector.extract_strided_slice %78 {offsets = [2, 0, 0], sizes = [1, 16, 8], strides = [1, 1, 1]} : vector<4x16x8xf32> to vector<1x16x8xf32>
    %84 = vector.shape_cast %83 : vector<1x16x8xf32> to vector<16x8xf32>
    %85 = vector.extract_strided_slice %78 {offsets = [3, 0, 0], sizes = [1, 16, 8], strides = [1, 1, 1]} : vector<4x16x8xf32> to vector<1x16x8xf32>
    %86 = vector.shape_cast %85 : vector<1x16x8xf32> to vector<16x8xf32>
    %87 = tpu.concatenate %80, %82, %84, %86 in 1 : vector<16x8xf32>, vector<16x8xf32>, vector<16x8xf32>, vector<16x8xf32> -> vector<16x32xf32>
    %cst_48 = arith.constant dense<0.000000e+00> : vector<16x32xf32>
    %88 = tpu.matmul %87, %8, %cst_48 {dimension_numbers = #tpu.dot_dimension_numbers<[1], [0], [0], [1], [0, 0, 1, 1], [], []>} : vector<16x32xf32>, vector<32x32xf32>, vector<16x32xf32> -> vector<16x32xf32>
    %89 = vector.broadcast %9 : vector<1x32xf32> to vector<16x32xf32>
    %90 = arith.addf %88, %89 : vector<16x32xf32>
    %91 = arith.addf %0, %90 : vector<16x32xf32>
    %cst_49 = arith.constant dense<0.000000e+00> : vector<16xf32>
    %92 = vector.multi_reduction <add>, %91, %cst_49 [1] : vector<16x32xf32> to vector<16xf32>
    %93 = vector.shape_cast %92 : vector<16xf32> to vector<16x1xf32>
    %cst_50 = arith.constant 3.200000e+01 : f32
    %94 = vector.broadcast %cst_50 : f32 to vector<16x1xf32>
    %95 = arith.divf %93, %94 : vector<16x1xf32>
    %96 = vector.broadcast %95 : vector<16x1xf32> to vector<16x32xf32>
    %97 = arith.subf %91, %96 : vector<16x32xf32>
    %98 = arith.mulf %97, %97 : vector<16x32xf32>
    %cst_51 = arith.constant dense<0.000000e+00> : vector<16xf32>
    %99 = vector.multi_reduction <add>, %98, %cst_51 [1] : vector<16x32xf32> to vector<16xf32>
    %100 = vector.shape_cast %99 : vector<16xf32> to vector<16x1xf32>
    %cst_52 = arith.constant 3.200000e+01 : f32
    %101 = vector.broadcast %cst_52 : f32 to vector<16x1xf32>
    %102 = arith.divf %100, %101 : vector<16x1xf32>
    %103 = vector.broadcast %95 : vector<16x1xf32> to vector<16x32xf32>
    %104 = arith.subf %91, %103 : vector<16x32xf32>
    %cst_53 = arith.constant 9.99999974E-6 : f32
    %105 = vector.broadcast %cst_53 : f32 to vector<16x1xf32>
    %106 = arith.addf %102, %105 : vector<16x1xf32>
    %107 = math.rsqrt %106 : vector<16x1xf32>
    %108 = vector.broadcast %107 : vector<16x1xf32> to vector<16x32xf32>
    %109 = arith.mulf %104, %108 : vector<16x32xf32>
    %110 = vector.broadcast %20 : vector<1x32xf32> to vector<16x32xf32>
    %111 = arith.mulf %109, %110 : vector<16x32xf32>
    %112 = vector.broadcast %21 : vector<1x32xf32> to vector<16x32xf32>
    %113 = arith.addf %111, %112 : vector<16x32xf32>
    %cst_54 = arith.constant dense<0.000000e+00> : vector<16x32xf32>
    %114 = tpu.matmul %113, %10, %cst_54 {dimension_numbers = #tpu.dot_dimension_numbers<[1], [0], [0], [1], [0, 0, 1, 1], [], []>} : vector<16x32xf32>, vector<32x32xf32>, vector<16x32xf32> -> vector<16x32xf32>
    %115 = vector.broadcast %11 : vector<1x32xf32> to vector<16x32xf32>
    %116 = arith.addf %114, %115 : vector<16x32xf32>
    %cst_55 = arith.constant dense<0.000000e+00> : vector<16x64xf32>
    %117 = tpu.matmul %1, %12, %cst_55 {dimension_numbers = #tpu.dot_dimension_numbers<[1], [0], [0], [1], [0, 0, 1, 1], [], []>} : vector<16x32xf32>, vector<32x64xf32>, vector<16x64xf32> -> vector<16x64xf32>
    %118 = vector.broadcast %13 : vector<1x64xf32> to vector<16x64xf32>
    %119 = arith.addf %117, %118 : vector<16x64xf32>
    %120 = vector.extract_strided_slice %116 {offsets = [0, 0], sizes = [16, 8], strides = [1, 1]} : vector<16x32xf32> to vector<16x8xf32>
    %121 = vector.shape_cast %120 : vector<16x8xf32> to vector<1x2x8x8xf32>
    %122 = vector.extract_strided_slice %116 {offsets = [0, 8], sizes = [16, 8], strides = [1, 1]} : vector<16x32xf32> to vector<16x8xf32>
    %123 = vector.shape_cast %122 : vector<16x8xf32> to vector<1x2x8x8xf32>
    %124 = vector.extract_strided_slice %116 {offsets = [0, 16], sizes = [16, 8], strides = [1, 1]} : vector<16x32xf32> to vector<16x8xf32>
    %125 = vector.shape_cast %124 : vector<16x8xf32> to vector<1x2x8x8xf32>
    %126 = vector.extract_strided_slice %116 {offsets = [0, 24], sizes = [16, 8], strides = [1, 1]} : vector<16x32xf32> to vector<16x8xf32>
    %127 = vector.shape_cast %126 : vector<16x8xf32> to vector<1x2x8x8xf32>
    %128 = tpu.concatenate %121, %123, %125, %127 in 0 : vector<1x2x8x8xf32>, vector<1x2x8x8xf32>, vector<1x2x8x8xf32>, vector<1x2x8x8xf32> -> vector<4x2x8x8xf32>
    %129 = vector.shape_cast %128 : vector<4x2x8x8xf32> to vector<8x8x8xf32>
    %130 = vector.extract_strided_slice %119 {offsets = [0, 0], sizes = [16, 32], strides = [1, 1]} : vector<16x64xf32> to vector<16x32xf32>
    %131 = vector.extract_strided_slice %130 {offsets = [0, 0], sizes = [16, 8], strides = [1, 1]} : vector<16x32xf32> to vector<16x8xf32>
    %132 = vector.shape_cast %131 : vector<16x8xf32> to vector<1x2x8x8xf32>
    %133 = vector.extract_strided_slice %130 {offsets = [0, 8], sizes = [16, 8], strides = [1, 1]} : vector<16x32xf32> to vector<16x8xf32>
    %134 = vector.shape_cast %133 : vector<16x8xf32> to vector<1x2x8x8xf32>
    %135 = vector.extract_strided_slice %130 {offsets = [0, 16], sizes = [16, 8], strides = [1, 1]} : vector<16x32xf32> to vector<16x8xf32>
    %136 = vector.shape_cast %135 : vector<16x8xf32> to vector<1x2x8x8xf32>
    %137 = vector.extract_strided_slice %130 {offsets = [0, 24], sizes = [16, 8], strides = [1, 1]} : vector<16x32xf32> to vector<16x8xf32>
    %138 = vector.shape_cast %137 : vector<16x8xf32> to vector<1x2x8x8xf32>
    %139 = tpu.concatenate %132, %134, %136, %138 in 0 : vector<1x2x8x8xf32>, vector<1x2x8x8xf32>, vector<1x2x8x8xf32>, vector<1x2x8x8xf32> -> vector<4x2x8x8xf32>
    %140 = vector.shape_cast %139 : vector<4x2x8x8xf32> to vector<8x8x8xf32>
    %141 = vector.extract_strided_slice %119 {offsets = [0, 32], sizes = [16, 32], strides = [1, 1]} : vector<16x64xf32> to vector<16x32xf32>
    %142 = vector.extract_strided_slice %141 {offsets = [0, 0], sizes = [16, 8], strides = [1, 1]} : vector<16x32xf32> to vector<16x8xf32>
    %143 = vector.shape_cast %142 : vector<16x8xf32> to vector<1x2x8x8xf32>
    %144 = vector.extract_strided_slice %141 {offsets = [0, 8], sizes = [16, 8], strides = [1, 1]} : vector<16x32xf32> to vector<16x8xf32>
    %145 = vector.shape_cast %144 : vector<16x8xf32> to vector<1x2x8x8xf32>
    %146 = vector.extract_strided_slice %141 {offsets = [0, 16], sizes = [16, 8], strides = [1, 1]} : vector<16x32xf32> to vector<16x8xf32>
    %147 = vector.shape_cast %146 : vector<16x8xf32> to vector<1x2x8x8xf32>
    %148 = vector.extract_strided_slice %141 {offsets = [0, 24], sizes = [16, 8], strides = [1, 1]} : vector<16x32xf32> to vector<16x8xf32>
    %149 = vector.shape_cast %148 : vector<16x8xf32> to vector<1x2x8x8xf32>
    %150 = tpu.concatenate %143, %145, %147, %149 in 0 : vector<1x2x8x8xf32>, vector<1x2x8x8xf32>, vector<1x2x8x8xf32>, vector<1x2x8x8xf32> -> vector<4x2x8x8xf32>
    %151 = vector.shape_cast %150 : vector<4x2x8x8xf32> to vector<8x8x8xf32>
    "tpu.trace_start"() <{level = 10 : i32, message = "cqd,ckd->cqk"}> : () -> ()
    %cst_56 = arith.constant dense<0.000000e+00> : vector<8x8x8xf32>
    %152 = tpu.matmul %129, %140, %cst_56 {dimension_numbers = #tpu.dot_dimension_numbers<[2], [2], [1], [1], [0, 0, 0, 1, 1, 1], [0], [0]>} : vector<8x8x8xf32>, vector<8x8x8xf32>, vector<8x8x8xf32> -> vector<8x8x8xf32>
    "tpu.trace_stop"() : () -> ()
    %cst_57 = arith.constant dense<0xFF800000> : vector<8x8xf32>
    %153 = vector.multi_reduction <maximumf>, %152, %cst_57 [2] : vector<8x8x8xf32> to vector<8x8xf32>
    %154 = vector.shape_cast %153 : vector<8x8xf32> to vector<8x8x1xf32>
    %155 = vector.broadcast %154 : vector<8x8x1xf32> to vector<8x8x8xf32>
    %156 = arith.subf %152, %155 : vector<8x8x8xf32>
    %157 = math.exp %156 : vector<8x8x8xf32>
    %cst_58 = arith.constant dense<0.000000e+00> : vector<8x8xf32>
    %158 = vector.multi_reduction <add>, %157, %cst_58 [2] : vector<8x8x8xf32> to vector<8x8xf32>
    %159 = vector.shape_cast %158 : vector<8x8xf32> to vector<8x8x1xf32>
    %160 = tpu.reciprocal %159 {approx = true} : vector<8x8x1xf32> -> vector<8x8x1xf32>
    %161 = vector.broadcast %160 : vector<8x8x1xf32> to vector<8x8x8xf32>
    %162 = arith.mulf %157, %161 : vector<8x8x8xf32>
    "tpu.trace_start"() <{level = 10 : i32, message = "cqk,ckd->cqd"}> : () -> ()
    %cst_59 = arith.constant dense<0.000000e+00> : vector<8x8x8xf32>
    %163 = tpu.matmul %162, %151, %cst_59 {dimension_numbers = #tpu.dot_dimension_numbers<[2], [1], [1], [2], [0, 0, 0, 1, 1, 2], [0], [0]>} : vector<8x8x8xf32>, vector<8x8x8xf32>, vector<8x8x8xf32> -> vector<8x8x8xf32>
    "tpu.trace_stop"() : () -> ()
    %164 = vector.shape_cast %163 : vector<8x8x8xf32> to vector<4x16x8xf32>
    %165 = vector.extract_strided_slice %164 {offsets = [0, 0, 0], sizes = [1, 16, 8], strides = [1, 1, 1]} : vector<4x16x8xf32> to vector<1x16x8xf32>
    %166 = vector.shape_cast %165 : vector<1x16x8xf32> to vector<16x8xf32>
    %167 = vector.extract_strided_slice %164 {offsets = [1, 0, 0], sizes = [1, 16, 8], strides = [1, 1, 1]} : vector<4x16x8xf32> to vector<1x16x8xf32>
    %168 = vector.shape_cast %167 : vector<1x16x8xf32> to vector<16x8xf32>
    %169 = vector.extract_strided_slice %164 {offsets = [2, 0, 0], sizes = [1, 16, 8], strides = [1, 1, 1]} : vector<4x16x8xf32> to vector<1x16x8xf32>
    %170 = vector.shape_cast %169 : vector<1x16x8xf32> to vector<16x8xf32>
    %171 = vector.extract_strided_slice %164 {offsets = [3, 0, 0], sizes = [1, 16, 8], strides = [1, 1, 1]} : vector<4x16x8xf32> to vector<1x16x8xf32>
    %172 = vector.shape_cast %171 : vector<1x16x8xf32> to vector<16x8xf32>
    %173 = tpu.concatenate %166, %168, %170, %172 in 1 : vector<16x8xf32>, vector<16x8xf32>, vector<16x8xf32>, vector<16x8xf32> -> vector<16x32xf32>
    %cst_60 = arith.constant dense<0.000000e+00> : vector<16x32xf32>
    %174 = tpu.matmul %173, %14, %cst_60 {dimension_numbers = #tpu.dot_dimension_numbers<[1], [0], [0], [1], [0, 0, 1, 1], [], []>} : vector<16x32xf32>, vector<32x32xf32>, vector<16x32xf32> -> vector<16x32xf32>
    %175 = vector.broadcast %15 : vector<1x32xf32> to vector<16x32xf32>
    %176 = arith.addf %174, %175 : vector<16x32xf32>
    %177 = arith.addf %113, %176 : vector<16x32xf32>
    %cst_61 = arith.constant dense<0.000000e+00> : vector<16xf32>
    %178 = vector.multi_reduction <add>, %177, %cst_61 [1] : vector<16x32xf32> to vector<16xf32>
    %179 = vector.shape_cast %178 : vector<16xf32> to vector<16x1xf32>
    %cst_62 = arith.constant 3.200000e+01 : f32
    %180 = vector.broadcast %cst_62 : f32 to vector<16x1xf32>
    %181 = arith.divf %179, %180 : vector<16x1xf32>
    %182 = vector.broadcast %181 : vector<16x1xf32> to vector<16x32xf32>
    %183 = arith.subf %177, %182 : vector<16x32xf32>
    %184 = arith.mulf %183, %183 : vector<16x32xf32>
    %cst_63 = arith.constant dense<0.000000e+00> : vector<16xf32>
    %185 = vector.multi_reduction <add>, %184, %cst_63 [1] : vector<16x32xf32> to vector<16xf32>
    %186 = vector.shape_cast %185 : vector<16xf32> to vector<16x1xf32>
    %cst_64 = arith.constant 3.200000e+01 : f32
    %187 = vector.broadcast %cst_64 : f32 to vector<16x1xf32>
    %188 = arith.divf %186, %187 : vector<16x1xf32>
    %189 = vector.broadcast %181 : vector<16x1xf32> to vector<16x32xf32>
    %190 = arith.subf %177, %189 : vector<16x32xf32>
    %cst_65 = arith.constant 9.99999974E-6 : f32
    %191 = vector.broadcast %cst_65 : f32 to vector<16x1xf32>
    %192 = arith.addf %188, %191 : vector<16x1xf32>
    %193 = math.rsqrt %192 : vector<16x1xf32>
    %194 = vector.broadcast %193 : vector<16x1xf32> to vector<16x32xf32>
    %195 = arith.mulf %190, %194 : vector<16x32xf32>
    %196 = vector.broadcast %22 : vector<1x32xf32> to vector<16x32xf32>
    %197 = arith.mulf %195, %196 : vector<16x32xf32>
    %198 = vector.broadcast %23 : vector<1x32xf32> to vector<16x32xf32>
    %199 = arith.addf %197, %198 : vector<16x32xf32>
    %cst_66 = arith.constant dense<0.000000e+00> : vector<16x128xf32>
    %200 = tpu.matmul %199, %16, %cst_66 {dimension_numbers = #tpu.dot_dimension_numbers<[1], [0], [0], [1], [0, 0, 1, 1], [], []>} : vector<16x32xf32>, vector<32x128xf32>, vector<16x128xf32> -> vector<16x128xf32>
    %201 = vector.broadcast %17 : vector<1x128xf32> to vector<16x128xf32>
    %202 = arith.addf %200, %201 : vector<16x128xf32>
    %cst_67 = arith.constant 0.000000e+00 : f32
    %203 = vector.broadcast %cst_67 : f32 to vector<16x128xf32>
    %204 = arith.maximumf %202, %203 : vector<16x128xf32>
    %cst_68 = arith.constant dense<0.000000e+00> : vector<16x32xf32>
    %205 = tpu.matmul %204, %18, %cst_68 {dimension_numbers = #tpu.dot_dimension_numbers<[1], [0], [0], [1], [0, 0, 1, 1], [], []>} : vector<16x128xf32>, vector<128x32xf32>, vector<16x32xf32> -> vector<16x32xf32>
    %206 = vector.broadcast %19 : vector<1x32xf32> to vector<16x32xf32>
    %207 = arith.addf %205, %206 : vector<16x32xf32>
    %208 = arith.addf %199, %207 : vector<16x32xf32>
    %cst_69 = arith.constant dense<0.000000e+00> : vector<16xf32>
    %209 = vector.multi_reduction <add>, %208, %cst_69 [1] : vector<16x32xf32> to vector<16xf32>
    %210 = vector.shape_cast %209 : vector<16xf32> to vector<16x1xf32>
    %cst_70 = arith.constant 3.200000e+01 : f32
    %211 = vector.broadcast %cst_70 : f32 to vector<16x1xf32>
    %212 = arith.divf %210, %211 : vector<16x1xf32>
    %213 = vector.broadcast %212 : vector<16x1xf32> to vector<16x32xf32>
    %214 = arith.subf %208, %213 : vector<16x32xf32>
    %215 = arith.mulf %214, %214 : vector<16x32xf32>
    %cst_71 = arith.constant dense<0.000000e+00> : vector<16xf32>
    %216 = vector.multi_reduction <add>, %215, %cst_71 [1] : vector<16x32xf32> to vector<16xf32>
    %217 = vector.shape_cast %216 : vector<16xf32> to vector<16x1xf32>
    %cst_72 = arith.constant 3.200000e+01 : f32
    %218 = vector.broadcast %cst_72 : f32 to vector<16x1xf32>
    %219 = arith.divf %217, %218 : vector<16x1xf32>
    %220 = vector.broadcast %212 : vector<16x1xf32> to vector<16x32xf32>
    %221 = arith.subf %208, %220 : vector<16x32xf32>
    %cst_73 = arith.constant 9.99999974E-6 : f32
    %222 = vector.broadcast %cst_73 : f32 to vector<16x1xf32>
    %223 = arith.addf %219, %222 : vector<16x1xf32>
    %224 = math.rsqrt %223 : vector<16x1xf32>
    %225 = vector.broadcast %224 : vector<16x1xf32> to vector<16x32xf32>
    %226 = arith.mulf %221, %225 : vector<16x32xf32>
    %227 = vector.broadcast %24 : vector<1x32xf32> to vector<16x32xf32>
    %228 = arith.mulf %226, %227 : vector<16x32xf32>
    %229 = vector.broadcast %25 : vector<1x32xf32> to vector<16x32xf32>
    %230 = arith.addf %228, %229 : vector<16x32xf32>
    %c0_74 = arith.constant 0 : index
    %c0_75 = arith.constant 0 : index
    %231 = vector.load %arg22[%c0_74, %c0_75] : memref<32x96xf32, #tpu.memory_space<vmem>>, vector<32x96xf32>
    %c0_76 = arith.constant 0 : index
    %c0_77 = arith.constant 0 : index
    %232 = vector.load %arg23[%c0_76, %c0_77] : memref<1x96xf32, #tpu.memory_space<vmem>>, vector<1x96xf32>
    %c0_78 = arith.constant 0 : index
    %c0_79 = arith.constant 0 : index
    %233 = vector.load %arg24[%c0_78, %c0_79] : memref<32x32xf32, #tpu.memory_space<vmem>>, vector<32x32xf32>
    %c0_80 = arith.constant 0 : index
    %c0_81 = arith.constant 0 : index
    %234 = vector.load %arg25[%c0_80, %c0_81] : memref<1x32xf32, #tpu.memory_space<vmem>>, vector<1x32xf32>
    %c0_82 = arith.constant 0 : index
    %c0_83 = arith.constant 0 : index
    %235 = vector.load %arg26[%c0_82, %c0_83] : memref<32x32xf32, #tpu.memory_space<vmem>>, vector<32x32xf32>
    %c0_84 = arith.constant 0 : index
    %c0_85 = arith.constant 0 : index
    %236 = vector.load %arg27[%c0_84, %c0_85] : memref<1x32xf32, #tpu.memory_space<vmem>>, vector<1x32xf32>
    %c0_86 = arith.constant 0 : index
    %c0_87 = arith.constant 0 : index
    %237 = vector.load %arg28[%c0_86, %c0_87] : memref<32x64xf32, #tpu.memory_space<vmem>>, vector<32x64xf32>
    %c0_88 = arith.constant 0 : index
    %c0_89 = arith.constant 0 : index
    %238 = vector.load %arg29[%c0_88, %c0_89] : memref<1x64xf32, #tpu.memory_space<vmem>>, vector<1x64xf32>
    %c0_90 = arith.constant 0 : index
    %c0_91 = arith.constant 0 : index
    %239 = vector.load %arg30[%c0_90, %c0_91] : memref<32x32xf32, #tpu.memory_space<vmem>>, vector<32x32xf32>
    %c0_92 = arith.constant 0 : index
    %c0_93 = arith.constant 0 : index
    %240 = vector.load %arg31[%c0_92, %c0_93] : memref<1x32xf32, #tpu.memory_space<vmem>>, vector<1x32xf32>
    %c0_94 = arith.constant 0 : index
    %c0_95 = arith.constant 0 : index
    %241 = vector.load %arg32[%c0_94, %c0_95] : memref<32x128xf32, #tpu.memory_space<vmem>>, vector<32x128xf32>
    %c0_96 = arith.constant 0 : index
    %c0_97 = arith.constant 0 : index
    %242 = vector.load %arg33[%c0_96, %c0_97] : memref<1x128xf32, #tpu.memory_space<vmem>>, vector<1x128xf32>
    %c0_98 = arith.constant 0 : index
    %c0_99 = arith.constant 0 : index
    %243 = vector.load %arg34[%c0_98, %c0_99] : memref<128x32xf32, #tpu.memory_space<vmem>>, vector<128x32xf32>
    %c0_100 = arith.constant 0 : index
    %c0_101 = arith.constant 0 : index
    %244 = vector.load %arg35[%c0_100, %c0_101] : memref<1x32xf32, #tpu.memory_space<vmem>>, vector<1x32xf32>
    %c0_102 = arith.constant 0 : index
    %c0_103 = arith.constant 0 : index
    %245 = vector.load %arg36[%c0_102, %c0_103] : memref<1x32xf32, #tpu.memory_space<vmem>>, vector<1x32xf32>
    %c0_104 = arith.constant 0 : index
    %c0_105 = arith.constant 0 : index
    %246 = vector.load %arg37[%c0_104, %c0_105] : memref<1x32xf32, #tpu.memory_space<vmem>>, vector<1x32xf32>
    %c0_106 = arith.constant 0 : index
    %c0_107 = arith.constant 0 : index
    %247 = vector.load %arg38[%c0_106, %c0_107] : memref<1x32xf32, #tpu.memory_space<vmem>>, vector<1x32xf32>
    %c0_108 = arith.constant 0 : index
    %c0_109 = arith.constant 0 : index
    %248 = vector.load %arg39[%c0_108, %c0_109] : memref<1x32xf32, #tpu.memory_space<vmem>>, vector<1x32xf32>
    %c0_110 = arith.constant 0 : index
    %c0_111 = arith.constant 0 : index
    %249 = vector.load %arg40[%c0_110, %c0_111] : memref<1x32xf32, #tpu.memory_space<vmem>>, vector<1x32xf32>
    %c0_112 = arith.constant 0 : index
    %c0_113 = arith.constant 0 : index
    %250 = vector.load %arg41[%c0_112, %c0_113] : memref<1x32xf32, #tpu.memory_space<vmem>>, vector<1x32xf32>
    %cst_114 = arith.constant dense<0.000000e+00> : vector<16x96xf32>
    %251 = tpu.matmul %230, %231, %cst_114 {dimension_numbers = #tpu.dot_dimension_numbers<[1], [0], [0], [1], [0, 0, 1, 1], [], []>} : vector<16x32xf32>, vector<32x96xf32>, vector<16x96xf32> -> vector<16x96xf32>
    %252 = vector.broadcast %232 : vector<1x96xf32> to vector<16x96xf32>
    %253 = arith.addf %251, %252 : vector<16x96xf32>
    %254 = vector.extract_strided_slice %253 {offsets = [0, 0], sizes = [16, 32], strides = [1, 1]} : vector<16x96xf32> to vector<16x32xf32>
    %255 = vector.extract_strided_slice %254 {offsets = [0, 0], sizes = [16, 8], strides = [1, 1]} : vector<16x32xf32> to vector<16x8xf32>
    %256 = vector.shape_cast %255 : vector<16x8xf32> to vector<1x2x8x8xf32>
    %257 = vector.extract_strided_slice %254 {offsets = [0, 8], sizes = [16, 8], strides = [1, 1]} : vector<16x32xf32> to vector<16x8xf32>
    %258 = vector.shape_cast %257 : vector<16x8xf32> to vector<1x2x8x8xf32>
    %259 = vector.extract_strided_slice %254 {offsets = [0, 16], sizes = [16, 8], strides = [1, 1]} : vector<16x32xf32> to vector<16x8xf32>
    %260 = vector.shape_cast %259 : vector<16x8xf32> to vector<1x2x8x8xf32>
    %261 = vector.extract_strided_slice %254 {offsets = [0, 24], sizes = [16, 8], strides = [1, 1]} : vector<16x32xf32> to vector<16x8xf32>
    %262 = vector.shape_cast %261 : vector<16x8xf32> to vector<1x2x8x8xf32>
    %263 = tpu.concatenate %256, %258, %260, %262 in 0 : vector<1x2x8x8xf32>, vector<1x2x8x8xf32>, vector<1x2x8x8xf32>, vector<1x2x8x8xf32> -> vector<4x2x8x8xf32>
    %264 = vector.shape_cast %263 : vector<4x2x8x8xf32> to vector<8x8x8xf32>
    %265 = vector.extract_strided_slice %253 {offsets = [0, 32], sizes = [16, 32], strides = [1, 1]} : vector<16x96xf32> to vector<16x32xf32>
    %266 = vector.extract_strided_slice %265 {offsets = [0, 0], sizes = [16, 8], strides = [1, 1]} : vector<16x32xf32> to vector<16x8xf32>
    %267 = vector.shape_cast %266 : vector<16x8xf32> to vector<1x2x8x8xf32>
    %268 = vector.extract_strided_slice %265 {offsets = [0, 8], sizes = [16, 8], strides = [1, 1]} : vector<16x32xf32> to vector<16x8xf32>
    %269 = vector.shape_cast %268 : vector<16x8xf32> to vector<1x2x8x8xf32>
    %270 = vector.extract_strided_slice %265 {offsets = [0, 16], sizes = [16, 8], strides = [1, 1]} : vector<16x32xf32> to vector<16x8xf32>
    %271 = vector.shape_cast %270 : vector<16x8xf32> to vector<1x2x8x8xf32>
    %272 = vector.extract_strided_slice %265 {offsets = [0, 24], sizes = [16, 8], strides = [1, 1]} : vector<16x32xf32> to vector<16x8xf32>
    %273 = vector.shape_cast %272 : vector<16x8xf32> to vector<1x2x8x8xf32>
    %274 = tpu.concatenate %267, %269, %271, %273 in 0 : vector<1x2x8x8xf32>, vector<1x2x8x8xf32>, vector<1x2x8x8xf32>, vector<1x2x8x8xf32> -> vector<4x2x8x8xf32>
    %275 = vector.shape_cast %274 : vector<4x2x8x8xf32> to vector<8x8x8xf32>
    %276 = vector.extract_strided_slice %253 {offsets = [0, 64], sizes = [16, 32], strides = [1, 1]} : vector<16x96xf32> to vector<16x32xf32>
    %277 = vector.extract_strided_slice %276 {offsets = [0, 0], sizes = [16, 8], strides = [1, 1]} : vector<16x32xf32> to vector<16x8xf32>
    %278 = vector.shape_cast %277 : vector<16x8xf32> to vector<1x2x8x8xf32>
    %279 = vector.extract_strided_slice %276 {offsets = [0, 8], sizes = [16, 8], strides = [1, 1]} : vector<16x32xf32> to vector<16x8xf32>
    %280 = vector.shape_cast %279 : vector<16x8xf32> to vector<1x2x8x8xf32>
    %281 = vector.extract_strided_slice %276 {offsets = [0, 16], sizes = [16, 8], strides = [1, 1]} : vector<16x32xf32> to vector<16x8xf32>
    %282 = vector.shape_cast %281 : vector<16x8xf32> to vector<1x2x8x8xf32>
    %283 = vector.extract_strided_slice %276 {offsets = [0, 24], sizes = [16, 8], strides = [1, 1]} : vector<16x32xf32> to vector<16x8xf32>
    %284 = vector.shape_cast %283 : vector<16x8xf32> to vector<1x2x8x8xf32>
    %285 = tpu.concatenate %278, %280, %282, %284 in 0 : vector<1x2x8x8xf32>, vector<1x2x8x8xf32>, vector<1x2x8x8xf32>, vector<1x2x8x8xf32> -> vector<4x2x8x8xf32>
    %286 = vector.shape_cast %285 : vector<4x2x8x8xf32> to vector<8x8x8xf32>
    "tpu.trace_start"() <{level = 10 : i32, message = "cqd,ckd->cqk"}> : () -> ()
    %cst_115 = arith.constant dense<0.000000e+00> : vector<8x8x8xf32>
    %287 = tpu.matmul %264, %275, %cst_115 {dimension_numbers = #tpu.dot_dimension_numbers<[2], [2], [1], [1], [0, 0, 0, 1, 1, 1], [0], [0]>} : vector<8x8x8xf32>, vector<8x8x8xf32>, vector<8x8x8xf32> -> vector<8x8x8xf32>
    %cst_116 = arith.constant -1.000000e+30 : f32
    "tpu.trace_stop"() : () -> ()
    %288 = vector.shape_cast %5 : vector<1x8x8xi1> to vector<1x8x8xi1>
    %289 = vector.broadcast %288 : vector<1x8x8xi1> to vector<8x8x8xi1>
    %290 = vector.broadcast %cst_116 : f32 to vector<8x8x8xf32>
    %291 = arith.select %289, %290, %287 : vector<8x8x8xi1>, vector<8x8x8xf32>
    %cst_117 = arith.constant dense<0xFF800000> : vector<8x8xf32>
    %292 = vector.multi_reduction <maximumf>, %291, %cst_117 [2] : vector<8x8x8xf32> to vector<8x8xf32>
    %293 = vector.shape_cast %292 : vector<8x8xf32> to vector<8x8x1xf32>
    %294 = vector.broadcast %293 : vector<8x8x1xf32> to vector<8x8x8xf32>
    %295 = arith.subf %291, %294 : vector<8x8x8xf32>
    %296 = math.exp %295 : vector<8x8x8xf32>
    %cst_118 = arith.constant dense<0.000000e+00> : vector<8x8xf32>
    %297 = vector.multi_reduction <add>, %296, %cst_118 [2] : vector<8x8x8xf32> to vector<8x8xf32>
    %298 = vector.shape_cast %297 : vector<8x8xf32> to vector<8x8x1xf32>
    %299 = tpu.reciprocal %298 {approx = true} : vector<8x8x1xf32> -> vector<8x8x1xf32>
    %300 = vector.broadcast %299 : vector<8x8x1xf32> to vector<8x8x8xf32>
    %301 = arith.mulf %296, %300 : vector<8x8x8xf32>
    "tpu.trace_start"() <{level = 10 : i32, message = "cqk,ckd->cqd"}> : () -> ()
    %cst_119 = arith.constant dense<0.000000e+00> : vector<8x8x8xf32>
    %302 = tpu.matmul %301, %286, %cst_119 {dimension_numbers = #tpu.dot_dimension_numbers<[2], [1], [1], [2], [0, 0, 0, 1, 1, 2], [0], [0]>} : vector<8x8x8xf32>, vector<8x8x8xf32>, vector<8x8x8xf32> -> vector<8x8x8xf32>
    "tpu.trace_stop"() : () -> ()
    %303 = vector.shape_cast %302 : vector<8x8x8xf32> to vector<4x16x8xf32>
    %304 = vector.extract_strided_slice %303 {offsets = [0, 0, 0], sizes = [1, 16, 8], strides = [1, 1, 1]} : vector<4x16x8xf32> to vector<1x16x8xf32>
    %305 = vector.shape_cast %304 : vector<1x16x8xf32> to vector<16x8xf32>
    %306 = vector.extract_strided_slice %303 {offsets = [1, 0, 0], sizes = [1, 16, 8], strides = [1, 1, 1]} : vector<4x16x8xf32> to vector<1x16x8xf32>
    %307 = vector.shape_cast %306 : vector<1x16x8xf32> to vector<16x8xf32>
    %308 = vector.extract_strided_slice %303 {offsets = [2, 0, 0], sizes = [1, 16, 8], strides = [1, 1, 1]} : vector<4x16x8xf32> to vector<1x16x8xf32>
    %309 = vector.shape_cast %308 : vector<1x16x8xf32> to vector<16x8xf32>
    %310 = vector.extract_strided_slice %303 {offsets = [3, 0, 0], sizes = [1, 16, 8], strides = [1, 1, 1]} : vector<4x16x8xf32> to vector<1x16x8xf32>
    %311 = vector.shape_cast %310 : vector<1x16x8xf32> to vector<16x8xf32>
    %312 = tpu.concatenate %305, %307, %309, %311 in 1 : vector<16x8xf32>, vector<16x8xf32>, vector<16x8xf32>, vector<16x8xf32> -> vector<16x32xf32>
    %cst_120 = arith.constant dense<0.000000e+00> : vector<16x32xf32>
    %313 = tpu.matmul %312, %233, %cst_120 {dimension_numbers = #tpu.dot_dimension_numbers<[1], [0], [0], [1], [0, 0, 1, 1], [], []>} : vector<16x32xf32>, vector<32x32xf32>, vector<16x32xf32> -> vector<16x32xf32>
    %314 = vector.broadcast %234 : vector<1x32xf32> to vector<16x32xf32>
    %315 = arith.addf %313, %314 : vector<16x32xf32>
    %316 = arith.addf %230, %315 : vector<16x32xf32>
    %cst_121 = arith.constant dense<0.000000e+00> : vector<16xf32>
    %317 = vector.multi_reduction <add>, %316, %cst_121 [1] : vector<16x32xf32> to vector<16xf32>
    %318 = vector.shape_cast %317 : vector<16xf32> to vector<16x1xf32>
    %cst_122 = arith.constant 3.200000e+01 : f32
    %319 = vector.broadcast %cst_122 : f32 to vector<16x1xf32>
    %320 = arith.divf %318, %319 : vector<16x1xf32>
    %321 = vector.broadcast %320 : vector<16x1xf32> to vector<16x32xf32>
    %322 = arith.subf %316, %321 : vector<16x32xf32>
    %323 = arith.mulf %322, %322 : vector<16x32xf32>
    %cst_123 = arith.constant dense<0.000000e+00> : vector<16xf32>
    %324 = vector.multi_reduction <add>, %323, %cst_123 [1] : vector<16x32xf32> to vector<16xf32>
    %325 = vector.shape_cast %324 : vector<16xf32> to vector<16x1xf32>
    %cst_124 = arith.constant 3.200000e+01 : f32
    %326 = vector.broadcast %cst_124 : f32 to vector<16x1xf32>
    %327 = arith.divf %325, %326 : vector<16x1xf32>
    %328 = vector.broadcast %320 : vector<16x1xf32> to vector<16x32xf32>
    %329 = arith.subf %316, %328 : vector<16x32xf32>
    %cst_125 = arith.constant 9.99999974E-6 : f32
    %330 = vector.broadcast %cst_125 : f32 to vector<16x1xf32>
    %331 = arith.addf %327, %330 : vector<16x1xf32>
    %332 = math.rsqrt %331 : vector<16x1xf32>
    %333 = vector.broadcast %332 : vector<16x1xf32> to vector<16x32xf32>
    %334 = arith.mulf %329, %333 : vector<16x32xf32>
    %335 = vector.broadcast %245 : vector<1x32xf32> to vector<16x32xf32>
    %336 = arith.mulf %334, %335 : vector<16x32xf32>
    %337 = vector.broadcast %246 : vector<1x32xf32> to vector<16x32xf32>
    %338 = arith.addf %336, %337 : vector<16x32xf32>
    %cst_126 = arith.constant dense<0.000000e+00> : vector<16x32xf32>
    %339 = tpu.matmul %338, %235, %cst_126 {dimension_numbers = #tpu.dot_dimension_numbers<[1], [0], [0], [1], [0, 0, 1, 1], [], []>} : vector<16x32xf32>, vector<32x32xf32>, vector<16x32xf32> -> vector<16x32xf32>
    %340 = vector.broadcast %236 : vector<1x32xf32> to vector<16x32xf32>
    %341 = arith.addf %339, %340 : vector<16x32xf32>
    %cst_127 = arith.constant dense<0.000000e+00> : vector<16x64xf32>
    %342 = tpu.matmul %1, %237, %cst_127 {dimension_numbers = #tpu.dot_dimension_numbers<[1], [0], [0], [1], [0, 0, 1, 1], [], []>} : vector<16x32xf32>, vector<32x64xf32>, vector<16x64xf32> -> vector<16x64xf32>
    %343 = vector.broadcast %238 : vector<1x64xf32> to vector<16x64xf32>
    %344 = arith.addf %342, %343 : vector<16x64xf32>
    %345 = vector.extract_strided_slice %341 {offsets = [0, 0], sizes = [16, 8], strides = [1, 1]} : vector<16x32xf32> to vector<16x8xf32>
    %346 = vector.shape_cast %345 : vector<16x8xf32> to vector<1x2x8x8xf32>
    %347 = vector.extract_strided_slice %341 {offsets = [0, 8], sizes = [16, 8], strides = [1, 1]} : vector<16x32xf32> to vector<16x8xf32>
    %348 = vector.shape_cast %347 : vector<16x8xf32> to vector<1x2x8x8xf32>
    %349 = vector.extract_strided_slice %341 {offsets = [0, 16], sizes = [16, 8], strides = [1, 1]} : vector<16x32xf32> to vector<16x8xf32>
    %350 = vector.shape_cast %349 : vector<16x8xf32> to vector<1x2x8x8xf32>
    %351 = vector.extract_strided_slice %341 {offsets = [0, 24], sizes = [16, 8], strides = [1, 1]} : vector<16x32xf32> to vector<16x8xf32>
    %352 = vector.shape_cast %351 : vector<16x8xf32> to vector<1x2x8x8xf32>
    %353 = tpu.concatenate %346, %348, %350, %352 in 0 : vector<1x2x8x8xf32>, vector<1x2x8x8xf32>, vector<1x2x8x8xf32>, vector<1x2x8x8xf32> -> vector<4x2x8x8xf32>
    %354 = vector.shape_cast %353 : vector<4x2x8x8xf32> to vector<8x8x8xf32>
    %355 = vector.extract_strided_slice %344 {offsets = [0, 0], sizes = [16, 32], strides = [1, 1]} : vector<16x64xf32> to vector<16x32xf32>
    %356 = vector.extract_strided_slice %355 {offsets = [0, 0], sizes = [16, 8], strides = [1, 1]} : vector<16x32xf32> to vector<16x8xf32>
    %357 = vector.shape_cast %356 : vector<16x8xf32> to vector<1x2x8x8xf32>
    %358 = vector.extract_strided_slice %355 {offsets = [0, 8], sizes = [16, 8], strides = [1, 1]} : vector<16x32xf32> to vector<16x8xf32>
    %359 = vector.shape_cast %358 : vector<16x8xf32> to vector<1x2x8x8xf32>
    %360 = vector.extract_strided_slice %355 {offsets = [0, 16], sizes = [16, 8], strides = [1, 1]} : vector<16x32xf32> to vector<16x8xf32>
    %361 = vector.shape_cast %360 : vector<16x8xf32> to vector<1x2x8x8xf32>
    %362 = vector.extract_strided_slice %355 {offsets = [0, 24], sizes = [16, 8], strides = [1, 1]} : vector<16x32xf32> to vector<16x8xf32>
    %363 = vector.shape_cast %362 : vector<16x8xf32> to vector<1x2x8x8xf32>
    %364 = tpu.concatenate %357, %359, %361, %363 in 0 : vector<1x2x8x8xf32>, vector<1x2x8x8xf32>, vector<1x2x8x8xf32>, vector<1x2x8x8xf32> -> vector<4x2x8x8xf32>
    %365 = vector.shape_cast %364 : vector<4x2x8x8xf32> to vector<8x8x8xf32>
    %366 = vector.extract_strided_slice %344 {offsets = [0, 32], sizes = [16, 32], strides = [1, 1]} : vector<16x64xf32> to vector<16x32xf32>
    %367 = vector.extract_strided_slice %366 {offsets = [0, 0], sizes = [16, 8], strides = [1, 1]} : vector<16x32xf32> to vector<16x8xf32>
    %368 = vector.shape_cast %367 : vector<16x8xf32> to vector<1x2x8x8xf32>
    %369 = vector.extract_strided_slice %366 {offsets = [0, 8], sizes = [16, 8], strides = [1, 1]} : vector<16x32xf32> to vector<16x8xf32>
    %370 = vector.shape_cast %369 : vector<16x8xf32> to vector<1x2x8x8xf32>
    %371 = vector.extract_strided_slice %366 {offsets = [0, 16], sizes = [16, 8], strides = [1, 1]} : vector<16x32xf32> to vector<16x8xf32>
    %372 = vector.shape_cast %371 : vector<16x8xf32> to vector<1x2x8x8xf32>
    %373 = vector.extract_strided_slice %366 {offsets = [0, 24], sizes = [16, 8], strides = [1, 1]} : vector<16x32xf32> to vector<16x8xf32>
    %374 = vector.shape_cast %373 : vector<16x8xf32> to vector<1x2x8x8xf32>
    %375 = tpu.concatenate %368, %370, %372, %374 in 0 : vector<1x2x8x8xf32>, vector<1x2x8x8xf32>, vector<1x2x8x8xf32>, vector<1x2x8x8xf32> -> vector<4x2x8x8xf32>
    %376 = vector.shape_cast %375 : vector<4x2x8x8xf32> to vector<8x8x8xf32>
    "tpu.trace_start"() <{level = 10 : i32, message = "cqd,ckd->cqk"}> : () -> ()
    %cst_128 = arith.constant dense<0.000000e+00> : vector<8x8x8xf32>
    %377 = tpu.matmul %354, %365, %cst_128 {dimension_numbers = #tpu.dot_dimension_numbers<[2], [2], [1], [1], [0, 0, 0, 1, 1, 1], [0], [0]>} : vector<8x8x8xf32>, vector<8x8x8xf32>, vector<8x8x8xf32> -> vector<8x8x8xf32>
    "tpu.trace_stop"() : () -> ()
    %cst_129 = arith.constant dense<0xFF800000> : vector<8x8xf32>
    %378 = vector.multi_reduction <maximumf>, %377, %cst_129 [2] : vector<8x8x8xf32> to vector<8x8xf32>
    %379 = vector.shape_cast %378 : vector<8x8xf32> to vector<8x8x1xf32>
    %380 = vector.broadcast %379 : vector<8x8x1xf32> to vector<8x8x8xf32>
    %381 = arith.subf %377, %380 : vector<8x8x8xf32>
    %382 = math.exp %381 : vector<8x8x8xf32>
    %cst_130 = arith.constant dense<0.000000e+00> : vector<8x8xf32>
    %383 = vector.multi_reduction <add>, %382, %cst_130 [2] : vector<8x8x8xf32> to vector<8x8xf32>
    %384 = vector.shape_cast %383 : vector<8x8xf32> to vector<8x8x1xf32>
    %385 = tpu.reciprocal %384 {approx = true} : vector<8x8x1xf32> -> vector<8x8x1xf32>
    %386 = vector.broadcast %385 : vector<8x8x1xf32> to vector<8x8x8xf32>
    %387 = arith.mulf %382, %386 : vector<8x8x8xf32>
    "tpu.trace_start"() <{level = 10 : i32, message = "cqk,ckd->cqd"}> : () -> ()
    %cst_131 = arith.constant dense<0.000000e+00> : vector<8x8x8xf32>
    %388 = tpu.matmul %387, %376, %cst_131 {dimension_numbers = #tpu.dot_dimension_numbers<[2], [1], [1], [2], [0, 0, 0, 1, 1, 2], [0], [0]>} : vector<8x8x8xf32>, vector<8x8x8xf32>, vector<8x8x8xf32> -> vector<8x8x8xf32>
    "tpu.trace_stop"() : () -> ()
    %389 = vector.shape_cast %388 : vector<8x8x8xf32> to vector<4x16x8xf32>
    %390 = vector.extract_strided_slice %389 {offsets = [0, 0, 0], sizes = [1, 16, 8], strides = [1, 1, 1]} : vector<4x16x8xf32> to vector<1x16x8xf32>
    %391 = vector.shape_cast %390 : vector<1x16x8xf32> to vector<16x8xf32>
    %392 = vector.extract_strided_slice %389 {offsets = [1, 0, 0], sizes = [1, 16, 8], strides = [1, 1, 1]} : vector<4x16x8xf32> to vector<1x16x8xf32>
    %393 = vector.shape_cast %392 : vector<1x16x8xf32> to vector<16x8xf32>
    %394 = vector.extract_strided_slice %389 {offsets = [2, 0, 0], sizes = [1, 16, 8], strides = [1, 1, 1]} : vector<4x16x8xf32> to vector<1x16x8xf32>
    %395 = vector.shape_cast %394 : vector<1x16x8xf32> to vector<16x8xf32>
    %396 = vector.extract_strided_slice %389 {offsets = [3, 0, 0], sizes = [1, 16, 8], strides = [1, 1, 1]} : vector<4x16x8xf32> to vector<1x16x8xf32>
    %397 = vector.shape_cast %396 : vector<1x16x8xf32> to vector<16x8xf32>
    %398 = tpu.concatenate %391, %393, %395, %397 in 1 : vector<16x8xf32>, vector<16x8xf32>, vector<16x8xf32>, vector<16x8xf32> -> vector<16x32xf32>
    %cst_132 = arith.constant dense<0.000000e+00> : vector<16x32xf32>
    %399 = tpu.matmul %398, %239, %cst_132 {dimension_numbers = #tpu.dot_dimension_numbers<[1], [0], [0], [1], [0, 0, 1, 1], [], []>} : vector<16x32xf32>, vector<32x32xf32>, vector<16x32xf32> -> vector<16x32xf32>
    %400 = vector.broadcast %240 : vector<1x32xf32> to vector<16x32xf32>
    %401 = arith.addf %399, %400 : vector<16x32xf32>
    %402 = arith.addf %338, %401 : vector<16x32xf32>
    %cst_133 = arith.constant dense<0.000000e+00> : vector<16xf32>
    %403 = vector.multi_reduction <add>, %402, %cst_133 [1] : vector<16x32xf32> to vector<16xf32>
    %404 = vector.shape_cast %403 : vector<16xf32> to vector<16x1xf32>
    %cst_134 = arith.constant 3.200000e+01 : f32
    %405 = vector.broadcast %cst_134 : f32 to vector<16x1xf32>
    %406 = arith.divf %404, %405 : vector<16x1xf32>
    %407 = vector.broadcast %406 : vector<16x1xf32> to vector<16x32xf32>
    %408 = arith.subf %402, %407 : vector<16x32xf32>
    %409 = arith.mulf %408, %408 : vector<16x32xf32>
    %cst_135 = arith.constant dense<0.000000e+00> : vector<16xf32>
    %410 = vector.multi_reduction <add>, %409, %cst_135 [1] : vector<16x32xf32> to vector<16xf32>
    %411 = vector.shape_cast %410 : vector<16xf32> to vector<16x1xf32>
    %cst_136 = arith.constant 3.200000e+01 : f32
    %412 = vector.broadcast %cst_136 : f32 to vector<16x1xf32>
    %413 = arith.divf %411, %412 : vector<16x1xf32>
    %414 = vector.broadcast %406 : vector<16x1xf32> to vector<16x32xf32>
    %415 = arith.subf %402, %414 : vector<16x32xf32>
    %cst_137 = arith.constant 9.99999974E-6 : f32
    %416 = vector.broadcast %cst_137 : f32 to vector<16x1xf32>
    %417 = arith.addf %413, %416 : vector<16x1xf32>
    %418 = math.rsqrt %417 : vector<16x1xf32>
    %419 = vector.broadcast %418 : vector<16x1xf32> to vector<16x32xf32>
    %420 = arith.mulf %415, %419 : vector<16x32xf32>
    %421 = vector.broadcast %247 : vector<1x32xf32> to vector<16x32xf32>
    %422 = arith.mulf %420, %421 : vector<16x32xf32>
    %423 = vector.broadcast %248 : vector<1x32xf32> to vector<16x32xf32>
    %424 = arith.addf %422, %423 : vector<16x32xf32>
    %cst_138 = arith.constant dense<0.000000e+00> : vector<16x128xf32>
    %425 = tpu.matmul %424, %241, %cst_138 {dimension_numbers = #tpu.dot_dimension_numbers<[1], [0], [0], [1], [0, 0, 1, 1], [], []>} : vector<16x32xf32>, vector<32x128xf32>, vector<16x128xf32> -> vector<16x128xf32>
    %426 = vector.broadcast %242 : vector<1x128xf32> to vector<16x128xf32>
    %427 = arith.addf %425, %426 : vector<16x128xf32>
    %cst_139 = arith.constant 0.000000e+00 : f32
    %428 = vector.broadcast %cst_139 : f32 to vector<16x128xf32>
    %429 = arith.maximumf %427, %428 : vector<16x128xf32>
    %cst_140 = arith.constant dense<0.000000e+00> : vector<16x32xf32>
    %430 = tpu.matmul %429, %243, %cst_140 {dimension_numbers = #tpu.dot_dimension_numbers<[1], [0], [0], [1], [0, 0, 1, 1], [], []>} : vector<16x128xf32>, vector<128x32xf32>, vector<16x32xf32> -> vector<16x32xf32>
    %431 = vector.broadcast %244 : vector<1x32xf32> to vector<16x32xf32>
    %432 = arith.addf %430, %431 : vector<16x32xf32>
    %433 = arith.addf %424, %432 : vector<16x32xf32>
    %cst_141 = arith.constant dense<0.000000e+00> : vector<16xf32>
    %434 = vector.multi_reduction <add>, %433, %cst_141 [1] : vector<16x32xf32> to vector<16xf32>
    %435 = vector.shape_cast %434 : vector<16xf32> to vector<16x1xf32>
    %cst_142 = arith.constant 3.200000e+01 : f32
    %436 = vector.broadcast %cst_142 : f32 to vector<16x1xf32>
    %437 = arith.divf %435, %436 : vector<16x1xf32>
    %438 = vector.broadcast %437 : vector<16x1xf32> to vector<16x32xf32>
    %439 = arith.subf %433, %438 : vector<16x32xf32>
    %440 = arith.mulf %439, %439 : vector<16x32xf32>
    %cst_143 = arith.constant dense<0.000000e+00> : vector<16xf32>
    %441 = vector.multi_reduction <add>, %440, %cst_143 [1] : vector<16x32xf32> to vector<16xf32>
    %442 = vector.shape_cast %441 : vector<16xf32> to vector<16x1xf32>
    %cst_144 = arith.constant 3.200000e+01 : f32
    %443 = vector.broadcast %cst_144 : f32 to vector<16x1xf32>
    %444 = arith.divf %442, %443 : vector<16x1xf32>
    %445 = vector.broadcast %437 : vector<16x1xf32> to vector<16x32xf32>
    %446 = arith.subf %433, %445 : vector<16x32xf32>
    %cst_145 = arith.constant 9.99999974E-6 : f32
    %447 = vector.broadcast %cst_145 : f32 to vector<16x1xf32>
    %448 = arith.addf %444, %447 : vector<16x1xf32>
    %449 = math.rsqrt %448 : vector<16x1xf32>
    %450 = vector.broadcast %449 : vector<16x1xf32> to vector<16x32xf32>
    %451 = arith.mulf %446, %450 : vector<16x32xf32>
    %452 = vector.broadcast %249 : vector<1x32xf32> to vector<16x32xf32>
    %453 = arith.mulf %451, %452 : vector<16x32xf32>
    %454 = vector.broadcast %250 : vector<1x32xf32> to vector<16x32xf32>
    %455 = arith.addf %453, %454 : vector<16x32xf32>
    %c0_146 = arith.constant 0 : index
    %c0_147 = arith.constant 0 : index
    %456 = vector.load %arg42[%c0_146, %c0_147] : memref<32x128xf32, #tpu.memory_space<vmem>>, vector<32x128xf32>
    %cst_148 = arith.constant dense<0.000000e+00> : vector<16x128xf32>
    %457 = tpu.matmul %455, %456, %cst_148 {dimension_numbers = #tpu.dot_dimension_numbers<[1], [0], [0], [1], [0, 0, 1, 1], [], []>} : vector<16x32xf32>, vector<32x128xf32>, vector<16x128xf32> -> vector<16x128xf32>
    %c0_149 = arith.constant 0 : index
    %c0_150 = arith.constant 0 : index
    %458 = vector.load %arg43[%c0_149, %c0_150] : memref<1x128xf32, #tpu.memory_space<vmem>>, vector<1x128xf32>
    %459 = vector.broadcast %458 : vector<1x128xf32> to vector<16x128xf32>
    %460 = arith.addf %457, %459 : vector<16x128xf32>
    %c0_151 = arith.constant 0 : index
    %c0_152 = arith.constant 0 : index
    %461 = vector.load %arg44[%c0_151, %c0_152] : memref<16x128xf32, #tpu.memory_space<vmem>>, vector<16x128xf32>
    tpu.vector_store %arg44[%c0_151, %c0_152], %460 {strides = array<i32>} : memref<16x128xf32, #tpu.memory_space<vmem>>, vector<16x128xf32>,
    return
  }
}

</mosaic_0001>

<llo_original>
// kernel: decoder_forward.1
$region0: #{decoder_forward.1}
  #allocation0 [shape = 'u32[]', space=smem, size = 0x4, offset = 0x4, fixed_abs, tag = 'smem constant byte address 0x4 - core index']
  #allocation1 [shape = 'u32[72,128]{1,0:T(1,128)}', space=vmem, size = 0x9000, scoped, tag = 'internal scratch']
  %s0 = inlined_call_operand.smem [shape: u32[45], index: -1, kind: input, shape index: {}]
  %s1 = sld [smem:[%s0]]
  %s2 = scalar_lea.smem %s0, 1
  %s3 = sld [smem:[%s2]]
  %s4 = scalar_lea.smem %s0, 2
  %s5 = sld [smem:[%s4]]
  %s6 = scalar_lea.smem %s0, 3
  %s7 = sld [smem:[%s6]]
  %s8 = scalar_lea.smem %s0, 4
  %s9 = sld [smem:[%s8]]
  %s10 = scalar_lea.smem %s0, 5
  %s11 = sld [smem:[%s10]]
  %s12 = scalar_lea.smem %s0, 6
  %s13 = sld [smem:[%s12]]
  %s14 = scalar_lea.smem %s0, 7
  %s15 = sld [smem:[%s14]]
  %s16 = scalar_lea.smem %s0, 8
  %s17 = sld [smem:[%s16]]
  %s18 = scalar_lea.smem %s0, 9
  %s19 = sld [smem:[%s18]]
  %s20 = scalar_lea.smem %s0, 10
  %s21 = sld [smem:[%s20]]
  %s22 = scalar_lea.smem %s0, 11
  %s23 = sld [smem:[%s22]]
  %s24 = scalar_lea.smem %s0, 12
  %s25 = sld [smem:[%s24]]
  %s26 = scalar_lea.smem %s0, 13
  %s27 = sld [smem:[%s26]]
  %s28 = scalar_lea.smem %s0, 14
  %s29 = sld [smem:[%s28]]
  %s30 = scalar_lea.smem %s0, 15
  %s31 = sld [smem:[%s30]]
  %s32 = scalar_lea.smem %s0, 16
  %s33 = sld [smem:[%s32]]
  %s34 = scalar_lea.smem %s0, 17
  %s35 = sld [smem:[%s34]]
  %s36 = scalar_lea.smem %s0, 18
  %s37 = sld [smem:[%s36]]
  %s38 = scalar_lea.smem %s0, 19
  %s39 = sld [smem:[%s38]]
  %s40 = scalar_lea.smem %s0, 20
  %s41 = sld [smem:[%s40]]
  %s42 = scalar_lea.smem %s0, 21
  %s43 = sld [smem:[%s42]]
  %s44 = scalar_lea.smem %s0, 22
  %s45 = sld [smem:[%s44]]
  %s46 = scalar_lea.smem %s0, 23
  %s47 = sld [smem:[%s46]]
  %s48 = scalar_lea.smem %s0, 24
  %s49 = sld [smem:[%s48]]
  %s50 = scalar_lea.smem %s0, 25
  %s51 = sld [smem:[%s50]]
  %s52 = scalar_lea.smem %s0, 26
  %s53 = sld [smem:[%s52]]
  %s54 = scalar_lea.smem %s0, 27
  %s55 = sld [smem:[%s54]]
  %s56 = scalar_lea.smem %s0, 28
  %s57 = sld [smem:[%s56]]
  %s58 = scalar_lea.smem %s0, 29
  %s59 = sld [smem:[%s58]]
  %s60 = scalar_lea.smem %s0, 30
  %s61 = sld [smem:[%s60]]
  %s62 = scalar_lea.smem %s0, 31
  %s63 = sld [smem:[%s62]]
  %s64 = scalar_lea.smem %s0, 32
  %s65 = sld [smem:[%s64]]
  %s66 = scalar_lea.smem %s0, 33
  %s67 = sld [smem:[%s66]]
  %s68 = scalar_lea.smem %s0, 34
  %s69 = sld [smem:[%s68]]
  %s70 = scalar_lea.smem %s0, 35
  %s71 = sld [smem:[%s70]]
  %s72 = scalar_lea.smem %s0, 36
  %s73 = sld [smem:[%s72]]
  %s74 = scalar_lea.smem %s0, 37
  %s75 = sld [smem:[%s74]]
  %s76 = scalar_lea.smem %s0, 38
  %s77 = sld [smem:[%s76]]
  %s78 = scalar_lea.smem %s0, 39
  %s79 = sld [smem:[%s78]]
  %s80 = scalar_lea.smem %s0, 40
  %s81 = sld [smem:[%s80]]
  %s82 = scalar_lea.smem %s0, 41
  %s83 = sld [smem:[%s82]]
  %s84 = scalar_lea.smem %s0, 42
  %s85 = sld [smem:[%s84]]
  %s86 = scalar_lea.smem %s0, 43
  %s87 = sld [smem:[%s86]]
  %s88 = scalar_lea.smem %s0, 44
  %s89 = sld [smem:[%s88]]
  %s90 = sld [smem:[#allocation0]]
  $region202: #{decoder_forward.1} parent=0
    _
  %s92 = ssub.s32 1, %s90
  %s93 = scalar_select 0, %s92, %s90
  $region1: #{decoder_forward.1} parent=0
    #allocation2 [shape = 'u8[512]{0}', space=vmem, size = 0x400, scoped, tag = 'input window, operand 39, single buffered']
    #allocation3 [shape = 's32[1]{0}', space=sflag, size = 0x4, scoped, tag = 'scoped memory for decoder_forward.1']
    #allocation4 [shape = 'u8[512]{0}', space=vmem, size = 0x400, scoped, tag = 'input window, operand 40, single buffered']
    #allocation5 [shape = 's32[1]{0}', space=sflag, size = 0x4, scoped, tag = 'scoped memory for decoder_forward.1']
    #allocation6 [shape = 'u8[512]{0}', space=vmem, size = 0x400, scoped, tag = 'input window, operand 41, single buffered']
    #allocation7 [shape = 'u8[512]{0}', space=vmem, size = 0x400, scoped, tag = 'input window, operand 43, single buffered']
    #allocation8 [shape = 's32[1]{0}', space=sflag, size = 0x4, scoped, tag = 'scoped memory for decoder_forward.1']
    %94 = vsyncpa [#allocation3], 0
    %95 = vsyncpa [#allocation5], 0
    %96 = vsyncpa [#allocation8], 0
    // Predicated region
    $region2: #{decoder_forward.1} parent=1 // pred_check
      _
    $region3: #{decoder_forward.1} parent=1 // pred_check_branch
      %98 = sbr.rel (0) target = $region5
    $region4: #{decoder_forward.1} parent=1 // pred_region
      _
    $region5: #{decoder_forward.1} parent=1 // pred_fallthru
      _
    // Predicated region
    $region6: #{decoder_forward.1} parent=1 // pred_check
      _
    $region7: #{decoder_forward.1} parent=1 // pred_check_branch
      %100 = sbr.rel (0) target = $region9
    $region8: #{decoder_forward.1} parent=1 // pred_region
      _
    $region9: #{decoder_forward.1} parent=1 // pred_fallthru
      _
    // Predicated region
    $region10: #{decoder_forward.1} parent=1 // pred_check
      _
    $region11: #{decoder_forward.1} parent=1 // pred_check_branch
      %102 = sbr.rel (0) target = $region13
    $region12: #{decoder_forward.1} parent=1 // pred_region
      _
    $region13: #{decoder_forward.1} parent=1 // pred_fallthru
      _
    // Predicated region
    $region14: #{decoder_forward.1} parent=1 // pred_check
      _
    $region15: #{decoder_forward.1} parent=1 // pred_check_branch
      %104 = sbr.rel (0) target = $region17
    $region16: #{decoder_forward.1} parent=1 // pred_region
      _
    $region17: #{decoder_forward.1} parent=1 // pred_fallthru
      _
    // Predicated region
    $region18: #{decoder_forward.1} parent=1 // pred_check
      _
    $region19: #{decoder_forward.1} parent=1 // pred_check_branch
      %106 = sbr.rel (0) target = $region21
    $region20: #{decoder_forward.1} parent=1 // pred_region
      _
    $region21: #{decoder_forward.1} parent=1 // pred_fallthru
      _
    // Predicated region
    $region22: #{decoder_forward.1} parent=1 // pred_check
      _
    $region23: #{decoder_forward.1} parent=1 // pred_check_branch
      %108 = sbr.rel (0) target = $region25
    $region24: #{decoder_forward.1} parent=1 // pred_region
      _
    $region25: #{decoder_forward.1} parent=1 // pred_fallthru
      _
    // Predicated region
    $region26: #{decoder_forward.1} parent=1 // pred_check
      _
    $region27: #{decoder_forward.1} parent=1 // pred_check_branch
      %110 = sbr.rel (0) target = $region29
    $region28: #{decoder_forward.1} parent=1 // pred_region
      _
    $region29: #{decoder_forward.1} parent=1 // pred_fallthru
      _
    // Predicated region
    $region30: #{decoder_forward.1} parent=1 // pred_check
      _
    $region31: #{decoder_forward.1} parent=1 // pred_check_branch
      %112 = sbr.rel (0) target = $region33
    $region32: #{decoder_forward.1} parent=1 // pred_region
      _
    $region33: #{decoder_forward.1} parent=1 // pred_fallthru
      _
    // Predicated region
    $region34: #{decoder_forward.1} parent=1 // pred_check
      _
    $region35: #{decoder_forward.1} parent=1 // pred_check_branch
      %114 = sbr.rel (0) target = $region37
    $region36: #{decoder_forward.1} parent=1 // pred_region
      _
    $region37: #{decoder_forward.1} parent=1 // pred_fallthru
      _
    // Predicated region
    $region38: #{decoder_forward.1} parent=1 // pred_check
      _
    $region39: #{decoder_forward.1} parent=1 // pred_check_branch
      %116 = sbr.rel (0) target = $region41
    $region40: #{decoder_forward.1} parent=1 // pred_region
      _
    $region41: #{decoder_forward.1} parent=1 // pred_fallthru
      _
    // Predicated region
    $region42: #{decoder_forward.1} parent=1 // pred_check
      _
    $region43: #{decoder_forward.1} parent=1 // pred_check_branch
      %118 = sbr.rel (0) target = $region45
    $region44: #{decoder_forward.1} parent=1 // pred_region
      _
    $region45: #{decoder_forward.1} parent=1 // pred_fallthru
      _
    // Predicated region
    $region46: #{decoder_forward.1} parent=1 // pred_check
      _
    $region47: #{decoder_forward.1} parent=1 // pred_check_branch
      %120 = sbr.rel (0) target = $region49
    $region48: #{decoder_forward.1} parent=1 // pred_region
      _
    $region49: #{decoder_forward.1} parent=1 // pred_fallthru
      _
    // Predicated region
    $region50: #{decoder_forward.1} parent=1 // pred_check
      _
    $region51: #{decoder_forward.1} parent=1 // pred_check_branch
      %122 = sbr.rel (0) target = $region53
    $region52: #{decoder_forward.1} parent=1 // pred_region
      _
    $region53: #{decoder_forward.1} parent=1 // pred_fallthru
      _
    // Predicated region
    $region54: #{decoder_forward.1} parent=1 // pred_check
      _
    $region55: #{decoder_forward.1} parent=1 // pred_check_branch
      %124 = sbr.rel (0) target = $region57
    $region56: #{decoder_forward.1} parent=1 // pred_region
      _
    $region57: #{decoder_forward.1} parent=1 // pred_fallthru
      _
    // Predicated region
    $region58: #{decoder_forward.1} parent=1 // pred_check
      _
    $region59: #{decoder_forward.1} parent=1 // pred_check_branch
      %126 = sbr.rel (0) target = $region61
    $region60: #{decoder_forward.1} parent=1 // pred_region
      _
    $region61: #{decoder_forward.1} parent=1 // pred_fallthru
      _
    // Predicated region
    $region62: #{decoder_forward.1} parent=1 // pred_check
      _
    $region63: #{decoder_forward.1} parent=1 // pred_check_branch
      %128 = sbr.rel (0) target = $region65
    $region64: #{decoder_forward.1} parent=1 // pred_region
      _
    $region65: #{decoder_forward.1} parent=1 // pred_fallthru
      _
    // Predicated region
    $region66: #{decoder_forward.1} parent=1 // pred_check
      _
    $region67: #{decoder_forward.1} parent=1 // pred_check_branch
      %130 = sbr.rel (0) target = $region69
    $region68: #{decoder_forward.1} parent=1 // pred_region
      _
    $region69: #{decoder_forward.1} parent=1 // pred_fallthru
      _
    // Predicated region
    $region70: #{decoder_forward.1} parent=1 // pred_check
      _
    $region71: #{decoder_forward.1} parent=1 // pred_check_branch
      %132 = sbr.rel (0) target = $region73
    $region72: #{decoder_forward.1} parent=1 // pred_region
      _
    $region73: #{decoder_forward.1} parent=1 // pred_fallthru
      _
    // Predicated region
    $region74: #{decoder_forward.1} parent=1 // pred_check
      _
    $region75: #{decoder_forward.1} parent=1 // pred_check_branch
      %134 = sbr.rel (0) target = $region77
    $region76: #{decoder_forward.1} parent=1 // pred_region
      _
    $region77: #{decoder_forward.1} parent=1 // pred_fallthru
      _
    // Predicated region
    $region78: #{decoder_forward.1} parent=1 // pred_check
      _
    $region79: #{decoder_forward.1} parent=1 // pred_check_branch
      %136 = sbr.rel (0) target = $region81
    $region80: #{decoder_forward.1} parent=1 // pred_region
      _
    $region81: #{decoder_forward.1} parent=1 // pred_fallthru
      _
    // Predicated region
    $region82: #{decoder_forward.1} parent=1 // pred_check
      _
    $region83: #{decoder_forward.1} parent=1 // pred_check_branch
      %138 = sbr.rel (0) target = $region85
    $region84: #{decoder_forward.1} parent=1 // pred_region
      _
    $region85: #{decoder_forward.1} parent=1 // pred_fallthru
      _
    // Predicated region
    $region86: #{decoder_forward.1} parent=1 // pred_check
      _
    $region87: #{decoder_forward.1} parent=1 // pred_check_branch
      %140 = sbr.rel (0) target = $region89
    $region88: #{decoder_forward.1} parent=1 // pred_region
      _
    $region89: #{decoder_forward.1} parent=1 // pred_fallthru
      _
    // Predicated region
    $region90: #{decoder_forward.1} parent=1 // pred_check
      _
    $region91: #{decoder_forward.1} parent=1 // pred_check_branch
      %142 = sbr.rel (0) target = $region93
    $region92: #{decoder_forward.1} parent=1 // pred_region
      _
    $region93: #{decoder_forward.1} parent=1 // pred_fallthru
      _
    // Predicated region
    $region94: #{decoder_forward.1} parent=1 // pred_check
      _
    $region95: #{decoder_forward.1} parent=1 // pred_check_branch
      %144 = sbr.rel (0) target = $region97
    $region96: #{decoder_forward.1} parent=1 // pred_region
      _
    $region97: #{decoder_forward.1} parent=1 // pred_fallthru
      _
    // Predicated region
    $region98: #{decoder_forward.1} parent=1 // pred_check
      _
    $region99: #{decoder_forward.1} parent=1 // pred_check_branch
      %146 = sbr.rel (0) target = $region101
    $region100: #{decoder_forward.1} parent=1 // pred_region
      _
    $region101: #{decoder_forward.1} parent=1 // pred_fallthru
      _
    // Predicated region
    $region102: #{decoder_forward.1} parent=1 // pred_check
      _
    $region103: #{decoder_forward.1} parent=1 // pred_check_branch
      %148 = sbr.rel (0) target = $region105
    $region104: #{decoder_forward.1} parent=1 // pred_region
      _
    $region105: #{decoder_forward.1} parent=1 // pred_fallthru
      _
    // Predicated region
    $region106: #{decoder_forward.1} parent=1 // pred_check
      _
    $region107: #{decoder_forward.1} parent=1 // pred_check_branch
      %150 = sbr.rel (0) target = $region109
    $region108: #{decoder_forward.1} parent=1 // pred_region
      _
    $region109: #{decoder_forward.1} parent=1 // pred_fallthru
      _
    // Predicated region
    $region110: #{decoder_forward.1} parent=1 // pred_check
      _
    $region111: #{decoder_forward.1} parent=1 // pred_check_branch
      %152 = sbr.rel (0) target = $region113
    $region112: #{decoder_forward.1} parent=1 // pred_region
      _
    $region113: #{decoder_forward.1} parent=1 // pred_fallthru
      _
    // Predicated region
    $region114: #{decoder_forward.1} parent=1 // pred_check
      _
    $region115: #{decoder_forward.1} parent=1 // pred_check_branch
      %154 = sbr.rel (0) target = $region117
    $region116: #{decoder_forward.1} parent=1 // pred_region
      _
    $region117: #{decoder_forward.1} parent=1 // pred_fallthru
      _
    // Predicated region
    $region118: #{decoder_forward.1} parent=1 // pred_check
      _
    $region119: #{decoder_forward.1} parent=1 // pred_check_branch
      %156 = sbr.rel (0) target = $region121
    $region120: #{decoder_forward.1} parent=1 // pred_region
      _
    $region121: #{decoder_forward.1} parent=1 // pred_fallthru
      _
    // Predicated region
    $region122: #{decoder_forward.1} parent=1 // pred_check
      _
    $region123: #{decoder_forward.1} parent=1 // pred_check_branch
      %158 = sbr.rel (0) target = $region125
    $region124: #{decoder_forward.1} parent=1 // pred_region
      _
    $region125: #{decoder_forward.1} parent=1 // pred_fallthru
      _
    // Predicated region
    $region126: #{decoder_forward.1} parent=1 // pred_check
      _
    $region127: #{decoder_forward.1} parent=1 // pred_check_branch
      %160 = sbr.rel (0) target = $region129
    $region128: #{decoder_forward.1} parent=1 // pred_region
      _
    $region129: #{decoder_forward.1} parent=1 // pred_fallthru
      _
    // Predicated region
    $region130: #{decoder_forward.1} parent=1 // pred_check
      _
    $region131: #{decoder_forward.1} parent=1 // pred_check_branch
      %162 = sbr.rel (0) target = $region133
    $region132: #{decoder_forward.1} parent=1 // pred_region
      _
    $region133: #{decoder_forward.1} parent=1 // pred_fallthru
      _
    // Predicated region
    $region134: #{decoder_forward.1} parent=1 // pred_check
      _
    $region135: #{decoder_forward.1} parent=1 // pred_check_branch
      %164 = sbr.rel (0) target = $region137
    $region136: #{decoder_forward.1} parent=1 // pred_region
      _
    $region137: #{decoder_forward.1} parent=1 // pred_fallthru
      _
    // Predicated region
    $region138: #{decoder_forward.1} parent=1 // pred_check
      _
    $region139: #{decoder_forward.1} parent=1 // pred_check_branch
      %166 = sbr.rel (0) target = $region141
    $region140: #{decoder_forward.1} parent=1 // pred_region
      _
    $region141: #{decoder_forward.1} parent=1 // pred_fallthru
      _
    // Predicated region
    $region142: #{decoder_forward.1} parent=1 // pred_check
      _
    $region143: #{decoder_forward.1} parent=1 // pred_check_branch
      %168 = sbr.rel (0) target = $region145
    $region144: #{decoder_forward.1} parent=1 // pred_region
      _
    $region145: #{decoder_forward.1} parent=1 // pred_fallthru
      _
    // Predicated region
    $region146: #{decoder_forward.1} parent=1 // pred_check
      _
    $region147: #{decoder_forward.1} parent=1 // pred_check_branch
      %170 = sbr.rel (0) target = $region149
    $region148: #{decoder_forward.1} parent=1 // pred_region
      _
    $region149: #{decoder_forward.1} parent=1 // pred_fallthru
      _
    // Predicated region
    $region150: #{decoder_forward.1} parent=1 // pred_check
      _
    $region151: #{decoder_forward.1} parent=1 // pred_check_branch
      %172 = sbr.rel (0) target = $region153
    $region152: #{decoder_forward.1} parent=1 // pred_region
      _
    $region153: #{decoder_forward.1} parent=1 // pred_fallthru
      _
    // Predicated region
    $region154: #{decoder_forward.1} parent=1 // pred_check
      _
    $region155: #{decoder_forward.1} parent=1 // pred_check_branch
      %174 = sbr.rel (0) target = $region157
    $region156: #{decoder_forward.1} parent=1 // pred_region
      _
    $region157: #{decoder_forward.1} parent=1 // pred_fallthru
      _
    // Predicated region
    $region158: #{decoder_forward.1} parent=1 // pred_check
      _
    $region159: #{decoder_forward.1} parent=1 // pred_check_branch
      %176 = sbr.rel (0) target = $region161
    $region160: #{decoder_forward.1} parent=1 // pred_region
      %178 = vsyncadd [#allocation3], 0
      %s180 = sshll.u32 %s79, 4
      %s181 = int_to_ptr.hbm [resolvable:$true] %s180
      %s182 = sshll.u32 [#allocation2], 4
      %s183 = int_to_ptr.vmem [resolvable:$true] %s182
      %185 = dma.hbm_to_vmem [thread:$0]  %s181, 16, %s183, [#allocation3]
    $region161: #{decoder_forward.1} parent=1 // pred_fallthru
      _
    // Predicated region
    $region162: #{decoder_forward.1} parent=1 // pred_check
      _
    $region163: #{decoder_forward.1} parent=1 // pred_check_branch
      %187 = sbr.rel (0) target = $region165
    $region164: #{decoder_forward.1} parent=1 // pred_region
      %189 = vsyncadd [#allocation5], 0
      %s191 = sshll.u32 %s81, 4
      %s192 = int_to_ptr.hbm [resolvable:$true] %s191
      %s193 = sshll.u32 [#allocation4], 4
      %s194 = int_to_ptr.vmem [resolvable:$true] %s193
      %196 = dma.hbm_to_vmem [thread:$0]  %s192, 16, %s194, [#allocation5]
    $region165: #{decoder_forward.1} parent=1 // pred_fallthru
      _
    // Predicated region
    $region166: #{decoder_forward.1} parent=1 // pred_check
      _
    $region167: #{decoder_forward.1} parent=1 // pred_check_branch
      %198 = sbr.rel (0) target = $region169
    $region168: #{decoder_forward.1} parent=1 // pred_region
      %200 = vsyncadd [#allocation5], 0
      %s202 = sshll.u32 %s83, 4
      %s203 = int_to_ptr.hbm [resolvable:$true] %s202
      %s204 = sshll.u32 [#allocation6], 4
      %s205 = int_to_ptr.vmem [resolvable:$true] %s204
      %207 = dma.hbm_to_vmem [thread:$0]  %s203, 16, %s205, [#allocation5]
    $region169: #{decoder_forward.1} parent=1 // pred_fallthru
      _
    // Predicated region
    $region170: #{decoder_forward.1} parent=1 // pred_check
      _
    $region171: #{decoder_forward.1} parent=1 // pred_check_branch
      %209 = sbr.rel (0) target = $region173
    $region172: #{decoder_forward.1} parent=1 // pred_region
      _
    $region173: #{decoder_forward.1} parent=1 // pred_fallthru
      _
    // Predicated region
    $region174: #{decoder_forward.1} parent=1 // pred_check
      _
    $region175: #{decoder_forward.1} parent=1 // pred_check_branch
      %211 = sbr.rel (0) target = $region177
    $region176: #{decoder_forward.1} parent=1 // pred_region
      %213 = vsyncadd [#allocation8], 0
      %s215 = sshll.u32 %s87, 4
      %s216 = int_to_ptr.hbm [resolvable:$true] %s215
      %s217 = sshll.u32 [#allocation7], 4
      %s218 = int_to_ptr.vmem [resolvable:$true] %s217
      %220 = dma.hbm_to_vmem [thread:$0]  %s216, 16, %s218, [#allocation8]
    $region177: #{decoder_forward.1} parent=1 // pred_fallthru
      _
    // Predicated region
    $region178: #{decoder_forward.1} parent=1 // pred_check
      _
    $region179: #{decoder_forward.1} parent=1 // pred_check_branch
      %222 = sbr.rel (0) target = $region181
    $region180: #{decoder_forward.1} parent=1 // pred_region
      %224 = dma.done [#allocation3], 16
    $region181: #{decoder_forward.1} parent=1 // pred_fallthru
      _
    // Predicated region
    $region182: #{decoder_forward.1} parent=1 // pred_check
      _
    $region183: #{decoder_forward.1} parent=1 // pred_check_branch
      %226 = sbr.rel (0) target = $region185
    $region184: #{decoder_forward.1} parent=1 // pred_region
      %228 = dma.done [#allocation5], 16
    $region185: #{decoder_forward.1} parent=1 // pred_fallthru
      _
    // Predicated region
    $region186: #{decoder_forward.1} parent=1 // pred_check
      _
    $region187: #{decoder_forward.1} parent=1 // pred_check_branch
      %230 = sbr.rel (0) target = $region189
    $region188: #{decoder_forward.1} parent=1 // pred_region
      %232 = dma.done [#allocation5], 16
    $region189: #{decoder_forward.1} parent=1 // pred_fallthru
      _
    // Predicated region
    $region190: #{decoder_forward.1} parent=1 // pred_check
      _
    $region191: #{decoder_forward.1} parent=1 // pred_check_branch
      %234 = sbr.rel (0) target = $region193
    $region192: #{decoder_forward.1} parent=1 // pred_region
      %236 = dma.done [#allocation8], 16
    $region193: #{decoder_forward.1} parent=1 // pred_fallthru
      _
    %v237 = vld [vmem:[%s1] sm:$0xff]
    %v238 = vld [vmem:[%s1 + $0x8] sm:$0xff]
    %v239 = vld [vmem:[%s3] sm:$0xff]
    %v240 = vld [vmem:[%s3 + $0x8] sm:$0xff]
    %v241 = vlaneseq
    %v242 = vshrl.u32 %v241, 7
    %v243 = vlaneseq
    %v244 = vand.u32 %v243, 127
    %vm245 = vcmp.gt.s32.totalorder %v244, %v242
    %v246 = vld [vmem:[%s5] sm:$0xff]
    %v247 = vld [vmem:[%s5 + $0x8] sm:$0xff]
    %v248 = vld [vmem:[%s5 + $0x10] sm:$0xff]
    %v249 = vld [vmem:[%s5 + $0x18] sm:$0xff]
    %v250 = vld [vmem:[%s7] sm:$0x1]
    %v251 = vld [vmem:[%s9] sm:$0xff]
    %v252 = vld [vmem:[%s9 + $0x8] sm:$0xff]
    %v253 = vld [vmem:[%s9 + $0x10] sm:$0xff]
    %v254 = vld [vmem:[%s9 + $0x18] sm:$0xff]
    %v255 = vld [vmem:[%s11] sm:$0x1]
    %v256 = vld [vmem:[%s13] sm:$0xff]
    %v257 = vld [vmem:[%s13 + $0x8] sm:$0xff]
    %v258 = vld [vmem:[%s13 + $0x10] sm:$0xff]
    %v259 = vld [vmem:[%s13 + $0x18] sm:$0xff]
    %v260 = vld [vmem:[%s15] sm:$0x1]
    %v261 = vld [vmem:[%s17] sm:$0xff]
    %v262 = vld [vmem:[%s17 + $0x8] sm:$0xff]
    %v263 = vld [vmem:[%s17 + $0x10] sm:$0xff]
    %v264 = vld [vmem:[%s17 + $0x18] sm:$0xff]
    %v265 = vld [vmem:[%s19] sm:$0x1]
    %v266 = vld [vmem:[%s21] sm:$0xff]
    %v267 = vld [vmem:[%s21 + $0x8] sm:$0xff]
    %v268 = vld [vmem:[%s21 + $0x10] sm:$0xff]
    %v269 = vld [vmem:[%s21 + $0x18] sm:$0xff]
    %v270 = vld [vmem:[%s23] sm:$0x1]
    %v271 = vld [vmem:[%s25] sm:$0xff]
    %v272 = vld [vmem:[%s25 + $0x8] sm:$0xff]
    %v273 = vld [vmem:[%s25 + $0x10] sm:$0xff]
    %v274 = vld [vmem:[%s25 + $0x18] sm:$0xff]
    %v275 = vld [vmem:[%s27] sm:$0x1]
    %v276 = vld [vmem:[%s29] sm:$0xff]
    %v277 = vld [vmem:[%s29 + $0x8] sm:$0xff]
    %v278 = vld [vmem:[%s29 + $0x10] sm:$0xff]
    %v279 = vld [vmem:[%s29 + $0x18] sm:$0xff]
    %v280 = vld [vmem:[%s29 + $0x20] sm:$0xff]
    %v281 = vld [vmem:[%s29 + $0x28] sm:$0xff]
    %v282 = vld [vmem:[%s29 + $0x30] sm:$0xff]
    %v283 = vld [vmem:[%s29 + $0x38] sm:$0xff]
    %v284 = vld [vmem:[%s29 + $0x40] sm:$0xff]
    %v285 = vld [vmem:[%s29 + $0x48] sm:$0xff]
    %v286 = vld [vmem:[%s29 + $0x50] sm:$0xff]
    %v287 = vld [vmem:[%s29 + $0x58] sm:$0xff]
    %v288 = vld [vmem:[%s29 + $0x60] sm:$0xff]
    %v289 = vld [vmem:[%s29 + $0x68] sm:$0xff]
    %v290 = vld [vmem:[%s29 + $0x70] sm:$0xff]
    %v291 = vld [vmem:[%s29 + $0x78] sm:$0xff]
    %v292 = vld [vmem:[%s31] sm:$0x1]
    %v293 = vld [vmem:[%s33] sm:$0x1]
    %v294 = vld [vmem:[%s35] sm:$0x1]
    %v295 = vld [vmem:[%s37] sm:$0x1]
    %v296 = vld [vmem:[%s39] sm:$0x1]
    %v297 = vld [vmem:[%s41] sm:$0x1]
    %v298 = vld [vmem:[%s43] sm:$0x1]
    %v300 = vperm.slane %v250, 0
    %vm302 = vcmask 261120
    %v304 = vsel %vm302, %v237, 0
    %v307 = vsel %vm302, %v238, 0
    %309 = vmatpush.msra.mxu0 0.0
    %310 = vmatpush.msra.mxu0 0.0
    %311 = vmatpush.msra.mxu0 0.0
    %312 = vmatpush.msra.mxu0 0.0
    %313 = vmatpush.msra.mxu0 0.0
    %314 = vmatpush.msra.mxu0 0.0
    %315 = vmatpush.msra.mxu0 0.0
    %316 = vmatpush.msra.mxu0 0.0
    %317 = vmatpush.msra.mxu0 0.0
    %318 = vmatpush.msra.mxu0 0.0
    %319 = vmatpush.msra.mxu0 0.0
    %320 = vmatpush.msra.mxu0 0.0
    %321 = vmatpush.msra.mxu0 %v249
    %322 = vmatpush.msra.mxu0 %v248
    %323 = vmatpush.msra.mxu0 %v247
    %324 = vmatpush.msra.mxu0 %v246
    %325 = vmatmul.f32.gmra.mxu0 %v304
    %v326 = vpop.f32.mrf.mxu0
    %v327 = vadd.f32 %v300, %v326
    %328 = vmatmul.f32.gmra.mxu0 %v307
    %v329 = vpop.f32.mrf.mxu0
    %v330 = vadd.f32 %v300, %v329
    %331 = vdwg.mxu0
    %334 = vrot.lane.b32.xlu0 %v327, 120
    %v335 = vpop.permute.xlu0 %334
    %336 = vrot.lane.b32.xlu0 %v330, 120
    %v337 = vpop.permute.xlu0 %336
    %338 = vrot.lane.b32.xlu0 %v327, 112
    %v339 = vpop.permute.xlu0 %338
    %340 = vrot.lane.b32.xlu0 %v330, 112
    %v341 = vpop.permute.xlu0 %340
    %342 = vrot.lane.b32.xlu0 %v327, 104
    %v343 = vpop.permute.xlu0 %342
    %344 = vrot.lane.b32.xlu0 %v330, 104
    %v345 = vpop.permute.xlu0 %344
    %346 = vrot.lane.b32.xlu0 %v327, 96
    %v347 = vpop.permute.xlu0 %346
    %vm348 = vcmask 64512
    %v349 = vsel %vm348, %v327, 0
    %v351 = vsel %vm348, %v347, 0
    %353 = vmatpush.xpose.msra.mxu0 0.0
    %354 = vmatpush.xpose.msra.mxu0 0.0
    %355 = vmatpush.xpose.msra.mxu0 0.0
    %356 = vmatpush.xpose.msra.mxu0 0.0
    %357 = vmatpush.xpose.msra.mxu0 0.0
    %358 = vmatpush.xpose.msra.mxu0 0.0
    %359 = vmatpush.xpose.msra.mxu0 0.0
    %360 = vmatpush.xpose.msra.mxu0 0.0
    %361 = vmatpush.xpose.msra.mxu0 0.0
    %362 = vmatpush.xpose.msra.mxu0 0.0
    %363 = vmatpush.xpose.msra.mxu0 0.0
    %364 = vmatpush.xpose.msra.mxu0 0.0
    %365 = vmatpush.xpose.msra.mxu0 0.0
    %366 = vmatpush.xpose.msra.mxu0 0.0
    %367 = vmatpush.xpose.msra.mxu0 0.0
    %368 = vmatpush.xpose.msra.mxu0 %v351
    %369 = vmatmul.f32.gmra.mxu0 %v349
    %v370 = vpop.f32.mrf.mxu0
    %v371 = vadd.f32 0.0, %v370
    %372 = vdwg.mxu0
    %373 = vrot.lane.b32.xlu0 %v330, 96
    %v374 = vpop.permute.xlu0 %373
    %v375 = vsel %vm348, %v330, 0
    %v377 = vsel %vm348, %v374, 0
    %379 = vmatpush.xpose.msra.mxu0 0.0
    %380 = vmatpush.xpose.msra.mxu0 0.0
    %381 = vmatpush.xpose.msra.mxu0 0.0
    %382 = vmatpush.xpose.msra.mxu0 0.0
    %383 = vmatpush.xpose.msra.mxu0 0.0
    %384 = vmatpush.xpose.msra.mxu0 0.0
    %385 = vmatpush.xpose.msra.mxu0 0.0
    %386 = vmatpush.xpose.msra.mxu0 0.0
    %387 = vmatpush.xpose.msra.mxu0 0.0
    %388 = vmatpush.xpose.msra.mxu0 0.0
    %389 = vmatpush.xpose.msra.mxu0 0.0
    %390 = vmatpush.xpose.msra.mxu0 0.0
    %391 = vmatpush.xpose.msra.mxu0 0.0
    %392 = vmatpush.xpose.msra.mxu0 0.0
    %393 = vmatpush.xpose.msra.mxu0 0.0
    %394 = vmatpush.xpose.msra.mxu0 %v377
    %395 = vmatmul.f32.gmra.mxu0 %v375
    %v396 = vpop.f32.mrf.mxu0
    %v397 = vadd.f32 0.0, %v396
    %398 = vdwg.mxu0
    %399 = vrot.lane.b32.xlu0 %v335, 96
    %v400 = vpop.permute.xlu0 %399
    %v401 = vsel %vm348, %v335, 0
    %v403 = vsel %vm348, %v400, 0
    %405 = vmatpush.xpose.msra.mxu0 0.0
    %406 = vmatpush.xpose.msra.mxu0 0.0
    %407 = vmatpush.xpose.msra.mxu0 0.0
    %408 = vmatpush.xpose.msra.mxu0 0.0
    %409 = vmatpush.xpose.msra.mxu0 0.0
    %410 = vmatpush.xpose.msra.mxu0 0.0
    %411 = vmatpush.xpose.msra.mxu0 0.0
    %412 = vmatpush.xpose.msra.mxu0 0.0
    %413 = vmatpush.xpose.msra.mxu0 0.0
    %414 = vmatpush.xpose.msra.mxu0 0.0
    %415 = vmatpush.xpose.msra.mxu0 0.0
    %416 = vmatpush.xpose.msra.mxu0 0.0
    %417 = vmatpush.xpose.msra.mxu0 0.0
    %418 = vmatpush.xpose.msra.mxu0 0.0
    %419 = vmatpush.xpose.msra.mxu0 0.0
    %420 = vmatpush.xpose.msra.mxu0 %v403
    %421 = vmatmul.f32.gmra.mxu0 %v401
    %v422 = vpop.f32.mrf.mxu0
    %v423 = vadd.f32 0.0, %v422
    %424 = vdwg.mxu0
    %425 = vrot.lane.b32.xlu0 %v337, 96
    %v426 = vpop.permute.xlu0 %425
    %v427 = vsel %vm348, %v337, 0
    %v429 = vsel %vm348, %v426, 0
    %431 = vmatpush.xpose.msra.mxu0 0.0
    %432 = vmatpush.xpose.msra.mxu0 0.0
    %433 = vmatpush.xpose.msra.mxu0 0.0
    %434 = vmatpush.xpose.msra.mxu0 0.0
    %435 = vmatpush.xpose.msra.mxu0 0.0
    %436 = vmatpush.xpose.msra.mxu0 0.0
    %437 = vmatpush.xpose.msra.mxu0 0.0
    %438 = vmatpush.xpose.msra.mxu0 0.0
    %439 = vmatpush.xpose.msra.mxu0 0.0
    %440 = vmatpush.xpose.msra.mxu0 0.0
    %441 = vmatpush.xpose.msra.mxu0 0.0
    %442 = vmatpush.xpose.msra.mxu0 0.0
    %443 = vmatpush.xpose.msra.mxu0 0.0
    %444 = vmatpush.xpose.msra.mxu0 0.0
    %445 = vmatpush.xpose.msra.mxu0 0.0
    %446 = vmatpush.xpose.msra.mxu0 %v429
    %447 = vmatmul.f32.gmra.mxu0 %v427
    %v448 = vpop.f32.mrf.mxu0
    %v449 = vadd.f32 0.0, %v448
    %450 = vdwg.mxu0
    %451 = vrot.lane.b32.xlu0 %v339, 96
    %v452 = vpop.permute.xlu0 %451
    %v453 = vsel %vm348, %v339, 0
    %v455 = vsel %vm348, %v452, 0
    %457 = vmatpush.xpose.msra.mxu0 0.0
    %458 = vmatpush.xpose.msra.mxu0 0.0
    %459 = vmatpush.xpose.msra.mxu0 0.0
    %460 = vmatpush.xpose.msra.mxu0 0.0
    %461 = vmatpush.xpose.msra.mxu0 0.0
    %462 = vmatpush.xpose.msra.mxu0 0.0
    %463 = vmatpush.xpose.msra.mxu0 0.0
    %464 = vmatpush.xpose.msra.mxu0 0.0
    %465 = vmatpush.xpose.msra.mxu0 0.0
    %466 = vmatpush.xpose.msra.mxu0 0.0
    %467 = vmatpush.xpose.msra.mxu0 0.0
    %468 = vmatpush.xpose.msra.mxu0 0.0
    %469 = vmatpush.xpose.msra.mxu0 0.0
    %470 = vmatpush.xpose.msra.mxu0 0.0
    %471 = vmatpush.xpose.msra.mxu0 0.0
    %472 = vmatpush.xpose.msra.mxu0 %v455
    %473 = vmatmul.f32.gmra.mxu0 %v453
    %v474 = vpop.f32.mrf.mxu0
    %v475 = vadd.f32 0.0, %v474
    %476 = vdwg.mxu0
    %477 = vrot.lane.b32.xlu0 %v341, 96
    %v478 = vpop.permute.xlu0 %477
    %v479 = vsel %vm348, %v341, 0
    %v481 = vsel %vm348, %v478, 0
    %483 = vmatpush.xpose.msra.mxu0 0.0
    %484 = vmatpush.xpose.msra.mxu0 0.0
    %485 = vmatpush.xpose.msra.mxu0 0.0
    %486 = vmatpush.xpose.msra.mxu0 0.0
    %487 = vmatpush.xpose.msra.mxu0 0.0
    %488 = vmatpush.xpose.msra.mxu0 0.0
    %489 = vmatpush.xpose.msra.mxu0 0.0
    %490 = vmatpush.xpose.msra.mxu0 0.0
    %491 = vmatpush.xpose.msra.mxu0 0.0
    %492 = vmatpush.xpose.msra.mxu0 0.0
    %493 = vmatpush.xpose.msra.mxu0 0.0
    %494 = vmatpush.xpose.msra.mxu0 0.0
    %495 = vmatpush.xpose.msra.mxu0 0.0
    %496 = vmatpush.xpose.msra.mxu0 0.0
    %497 = vmatpush.xpose.msra.mxu0 0.0
    %498 = vmatpush.xpose.msra.mxu0 %v481
    %499 = vmatmul.f32.gmra.mxu0 %v479
    %v500 = vpop.f32.mrf.mxu0
    %v501 = vadd.f32 0.0, %v500
    %502 = vdwg.mxu0
    %503 = vrot.lane.b32.xlu0 %v343, 96
    %v504 = vpop.permute.xlu0 %503
    %v505 = vsel %vm348, %v343, 0
    %v507 = vsel %vm348, %v504, 0
    %509 = vmatpush.xpose.msra.mxu0 0.0
    %510 = vmatpush.xpose.msra.mxu0 0.0
    %511 = vmatpush.xpose.msra.mxu0 0.0
    %512 = vmatpush.xpose.msra.mxu0 0.0
    %513 = vmatpush.xpose.msra.mxu0 0.0
    %514 = vmatpush.xpose.msra.mxu0 0.0
    %515 = vmatpush.xpose.msra.mxu0 0.0
    %516 = vmatpush.xpose.msra.mxu0 0.0
    %517 = vmatpush.xpose.msra.mxu0 0.0
    %518 = vmatpush.xpose.msra.mxu0 0.0
    %519 = vmatpush.xpose.msra.mxu0 0.0
    %520 = vmatpush.xpose.msra.mxu0 0.0
    %521 = vmatpush.xpose.msra.mxu0 0.0
    %522 = vmatpush.xpose.msra.mxu0 0.0
    %523 = vmatpush.xpose.msra.mxu0 0.0
    %524 = vmatpush.xpose.msra.mxu0 %v507
    %525 = vmatmul.f32.gmra.mxu0 %v505
    %v526 = vpop.f32.mrf.mxu0
    %v527 = vadd.f32 0.0, %v526
    %528 = vdwg.mxu0
    %529 = vrot.lane.b32.xlu0 %v345, 96
    %v530 = vpop.permute.xlu0 %529
    %v531 = vsel %vm348, %v345, 0
    %v533 = vsel %vm348, %v530, 0
    %535 = vmatpush.xpose.msra.mxu0 0.0
    %536 = vmatpush.xpose.msra.mxu0 0.0
    %537 = vmatpush.xpose.msra.mxu0 0.0
    %538 = vmatpush.xpose.msra.mxu0 0.0
    %539 = vmatpush.xpose.msra.mxu0 0.0
    %540 = vmatpush.xpose.msra.mxu0 0.0
    %541 = vmatpush.xpose.msra.mxu0 0.0
    %542 = vmatpush.xpose.msra.mxu0 0.0
    %543 = vmatpush.xpose.msra.mxu0 0.0
    %544 = vmatpush.xpose.msra.mxu0 0.0
    %545 = vmatpush.xpose.msra.mxu0 0.0
    %546 = vmatpush.xpose.msra.mxu0 0.0
    %547 = vmatpush.xpose.msra.mxu0 0.0
    %548 = vmatpush.xpose.msra.mxu0 0.0
    %549 = vmatpush.xpose.msra.mxu0 0.0
    %550 = vmatpush.xpose.msra.mxu0 %v533
    %551 = vmatmul.f32.gmra.mxu0 %v531
    %v552 = vpop.f32.mrf.mxu0
    %v553 = vadd.f32 0.0, %v552
    %554 = vdwg.mxu0
    %v555 = vsel %vm245, 1, 0
    %vm556 = vcmp.eq.s32.totalorder %v555, 1
    %v557 = vsel %vm556, -1e+30, %v371
    %v558 = vsel %vm556, -1e+30, %v397
    %v559 = vsel %vm556, -1e+30, %v423
    %v560 = vsel %vm556, -1e+30, %v449
    %v561 = vsel %vm556, -1e+30, %v475
    %v562 = vsel %vm556, -1e+30, %v501
    %v563 = vsel %vm556, -1e+30, %v527
    %v564 = vsel %vm556, -1e+30, %v553
    %v565 = vsel %vm348, %v557, -inf
    %566 = vmax.xlane.f32.xlu0 %v565
    %v567 = vpop.xlane.xlu0 %566
    %v568 = vsel %vm348, %v558, -inf
    %569 = vmax.xlane.f32.xlu0 %v568
    %v570 = vpop.xlane.xlu0 %569
    %v571 = vsel %vm348, %v559, -inf
    %572 = vmax.xlane.f32.xlu0 %v571
    %v573 = vpop.xlane.xlu0 %572
    %v574 = vsel %vm348, %v560, -inf
    %575 = vmax.xlane.f32.xlu0 %v574
    %v576 = vpop.xlane.xlu0 %575
    %v577 = vsel %vm348, %v561, -inf
    %578 = vmax.xlane.f32.xlu0 %v577
    %v579 = vpop.xlane.xlu0 %578
    %v580 = vsel %vm348, %v562, -inf
    %581 = vmax.xlane.f32.xlu0 %v580
    %v582 = vpop.xlane.xlu0 %581
    %v583 = vsel %vm348, %v563, -inf
    %584 = vmax.xlane.f32.xlu0 %v583
    %v585 = vpop.xlane.xlu0 %584
    %v586 = vsel %vm348, %v564, -inf
    %587 = vmax.xlane.f32.xlu0 %v586
    %v588 = vpop.xlane.xlu0 %587
    %v589 = vsub.f32 %v557, %v567
    %v590 = vsub.f32 %v558, %v570
    %v591 = vsub.f32 %v559, %v573
    %v592 = vsub.f32 %v560, %v576
    %v593 = vsub.f32 %v561, %v579
    %v594 = vsub.f32 %v562, %v582
    %v595 = vsub.f32 %v563, %v585
    %v596 = vsub.f32 %v564, %v588
    %v597 = vmul.f32 %v589, 1.442695
    %v598 = vpow.pop %v597
    %v599 = vmul.f32 %v590, 1.442695
    %v600 = vpow.pop %v599
    %v601 = vmul.f32 %v591, 1.442695
    %v602 = vpow.pop %v601
    %v603 = vmul.f32 %v592, 1.442695
    %v604 = vpow.pop %v603
    %v605 = vmul.f32 %v593, 1.442695
    %v606 = vpow.pop %v605
    %v607 = vmul.f32 %v594, 1.442695
    %v608 = vpow.pop %v607
    %v609 = vmul.f32 %v595, 1.442695
    %v610 = vpow.pop %v609
    %v611 = vmul.f32 %v596, 1.442695
    %v612 = vpow.pop %v611
    %v613 = vsel %vm348, %v598, 0.0
    %614 = vadd.xlane.f32.xlu0 %v613
    %v615 = vpop.xlane.xlu0 %614
    %v616 = vsel %vm348, %v600, 0.0
    %617 = vadd.xlane.f32.xlu0 %v616
    %v618 = vpop.xlane.xlu0 %617
    %v619 = vsel %vm348, %v602, 0.0
    %620 = vadd.xlane.f32.xlu0 %v619
    %v621 = vpop.xlane.xlu0 %620
    %v622 = vsel %vm348, %v604, 0.0
    %623 = vadd.xlane.f32.xlu0 %v622
    %v624 = vpop.xlane.xlu0 %623
    %v625 = vsel %vm348, %v606, 0.0
    %626 = vadd.xlane.f32.xlu0 %v625
    %v627 = vpop.xlane.xlu0 %626
    %v628 = vsel %vm348, %v608, 0.0
    %629 = vadd.xlane.f32.xlu0 %v628
    %v630 = vpop.xlane.xlu0 %629
    %v631 = vsel %vm348, %v610, 0.0
    %632 = vadd.xlane.f32.xlu0 %v631
    %v633 = vpop.xlane.xlu0 %632
    %v634 = vsel %vm348, %v612, 0.0
    %635 = vadd.xlane.f32.xlu0 %v634
    %v636 = vpop.xlane.xlu0 %635
    %v637 = vrcp.pop %v615
    %v638 = vrcp.pop %v618
    %v639 = vrcp.pop %v621
    %v640 = vrcp.pop %v624
    %v641 = vrcp.pop %v627
    %v642 = vrcp.pop %v630
    %v643 = vrcp.pop %v633
    %v644 = vrcp.pop %v636
    %v645 = vmul.f32 %v598, %v637
    %v646 = vmul.f32 %v600, %v638
    %v647 = vmul.f32 %v602, %v639
    %v648 = vmul.f32 %v604, %v640
    %v649 = vmul.f32 %v606, %v641
    %v650 = vmul.f32 %v608, %v642
    %v651 = vmul.f32 %v610, %v643
    %v652 = vmul.f32 %v612, %v644
    %653 = vrot.lane.b32.xlu0 %v327, 64
    %v654 = vpop.permute.xlu0 %653
    %v657 = vsel %vm348, %v645, 0
    %659 = vmatpush.msra.mxu0 0.0
    %660 = vmatpush.msra.mxu0 0.0
    %661 = vmatpush.msra.mxu0 0.0
    %662 = vmatpush.msra.mxu0 0.0
    %663 = vmatpush.msra.mxu0 0.0
    %664 = vmatpush.msra.mxu0 0.0
    %665 = vmatpush.msra.mxu0 0.0
    %666 = vmatpush.msra.mxu0 0.0
    %667 = vmatpush.msra.mxu0 0.0
    %668 = vmatpush.msra.mxu0 0.0
    %669 = vmatpush.msra.mxu0 0.0
    %670 = vmatpush.msra.mxu0 0.0
    %671 = vmatpush.msra.mxu0 0.0
    %672 = vmatpush.msra.mxu0 0.0
    %673 = vmatpush.msra.mxu0 0.0
    %674 = vmatpush.msra.mxu0 %v654
    %675 = vmatmul.f32.gmra.mxu0 %v657
    %v676 = vpop.f32.mrf.mxu0
    %v677 = vadd.f32 0.0, %v676
    %678 = vdwg.mxu0
    %679 = vrot.lane.b32.xlu0 %v330, 64
    %v680 = vpop.permute.xlu0 %679
    %v683 = vsel %vm348, %v646, 0
    %685 = vmatpush.msra.mxu0 0.0
    %686 = vmatpush.msra.mxu0 0.0
    %687 = vmatpush.msra.mxu0 0.0
    %688 = vmatpush.msra.mxu0 0.0
    %689 = vmatpush.msra.mxu0 0.0
    %690 = vmatpush.msra.mxu0 0.0
    %691 = vmatpush.msra.mxu0 0.0
    %692 = vmatpush.msra.mxu0 0.0
    %693 = vmatpush.msra.mxu0 0.0
    %694 = vmatpush.msra.mxu0 0.0
    %695 = vmatpush.msra.mxu0 0.0
    %696 = vmatpush.msra.mxu0 0.0
    %697 = vmatpush.msra.mxu0 0.0
    %698 = vmatpush.msra.mxu0 0.0
    %699 = vmatpush.msra.mxu0 0.0
    %700 = vmatpush.msra.mxu0 %v680
    %701 = vmatmul.f32.gmra.mxu0 %v683
    %v702 = vpop.f32.mrf.mxu0
    %v703 = vadd.f32 0.0, %v702
    %704 = vdwg.mxu0
    %705 = vrot.lane.b32.xlu0 %v335, 64
    %v706 = vpop.permute.xlu0 %705
    %v709 = vsel %vm348, %v647, 0
    %711 = vmatpush.msra.mxu0 0.0
    %712 = vmatpush.msra.mxu0 0.0
    %713 = vmatpush.msra.mxu0 0.0
    %714 = vmatpush.msra.mxu0 0.0
    %715 = vmatpush.msra.mxu0 0.0
    %716 = vmatpush.msra.mxu0 0.0
    %717 = vmatpush.msra.mxu0 0.0
    %718 = vmatpush.msra.mxu0 0.0
    %719 = vmatpush.msra.mxu0 0.0
    %720 = vmatpush.msra.mxu0 0.0
    %721 = vmatpush.msra.mxu0 0.0
    %722 = vmatpush.msra.mxu0 0.0
    %723 = vmatpush.msra.mxu0 0.0
    %724 = vmatpush.msra.mxu0 0.0
    %725 = vmatpush.msra.mxu0 0.0
    %726 = vmatpush.msra.mxu0 %v706
    %727 = vmatmul.f32.gmra.mxu0 %v709
    %v728 = vpop.f32.mrf.mxu0
    %v729 = vadd.f32 0.0, %v728
    %730 = vdwg.mxu0
    %731 = vrot.lane.b32.xlu0 %v337, 64
    %v732 = vpop.permute.xlu0 %731
    %v735 = vsel %vm348, %v648, 0
    %737 = vmatpush.msra.mxu0 0.0
    %738 = vmatpush.msra.mxu0 0.0
    %739 = vmatpush.msra.mxu0 0.0
    %740 = vmatpush.msra.mxu0 0.0
    %741 = vmatpush.msra.mxu0 0.0
    %742 = vmatpush.msra.mxu0 0.0
    %743 = vmatpush.msra.mxu0 0.0
    %744 = vmatpush.msra.mxu0 0.0
    %745 = vmatpush.msra.mxu0 0.0
    %746 = vmatpush.msra.mxu0 0.0
    %747 = vmatpush.msra.mxu0 0.0
    %748 = vmatpush.msra.mxu0 0.0
    %749 = vmatpush.msra.mxu0 0.0
    %750 = vmatpush.msra.mxu0 0.0
    %751 = vmatpush.msra.mxu0 0.0
    %752 = vmatpush.msra.mxu0 %v732
    %753 = vmatmul.f32.gmra.mxu0 %v735
    %v754 = vpop.f32.mrf.mxu0
    %v755 = vadd.f32 0.0, %v754
    %756 = vdwg.mxu0
    %757 = vrot.lane.b32.xlu0 %v339, 64
    %v758 = vpop.permute.xlu0 %757
    %v761 = vsel %vm348, %v649, 0
    %763 = vmatpush.msra.mxu0 0.0
    %764 = vmatpush.msra.mxu0 0.0
    %765 = vmatpush.msra.mxu0 0.0
    %766 = vmatpush.msra.mxu0 0.0
    %767 = vmatpush.msra.mxu0 0.0
    %768 = vmatpush.msra.mxu0 0.0
    %769 = vmatpush.msra.mxu0 0.0
    %770 = vmatpush.msra.mxu0 0.0
    %771 = vmatpush.msra.mxu0 0.0
    %772 = vmatpush.msra.mxu0 0.0
    %773 = vmatpush.msra.mxu0 0.0
    %774 = vmatpush.msra.mxu0 0.0
    %775 = vmatpush.msra.mxu0 0.0
    %776 = vmatpush.msra.mxu0 0.0
    %777 = vmatpush.msra.mxu0 0.0
    %778 = vmatpush.msra.mxu0 %v758
    %779 = vmatmul.f32.gmra.mxu0 %v761
    %v780 = vpop.f32.mrf.mxu0
    %v781 = vadd.f32 0.0, %v780
    %782 = vdwg.mxu0
    %783 = vrot.lane.b32.xlu0 %v341, 64
    %v784 = vpop.permute.xlu0 %783
    %v787 = vsel %vm348, %v650, 0
    %789 = vmatpush.msra.mxu0 0.0
    %790 = vmatpush.msra.mxu0 0.0
    %791 = vmatpush.msra.mxu0 0.0
    %792 = vmatpush.msra.mxu0 0.0
    %793 = vmatpush.msra.mxu0 0.0
    %794 = vmatpush.msra.mxu0 0.0
    %795 = vmatpush.msra.mxu0 0.0
    %796 = vmatpush.msra.mxu0 0.0
    %797 = vmatpush.msra.mxu0 0.0
    %798 = vmatpush.msra.mxu0 0.0
    %799 = vmatpush.msra.mxu0 0.0
    %800 = vmatpush.msra.mxu0 0.0
    %801 = vmatpush.msra.mxu0 0.0
    %802 = vmatpush.msra.mxu0 0.0
    %803 = vmatpush.msra.mxu0 0.0
    %804 = vmatpush.msra.mxu0 %v784
    %805 = vmatmul.f32.gmra.mxu0 %v787
    %v806 = vpop.f32.mrf.mxu0
    %v807 = vadd.f32 0.0, %v806
    %808 = vdwg.mxu0
    %809 = vrot.lane.b32.xlu0 %v343, 64
    %v810 = vpop.permute.xlu0 %809
    %v813 = vsel %vm348, %v651, 0
    %815 = vmatpush.msra.mxu0 0.0
    %816 = vmatpush.msra.mxu0 0.0
    %817 = vmatpush.msra.mxu0 0.0
    %818 = vmatpush.msra.mxu0 0.0
    %819 = vmatpush.msra.mxu0 0.0
    %820 = vmatpush.msra.mxu0 0.0
    %821 = vmatpush.msra.mxu0 0.0
    %822 = vmatpush.msra.mxu0 0.0
    %823 = vmatpush.msra.mxu0 0.0
    %824 = vmatpush.msra.mxu0 0.0
    %825 = vmatpush.msra.mxu0 0.0
    %826 = vmatpush.msra.mxu0 0.0
    %827 = vmatpush.msra.mxu0 0.0
    %828 = vmatpush.msra.mxu0 0.0
    %829 = vmatpush.msra.mxu0 0.0
    %830 = vmatpush.msra.mxu0 %v810
    %831 = vmatmul.f32.gmra.mxu0 %v813
    %v832 = vpop.f32.mrf.mxu0
    %v833 = vadd.f32 0.0, %v832
    %834 = vdwg.mxu0
    %835 = vrot.lane.b32.xlu0 %v345, 64
    %v836 = vpop.permute.xlu0 %835
    %v839 = vsel %vm348, %v652, 0
    %841 = vmatpush.msra.mxu0 0.0
    %842 = vmatpush.msra.mxu0 0.0
    %843 = vmatpush.msra.mxu0 0.0
    %844 = vmatpush.msra.mxu0 0.0
    %845 = vmatpush.msra.mxu0 0.0
    %846 = vmatpush.msra.mxu0 0.0
    %847 = vmatpush.msra.mxu0 0.0
    %848 = vmatpush.msra.mxu0 0.0
    %849 = vmatpush.msra.mxu0 0.0
    %850 = vmatpush.msra.mxu0 0.0
    %851 = vmatpush.msra.mxu0 0.0
    %852 = vmatpush.msra.mxu0 0.0
    %853 = vmatpush.msra.mxu0 0.0
    %854 = vmatpush.msra.mxu0 0.0
    %855 = vmatpush.msra.mxu0 0.0
    %856 = vmatpush.msra.mxu0 %v836
    %857 = vmatmul.f32.gmra.mxu0 %v839
    %v858 = vpop.f32.mrf.mxu0
    %v859 = vadd.f32 0.0, %v858
    %860 = vdwg.mxu0
    %863 = vrot.lane.b32.xlu0 %v729, 8
    %v864 = vpop.permute.xlu0 %863
    %865 = vrot.lane.b32.xlu0 %v755, 8
    %v866 = vpop.permute.xlu0 %865
    %871 = vrot.lane.b32.xlu0 %v781, 16
    %v872 = vpop.permute.xlu0 %871
    %873 = vrot.lane.b32.xlu0 %v807, 16
    %v874 = vpop.permute.xlu0 %873
    %879 = vrot.lane.b32.xlu0 %v833, 24
    %v880 = vpop.permute.xlu0 %879
    %881 = vrot.lane.b32.xlu0 %v859, 24
    %v882 = vpop.permute.xlu0 %881
    %v885 = vsel %vm348, %v677, %v864
    %v886 = vsel %vm348, %v703, %v866
    %vm887 = vcmask 130048
    %v888 = vsel %vm887, %v885, %v872
    %v889 = vsel %vm887, %v886, %v874
    %vm890 = vcmask 195584
    %v891 = vsel %vm890, %v888, %v880
    %v892 = vsel %vm890, %v889, %v882
    %v894 = vperm.slane %v255, 0
    %v897 = vsel %vm302, %v891, 0
    %v900 = vsel %vm302, %v892, 0
    %902 = vmatpush.msra.mxu0 0.0
    %903 = vmatpush.msra.mxu0 0.0
    %904 = vmatpush.msra.mxu0 0.0
    %905 = vmatpush.msra.mxu0 0.0
    %906 = vmatpush.msra.mxu0 0.0
    %907 = vmatpush.msra.mxu0 0.0
    %908 = vmatpush.msra.mxu0 0.0
    %909 = vmatpush.msra.mxu0 0.0
    %910 = vmatpush.msra.mxu0 0.0
    %911 = vmatpush.msra.mxu0 0.0
    %912 = vmatpush.msra.mxu0 0.0
    %913 = vmatpush.msra.mxu0 0.0
    %914 = vmatpush.msra.mxu0 %v254
    %915 = vmatpush.msra.mxu0 %v253
    %916 = vmatpush.msra.mxu0 %v252
    %917 = vmatpush.msra.mxu0 %v251
    %918 = vmatmul.f32.gmra.mxu0 %v897
    %v919 = vpop.f32.mrf.mxu0
    %v920 = vadd.f32 %v894, %v919
    %921 = vmatmul.f32.gmra.mxu0 %v900
    %v922 = vpop.f32.mrf.mxu0
    %v923 = vadd.f32 %v894, %v922
    %924 = vdwg.mxu0
    %v925 = vadd.f32 %v237, %v920
    %v926 = vadd.f32 %v238, %v923
    %v927 = vsel %vm302, %v925, 0.0
    %928 = vadd.xlane.f32.xlu0 %v927
    %v929 = vpop.xlane.xlu0 %928
    %v930 = vsel %vm302, %v926, 0.0
    %931 = vadd.xlane.f32.xlu0 %v930
    %v932 = vpop.xlane.xlu0 %931
    %v933 = vrcp.pop 32.0
    %v934 = vmul.f32 32.0, %v933
    %v935 = vsub.f32 1.0, %v934
    %v936 = vmul.f32 %v933, %v935
    %v937 = vadd.f32 %v933, %v936
    %vm938 = vweird.f32 %v933
    %v939 = vsel %vm938, %v933, %v937
    %v940 = vmul.f32 %v929, %v939
    %v941 = vmul.f32 %v932, %v939
    %v942 = vsub.f32 %v925, %v940
    %v943 = vsub.f32 %v926, %v941
    %v944 = vmul.f32 %v942, %v942
    %v945 = vmul.f32 %v943, %v943
    %v946 = vsel %vm302, %v944, 0.0
    %947 = vadd.xlane.f32.xlu0 %v946
    %v948 = vpop.xlane.xlu0 %947
    %v949 = vsel %vm302, %v945, 0.0
    %950 = vadd.xlane.f32.xlu0 %v949
    %v951 = vpop.xlane.xlu0 %950
    %v952 = vmul.f32 %v948, %v939
    %v953 = vmul.f32 %v951, %v939
    %v954 = vadd.f32 %v952, 1e-05
    %v955 = vadd.f32 %v953, 1e-05
    %v956 = vrsqrt.pop %v954
    %v957 = vmul.f32 %v956, %v954
    %v958 = vmul.f32 %v957, %v956
    %v959 = vmul.f32 0.5, %v958
    %v960 = vsub.f32 1.5, %v959
    %v961 = vmul.f32 %v956, %v960
    %vm962 = vweird.f32 %v954
    %vm963 = vweird.f32 %v956
    %vm964 = vmor %vm962, %vm963
    %v965 = vsel %vm964, %v956, %v961
    %v966 = vrsqrt.pop %v955
    %v967 = vmul.f32 %v966, %v955
    %v968 = vmul.f32 %v967, %v966
    %v969 = vmul.f32 0.5, %v968
    %v970 = vsub.f32 1.5, %v969
    %v971 = vmul.f32 %v966, %v970
    %vm972 = vweird.f32 %v955
    %vm973 = vweird.f32 %v966
    %vm974 = vmor %vm972, %vm973
    %v975 = vsel %vm974, %v966, %v971
    %v976 = vmul.f32 %v942, %v965
    %v977 = vmul.f32 %v943, %v975
    %v979 = vperm.slane %v293, 0
    %v981 = vmul.f32 %v976, %v979
    %v982 = vmul.f32 %v977, %v979
    %v984 = vperm.slane %v294, 0
    %v986 = vadd.f32 %v981, %v984
    %v987 = vadd.f32 %v982, %v984
    %v989 = vperm.slane %v260, 0
    %v992 = vsel %vm302, %v986, 0
    %v995 = vsel %vm302, %v987, 0
    %997 = vmatpush.msra.mxu0 0.0
    %998 = vmatpush.msra.mxu0 0.0
    %999 = vmatpush.msra.mxu0 0.0
    %1000 = vmatpush.msra.mxu0 0.0
    %1001 = vmatpush.msra.mxu0 0.0
    %1002 = vmatpush.msra.mxu0 0.0
    %1003 = vmatpush.msra.mxu0 0.0
    %1004 = vmatpush.msra.mxu0 0.0
    %1005 = vmatpush.msra.mxu0 0.0
    %1006 = vmatpush.msra.mxu0 0.0
    %1007 = vmatpush.msra.mxu0 0.0
    %1008 = vmatpush.msra.mxu0 0.0
    %1009 = vmatpush.msra.mxu0 %v259
    %1010 = vmatpush.msra.mxu0 %v258
    %1011 = vmatpush.msra.mxu0 %v257
    %1012 = vmatpush.msra.mxu0 %v256
    %1013 = vmatmul.f32.gmra.mxu0 %v992
    %v1014 = vpop.f32.mrf.mxu0
    %v1015 = vadd.f32 %v989, %v1014
    %1016 = vmatmul.f32.gmra.mxu0 %v995
    %v1017 = vpop.f32.mrf.mxu0
    %v1018 = vadd.f32 %v989, %v1017
    %1019 = vdwg.mxu0
    %v1021 = vperm.slane %v265, 0
    %v1024 = vsel %vm302, %v239, 0
    %v1027 = vsel %vm302, %v240, 0
    %1029 = vmatpush.msra.mxu0 0.0
    %1030 = vmatpush.msra.mxu0 0.0
    %1031 = vmatpush.msra.mxu0 0.0
    %1032 = vmatpush.msra.mxu0 0.0
    %1033 = vmatpush.msra.mxu0 0.0
    %1034 = vmatpush.msra.mxu0 0.0
    %1035 = vmatpush.msra.mxu0 0.0
    %1036 = vmatpush.msra.mxu0 0.0
    %1037 = vmatpush.msra.mxu0 0.0
    %1038 = vmatpush.msra.mxu0 0.0
    %1039 = vmatpush.msra.mxu0 0.0
    %1040 = vmatpush.msra.mxu0 0.0
    %1041 = vmatpush.msra.mxu0 %v264
    %1042 = vmatpush.msra.mxu0 %v263
    %1043 = vmatpush.msra.mxu0 %v262
    %1044 = vmatpush.msra.mxu0 %v261
    %1045 = vmatmul.f32.gmra.mxu0 %v1024
    %v1046 = vpop.f32.mrf.mxu0
    %v1047 = vadd.f32 %v1021, %v1046
    %1048 = vmatmul.f32.gmra.mxu0 %v1027
    %v1049 = vpop.f32.mrf.mxu0
    %v1050 = vadd.f32 %v1021, %v1049
    %1051 = vdwg.mxu0
    %1054 = vrot.lane.b32.xlu0 %v1015, 120
    %v1055 = vpop.permute.xlu0 %1054
    %1056 = vrot.lane.b32.xlu0 %v1018, 120
    %v1057 = vpop.permute.xlu0 %1056
    %1058 = vrot.lane.b32.xlu0 %v1015, 112
    %v1059 = vpop.permute.xlu0 %1058
    %1060 = vrot.lane.b32.xlu0 %v1018, 112
    %v1061 = vpop.permute.xlu0 %1060
    %1062 = vrot.lane.b32.xlu0 %v1015, 104
    %v1063 = vpop.permute.xlu0 %1062
    %1064 = vrot.lane.b32.xlu0 %v1018, 104
    %v1065 = vpop.permute.xlu0 %1064
    %1068 = vrot.lane.b32.xlu0 %v1047, 120
    %v1069 = vpop.permute.xlu0 %1068
    %1070 = vrot.lane.b32.xlu0 %v1050, 120
    %v1071 = vpop.permute.xlu0 %1070
    %1072 = vrot.lane.b32.xlu0 %v1047, 112
    %v1073 = vpop.permute.xlu0 %1072
    %1074 = vrot.lane.b32.xlu0 %v1050, 112
    %v1075 = vpop.permute.xlu0 %1074
    %1076 = vrot.lane.b32.xlu0 %v1047, 104
    %v1077 = vpop.permute.xlu0 %1076
    %1078 = vrot.lane.b32.xlu0 %v1050, 104
    %v1079 = vpop.permute.xlu0 %1078
    %v1080 = vsel %vm348, %v1015, 0
    %v1082 = vsel %vm348, %v1047, 0
    %1084 = vmatpush.xpose.msra.mxu0 0.0
    %1085 = vmatpush.xpose.msra.mxu0 0.0
    %1086 = vmatpush.xpose.msra.mxu0 0.0
    %1087 = vmatpush.xpose.msra.mxu0 0.0
    %1088 = vmatpush.xpose.msra.mxu0 0.0
    %1089 = vmatpush.xpose.msra.mxu0 0.0
    %1090 = vmatpush.xpose.msra.mxu0 0.0
    %1091 = vmatpush.xpose.msra.mxu0 0.0
    %1092 = vmatpush.xpose.msra.mxu0 0.0
    %1093 = vmatpush.xpose.msra.mxu0 0.0
    %1094 = vmatpush.xpose.msra.mxu0 0.0
    %1095 = vmatpush.xpose.msra.mxu0 0.0
    %1096 = vmatpush.xpose.msra.mxu0 0.0
    %1097 = vmatpush.xpose.msra.mxu0 0.0
    %1098 = vmatpush.xpose.msra.mxu0 0.0
    %1099 = vmatpush.xpose.msra.mxu0 %v1082
    %1100 = vmatmul.f32.gmra.mxu0 %v1080
    %v1101 = vpop.f32.mrf.mxu0
    %v1102 = vadd.f32 0.0, %v1101
    %1103 = vdwg.mxu0
    %v1104 = vsel %vm348, %v1018, 0
    %v1106 = vsel %vm348, %v1050, 0
    %1108 = vmatpush.xpose.msra.mxu0 0.0
    %1109 = vmatpush.xpose.msra.mxu0 0.0
    %1110 = vmatpush.xpose.msra.mxu0 0.0
    %1111 = vmatpush.xpose.msra.mxu0 0.0
    %1112 = vmatpush.xpose.msra.mxu0 0.0
    %1113 = vmatpush.xpose.msra.mxu0 0.0
    %1114 = vmatpush.xpose.msra.mxu0 0.0
    %1115 = vmatpush.xpose.msra.mxu0 0.0
    %1116 = vmatpush.xpose.msra.mxu0 0.0
    %1117 = vmatpush.xpose.msra.mxu0 0.0
    %1118 = vmatpush.xpose.msra.mxu0 0.0
    %1119 = vmatpush.xpose.msra.mxu0 0.0
    %1120 = vmatpush.xpose.msra.mxu0 0.0
    %1121 = vmatpush.xpose.msra.mxu0 0.0
    %1122 = vmatpush.xpose.msra.mxu0 0.0
    %1123 = vmatpush.xpose.msra.mxu0 %v1106
    %1124 = vmatmul.f32.gmra.mxu0 %v1104
    %v1125 = vpop.f32.mrf.mxu0
    %v1126 = vadd.f32 0.0, %v1125
    %1127 = vdwg.mxu0
    %v1128 = vsel %vm348, %v1055, 0
    %v1130 = vsel %vm348, %v1069, 0
    %1132 = vmatpush.xpose.msra.mxu0 0.0
    %1133 = vmatpush.xpose.msra.mxu0 0.0
    %1134 = vmatpush.xpose.msra.mxu0 0.0
    %1135 = vmatpush.xpose.msra.mxu0 0.0
    %1136 = vmatpush.xpose.msra.mxu0 0.0
    %1137 = vmatpush.xpose.msra.mxu0 0.0
    %1138 = vmatpush.xpose.msra.mxu0 0.0
    %1139 = vmatpush.xpose.msra.mxu0 0.0
    %1140 = vmatpush.xpose.msra.mxu0 0.0
    %1141 = vmatpush.xpose.msra.mxu0 0.0
    %1142 = vmatpush.xpose.msra.mxu0 0.0
    %1143 = vmatpush.xpose.msra.mxu0 0.0
    %1144 = vmatpush.xpose.msra.mxu0 0.0
    %1145 = vmatpush.xpose.msra.mxu0 0.0
    %1146 = vmatpush.xpose.msra.mxu0 0.0
    %1147 = vmatpush.xpose.msra.mxu0 %v1130
    %1148 = vmatmul.f32.gmra.mxu0 %v1128
    %v1149 = vpop.f32.mrf.mxu0
    %v1150 = vadd.f32 0.0, %v1149
    %1151 = vdwg.mxu0
    %v1152 = vsel %vm348, %v1057, 0
    %v1154 = vsel %vm348, %v1071, 0
    %1156 = vmatpush.xpose.msra.mxu0 0.0
    %1157 = vmatpush.xpose.msra.mxu0 0.0
    %1158 = vmatpush.xpose.msra.mxu0 0.0
    %1159 = vmatpush.xpose.msra.mxu0 0.0
    %1160 = vmatpush.xpose.msra.mxu0 0.0
    %1161 = vmatpush.xpose.msra.mxu0 0.0
    %1162 = vmatpush.xpose.msra.mxu0 0.0
    %1163 = vmatpush.xpose.msra.mxu0 0.0
    %1164 = vmatpush.xpose.msra.mxu0 0.0
    %1165 = vmatpush.xpose.msra.mxu0 0.0
    %1166 = vmatpush.xpose.msra.mxu0 0.0
    %1167 = vmatpush.xpose.msra.mxu0 0.0
    %1168 = vmatpush.xpose.msra.mxu0 0.0
    %1169 = vmatpush.xpose.msra.mxu0 0.0
    %1170 = vmatpush.xpose.msra.mxu0 0.0
    %1171 = vmatpush.xpose.msra.mxu0 %v1154
    %1172 = vmatmul.f32.gmra.mxu0 %v1152
    %v1173 = vpop.f32.mrf.mxu0
    %v1174 = vadd.f32 0.0, %v1173
    %1175 = vdwg.mxu0
    %v1176 = vsel %vm348, %v1059, 0
    %v1178 = vsel %vm348, %v1073, 0
    %1180 = vmatpush.xpose.msra.mxu0 0.0
    %1181 = vmatpush.xpose.msra.mxu0 0.0
    %1182 = vmatpush.xpose.msra.mxu0 0.0
    %1183 = vmatpush.xpose.msra.mxu0 0.0
    %1184 = vmatpush.xpose.msra.mxu0 0.0
    %1185 = vmatpush.xpose.msra.mxu0 0.0
    %1186 = vmatpush.xpose.msra.mxu0 0.0
    %1187 = vmatpush.xpose.msra.mxu0 0.0
    %1188 = vmatpush.xpose.msra.mxu0 0.0
    %1189 = vmatpush.xpose.msra.mxu0 0.0
    %1190 = vmatpush.xpose.msra.mxu0 0.0
    %1191 = vmatpush.xpose.msra.mxu0 0.0
    %1192 = vmatpush.xpose.msra.mxu0 0.0
    %1193 = vmatpush.xpose.msra.mxu0 0.0
    %1194 = vmatpush.xpose.msra.mxu0 0.0
    %1195 = vmatpush.xpose.msra.mxu0 %v1178
    %1196 = vmatmul.f32.gmra.mxu0 %v1176
    %v1197 = vpop.f32.mrf.mxu0
    %v1198 = vadd.f32 0.0, %v1197
    %1199 = vdwg.mxu0
    %v1200 = vsel %vm348, %v1061, 0
    %v1202 = vsel %vm348, %v1075, 0
    %1204 = vmatpush.xpose.msra.mxu0 0.0
    %1205 = vmatpush.xpose.msra.mxu0 0.0
    %1206 = vmatpush.xpose.msra.mxu0 0.0
    %1207 = vmatpush.xpose.msra.mxu0 0.0
    %1208 = vmatpush.xpose.msra.mxu0 0.0
    %1209 = vmatpush.xpose.msra.mxu0 0.0
    %1210 = vmatpush.xpose.msra.mxu0 0.0
    %1211 = vmatpush.xpose.msra.mxu0 0.0
    %1212 = vmatpush.xpose.msra.mxu0 0.0
    %1213 = vmatpush.xpose.msra.mxu0 0.0
    %1214 = vmatpush.xpose.msra.mxu0 0.0
    %1215 = vmatpush.xpose.msra.mxu0 0.0
    %1216 = vmatpush.xpose.msra.mxu0 0.0
    %1217 = vmatpush.xpose.msra.mxu0 0.0
    %1218 = vmatpush.xpose.msra.mxu0 0.0
    %1219 = vmatpush.xpose.msra.mxu0 %v1202
    %1220 = vmatmul.f32.gmra.mxu0 %v1200
    %v1221 = vpop.f32.mrf.mxu0
    %v1222 = vadd.f32 0.0, %v1221
    %1223 = vdwg.mxu0
    %v1224 = vsel %vm348, %v1063, 0
    %v1226 = vsel %vm348, %v1077, 0
    %1228 = vmatpush.xpose.msra.mxu0 0.0
    %1229 = vmatpush.xpose.msra.mxu0 0.0
    %1230 = vmatpush.xpose.msra.mxu0 0.0
    %1231 = vmatpush.xpose.msra.mxu0 0.0
    %1232 = vmatpush.xpose.msra.mxu0 0.0
    %1233 = vmatpush.xpose.msra.mxu0 0.0
    %1234 = vmatpush.xpose.msra.mxu0 0.0
    %1235 = vmatpush.xpose.msra.mxu0 0.0
    %1236 = vmatpush.xpose.msra.mxu0 0.0
    %1237 = vmatpush.xpose.msra.mxu0 0.0
    %1238 = vmatpush.xpose.msra.mxu0 0.0
    %1239 = vmatpush.xpose.msra.mxu0 0.0
    %1240 = vmatpush.xpose.msra.mxu0 0.0
    %1241 = vmatpush.xpose.msra.mxu0 0.0
    %1242 = vmatpush.xpose.msra.mxu0 0.0
    %1243 = vmatpush.xpose.msra.mxu0 %v1226
    %1244 = vmatmul.f32.gmra.mxu0 %v1224
    %v1245 = vpop.f32.mrf.mxu0
    %v1246 = vadd.f32 0.0, %v1245
    %1247 = vdwg.mxu0
    %v1248 = vsel %vm348, %v1065, 0
    %v1250 = vsel %vm348, %v1079, 0
    %1252 = vmatpush.xpose.msra.mxu0 0.0
    %1253 = vmatpush.xpose.msra.mxu0 0.0
    %1254 = vmatpush.xpose.msra.mxu0 0.0
    %1255 = vmatpush.xpose.msra.mxu0 0.0
    %1256 = vmatpush.xpose.msra.mxu0 0.0
    %1257 = vmatpush.xpose.msra.mxu0 0.0
    %1258 = vmatpush.xpose.msra.mxu0 0.0
    %1259 = vmatpush.xpose.msra.mxu0 0.0
    %1260 = vmatpush.xpose.msra.mxu0 0.0
    %1261 = vmatpush.xpose.msra.mxu0 0.0
    %1262 = vmatpush.xpose.msra.mxu0 0.0
    %1263 = vmatpush.xpose.msra.mxu0 0.0
    %1264 = vmatpush.xpose.msra.mxu0 0.0
    %1265 = vmatpush.xpose.msra.mxu0 0.0
    %1266 = vmatpush.xpose.msra.mxu0 0.0
    %1267 = vmatpush.xpose.msra.mxu0 %v1250
    %1268 = vmatmul.f32.gmra.mxu0 %v1248
    %v1269 = vpop.f32.mrf.mxu0
    %v1270 = vadd.f32 0.0, %v1269
    %1271 = vdwg.mxu0
    %v1272 = vsel %vm348, %v1102, -inf
    %1273 = vmax.xlane.f32.xlu0 %v1272
    %v1274 = vpop.xlane.xlu0 %1273
    %v1275 = vsel %vm348, %v1126, -inf
    %1276 = vmax.xlane.f32.xlu0 %v1275
    %v1277 = vpop.xlane.xlu0 %1276
    %v1278 = vsel %vm348, %v1150, -inf
    %1279 = vmax.xlane.f32.xlu0 %v1278
    %v1280 = vpop.xlane.xlu0 %1279
    %v1281 = vsel %vm348, %v1174, -inf
    %1282 = vmax.xlane.f32.xlu0 %v1281
    %v1283 = vpop.xlane.xlu0 %1282
    %v1284 = vsel %vm348, %v1198, -inf
    %1285 = vmax.xlane.f32.xlu0 %v1284
    %v1286 = vpop.xlane.xlu0 %1285
    %v1287 = vsel %vm348, %v1222, -inf
    %1288 = vmax.xlane.f32.xlu0 %v1287
    %v1289 = vpop.xlane.xlu0 %1288
    %v1290 = vsel %vm348, %v1246, -inf
    %1291 = vmax.xlane.f32.xlu0 %v1290
    %v1292 = vpop.xlane.xlu0 %1291
    %v1293 = vsel %vm348, %v1270, -inf
    %1294 = vmax.xlane.f32.xlu0 %v1293
    %v1295 = vpop.xlane.xlu0 %1294
    %v1296 = vsub.f32 %v1102, %v1274
    %v1297 = vsub.f32 %v1126, %v1277
    %v1298 = vsub.f32 %v1150, %v1280
    %v1299 = vsub.f32 %v1174, %v1283
    %v1300 = vsub.f32 %v1198, %v1286
    %v1301 = vsub.f32 %v1222, %v1289
    %v1302 = vsub.f32 %v1246, %v1292
    %v1303 = vsub.f32 %v1270, %v1295
    %v1304 = vmul.f32 %v1296, 1.442695
    %v1305 = vpow.pop %v1304
    %v1306 = vmul.f32 %v1297, 1.442695
    %v1307 = vpow.pop %v1306
    %v1308 = vmul.f32 %v1298, 1.442695
    %v1309 = vpow.pop %v1308
    %v1310 = vmul.f32 %v1299, 1.442695
    %v1311 = vpow.pop %v1310
    %v1312 = vmul.f32 %v1300, 1.442695
    %v1313 = vpow.pop %v1312
    %v1314 = vmul.f32 %v1301, 1.442695
    %v1315 = vpow.pop %v1314
    %v1316 = vmul.f32 %v1302, 1.442695
    %v1317 = vpow.pop %v1316
    %v1318 = vmul.f32 %v1303, 1.442695
    %v1319 = vpow.pop %v1318
    %v1320 = vsel %vm348, %v1305, 0.0
    %1321 = vadd.xlane.f32.xlu0 %v1320
    %v1322 = vpop.xlane.xlu0 %1321
    %v1323 = vsel %vm348, %v1307, 0.0
    %1324 = vadd.xlane.f32.xlu0 %v1323
    %v1325 = vpop.xlane.xlu0 %1324
    %v1326 = vsel %vm348, %v1309, 0.0
    %1327 = vadd.xlane.f32.xlu0 %v1326
    %v1328 = vpop.xlane.xlu0 %1327
    %v1329 = vsel %vm348, %v1311, 0.0
    %1330 = vadd.xlane.f32.xlu0 %v1329
    %v1331 = vpop.xlane.xlu0 %1330
    %v1332 = vsel %vm348, %v1313, 0.0
    %1333 = vadd.xlane.f32.xlu0 %v1332
    %v1334 = vpop.xlane.xlu0 %1333
    %v1335 = vsel %vm348, %v1315, 0.0
    %1336 = vadd.xlane.f32.xlu0 %v1335
    %v1337 = vpop.xlane.xlu0 %1336
    %v1338 = vsel %vm348, %v1317, 0.0
    %1339 = vadd.xlane.f32.xlu0 %v1338
    %v1340 = vpop.xlane.xlu0 %1339
    %v1341 = vsel %vm348, %v1319, 0.0
    %1342 = vadd.xlane.f32.xlu0 %v1341
    %v1343 = vpop.xlane.xlu0 %1342
    %v1344 = vrcp.pop %v1322
    %v1345 = vrcp.pop %v1325
    %v1346 = vrcp.pop %v1328
    %v1347 = vrcp.pop %v1331
    %v1348 = vrcp.pop %v1334
    %v1349 = vrcp.pop %v1337
    %v1350 = vrcp.pop %v1340
    %v1351 = vrcp.pop %v1343
    %v1352 = vmul.f32 %v1305, %v1344
    %v1353 = vmul.f32 %v1307, %v1345
    %v1354 = vmul.f32 %v1309, %v1346
    %v1355 = vmul.f32 %v1311, %v1347
    %v1356 = vmul.f32 %v1313, %v1348
    %v1357 = vmul.f32 %v1315, %v1349
    %v1358 = vmul.f32 %v1317, %v1350
    %v1359 = vmul.f32 %v1319, %v1351
    %1360 = vrot.lane.b32.xlu0 %v1047, 96
    %v1361 = vpop.permute.xlu0 %1360
    %v1364 = vsel %vm348, %v1352, 0
    %1366 = vmatpush.msra.mxu0 0.0
    %1367 = vmatpush.msra.mxu0 0.0
    %1368 = vmatpush.msra.mxu0 0.0
    %1369 = vmatpush.msra.mxu0 0.0
    %1370 = vmatpush.msra.mxu0 0.0
    %1371 = vmatpush.msra.mxu0 0.0
    %1372 = vmatpush.msra.mxu0 0.0
    %1373 = vmatpush.msra.mxu0 0.0
    %1374 = vmatpush.msra.mxu0 0.0
    %1375 = vmatpush.msra.mxu0 0.0
    %1376 = vmatpush.msra.mxu0 0.0
    %1377 = vmatpush.msra.mxu0 0.0
    %1378 = vmatpush.msra.mxu0 0.0
    %1379 = vmatpush.msra.mxu0 0.0
    %1380 = vmatpush.msra.mxu0 0.0
    %1381 = vmatpush.msra.mxu0 %v1361
    %1382 = vmatmul.f32.gmra.mxu0 %v1364
    %v1383 = vpop.f32.mrf.mxu0
    %v1384 = vadd.f32 0.0, %v1383
    %1385 = vdwg.mxu0
    %1386 = vrot.lane.b32.xlu0 %v1050, 96
    %v1387 = vpop.permute.xlu0 %1386
    %v1390 = vsel %vm348, %v1353, 0
    %1392 = vmatpush.msra.mxu0 0.0
    %1393 = vmatpush.msra.mxu0 0.0
    %1394 = vmatpush.msra.mxu0 0.0
    %1395 = vmatpush.msra.mxu0 0.0
    %1396 = vmatpush.msra.mxu0 0.0
    %1397 = vmatpush.msra.mxu0 0.0
    %1398 = vmatpush.msra.mxu0 0.0
    %1399 = vmatpush.msra.mxu0 0.0
    %1400 = vmatpush.msra.mxu0 0.0
    %1401 = vmatpush.msra.mxu0 0.0
    %1402 = vmatpush.msra.mxu0 0.0
    %1403 = vmatpush.msra.mxu0 0.0
    %1404 = vmatpush.msra.mxu0 0.0
    %1405 = vmatpush.msra.mxu0 0.0
    %1406 = vmatpush.msra.mxu0 0.0
    %1407 = vmatpush.msra.mxu0 %v1387
    %1408 = vmatmul.f32.gmra.mxu0 %v1390
    %v1409 = vpop.f32.mrf.mxu0
    %v1410 = vadd.f32 0.0, %v1409
    %1411 = vdwg.mxu0
    %1412 = vrot.lane.b32.xlu0 %v1069, 96
    %v1413 = vpop.permute.xlu0 %1412
    %v1416 = vsel %vm348, %v1354, 0
    %1418 = vmatpush.msra.mxu0 0.0
    %1419 = vmatpush.msra.mxu0 0.0
    %1420 = vmatpush.msra.mxu0 0.0
    %1421 = vmatpush.msra.mxu0 0.0
    %1422 = vmatpush.msra.mxu0 0.0
    %1423 = vmatpush.msra.mxu0 0.0
    %1424 = vmatpush.msra.mxu0 0.0
    %1425 = vmatpush.msra.mxu0 0.0
    %1426 = vmatpush.msra.mxu0 0.0
    %1427 = vmatpush.msra.mxu0 0.0
    %1428 = vmatpush.msra.mxu0 0.0
    %1429 = vmatpush.msra.mxu0 0.0
    %1430 = vmatpush.msra.mxu0 0.0
    %1431 = vmatpush.msra.mxu0 0.0
    %1432 = vmatpush.msra.mxu0 0.0
    %1433 = vmatpush.msra.mxu0 %v1413
    %1434 = vmatmul.f32.gmra.mxu0 %v1416
    %v1435 = vpop.f32.mrf.mxu0
    %v1436 = vadd.f32 0.0, %v1435
    %1437 = vdwg.mxu0
    %1438 = vrot.lane.b32.xlu0 %v1071, 96
    %v1439 = vpop.permute.xlu0 %1438
    %v1442 = vsel %vm348, %v1355, 0
    %1444 = vmatpush.msra.mxu0 0.0
    %1445 = vmatpush.msra.mxu0 0.0
    %1446 = vmatpush.msra.mxu0 0.0
    %1447 = vmatpush.msra.mxu0 0.0
    %1448 = vmatpush.msra.mxu0 0.0
    %1449 = vmatpush.msra.mxu0 0.0
    %1450 = vmatpush.msra.mxu0 0.0
    %1451 = vmatpush.msra.mxu0 0.0
    %1452 = vmatpush.msra.mxu0 0.0
    %1453 = vmatpush.msra.mxu0 0.0
    %1454 = vmatpush.msra.mxu0 0.0
    %1455 = vmatpush.msra.mxu0 0.0
    %1456 = vmatpush.msra.mxu0 0.0
    %1457 = vmatpush.msra.mxu0 0.0
    %1458 = vmatpush.msra.mxu0 0.0
    %1459 = vmatpush.msra.mxu0 %v1439
    %1460 = vmatmul.f32.gmra.mxu0 %v1442
    %v1461 = vpop.f32.mrf.mxu0
    %v1462 = vadd.f32 0.0, %v1461
    %1463 = vdwg.mxu0
    %1464 = vrot.lane.b32.xlu0 %v1073, 96
    %v1465 = vpop.permute.xlu0 %1464
    %v1468 = vsel %vm348, %v1356, 0
    %1470 = vmatpush.msra.mxu0 0.0
    %1471 = vmatpush.msra.mxu0 0.0
    %1472 = vmatpush.msra.mxu0 0.0
    %1473 = vmatpush.msra.mxu0 0.0
    %1474 = vmatpush.msra.mxu0 0.0
    %1475 = vmatpush.msra.mxu0 0.0
    %1476 = vmatpush.msra.mxu0 0.0
    %1477 = vmatpush.msra.mxu0 0.0
    %1478 = vmatpush.msra.mxu0 0.0
    %1479 = vmatpush.msra.mxu0 0.0
    %1480 = vmatpush.msra.mxu0 0.0
    %1481 = vmatpush.msra.mxu0 0.0
    %1482 = vmatpush.msra.mxu0 0.0
    %1483 = vmatpush.msra.mxu0 0.0
    %1484 = vmatpush.msra.mxu0 0.0
    %1485 = vmatpush.msra.mxu0 %v1465
    %1486 = vmatmul.f32.gmra.mxu0 %v1468
    %v1487 = vpop.f32.mrf.mxu0
    %v1488 = vadd.f32 0.0, %v1487
    %1489 = vdwg.mxu0
    %1490 = vrot.lane.b32.xlu0 %v1075, 96
    %v1491 = vpop.permute.xlu0 %1490
    %v1494 = vsel %vm348, %v1357, 0
    %1496 = vmatpush.msra.mxu0 0.0
    %1497 = vmatpush.msra.mxu0 0.0
    %1498 = vmatpush.msra.mxu0 0.0
    %1499 = vmatpush.msra.mxu0 0.0
    %1500 = vmatpush.msra.mxu0 0.0
    %1501 = vmatpush.msra.mxu0 0.0
    %1502 = vmatpush.msra.mxu0 0.0
    %1503 = vmatpush.msra.mxu0 0.0
    %1504 = vmatpush.msra.mxu0 0.0
    %1505 = vmatpush.msra.mxu0 0.0
    %1506 = vmatpush.msra.mxu0 0.0
    %1507 = vmatpush.msra.mxu0 0.0
    %1508 = vmatpush.msra.mxu0 0.0
    %1509 = vmatpush.msra.mxu0 0.0
    %1510 = vmatpush.msra.mxu0 0.0
    %1511 = vmatpush.msra.mxu0 %v1491
    %1512 = vmatmul.f32.gmra.mxu0 %v1494
    %v1513 = vpop.f32.mrf.mxu0
    %v1514 = vadd.f32 0.0, %v1513
    %1515 = vdwg.mxu0
    %1516 = vrot.lane.b32.xlu0 %v1077, 96
    %v1517 = vpop.permute.xlu0 %1516
    %v1520 = vsel %vm348, %v1358, 0
    %1522 = vmatpush.msra.mxu0 0.0
    %1523 = vmatpush.msra.mxu0 0.0
    %1524 = vmatpush.msra.mxu0 0.0
    %1525 = vmatpush.msra.mxu0 0.0
    %1526 = vmatpush.msra.mxu0 0.0
    %1527 = vmatpush.msra.mxu0 0.0
    %1528 = vmatpush.msra.mxu0 0.0
    %1529 = vmatpush.msra.mxu0 0.0
    %1530 = vmatpush.msra.mxu0 0.0
    %1531 = vmatpush.msra.mxu0 0.0
    %1532 = vmatpush.msra.mxu0 0.0
    %1533 = vmatpush.msra.mxu0 0.0
    %1534 = vmatpush.msra.mxu0 0.0
    %1535 = vmatpush.msra.mxu0 0.0
    %1536 = vmatpush.msra.mxu0 0.0
    %1537 = vmatpush.msra.mxu0 %v1517
    %1538 = vmatmul.f32.gmra.mxu0 %v1520
    %v1539 = vpop.f32.mrf.mxu0
    %v1540 = vadd.f32 0.0, %v1539
    %1541 = vdwg.mxu0
    %1542 = vrot.lane.b32.xlu0 %v1079, 96
    %v1543 = vpop.permute.xlu0 %1542
    %v1546 = vsel %vm348, %v1359, 0
    %1548 = vmatpush.msra.mxu0 0.0
    %1549 = vmatpush.msra.mxu0 0.0
    %1550 = vmatpush.msra.mxu0 0.0
    %1551 = vmatpush.msra.mxu0 0.0
    %1552 = vmatpush.msra.mxu0 0.0
    %1553 = vmatpush.msra.mxu0 0.0
    %1554 = vmatpush.msra.mxu0 0.0
    %1555 = vmatpush.msra.mxu0 0.0
    %1556 = vmatpush.msra.mxu0 0.0
    %1557 = vmatpush.msra.mxu0 0.0
    %1558 = vmatpush.msra.mxu0 0.0
    %1559 = vmatpush.msra.mxu0 0.0
    %1560 = vmatpush.msra.mxu0 0.0
    %1561 = vmatpush.msra.mxu0 0.0
    %1562 = vmatpush.msra.mxu0 0.0
    %1563 = vmatpush.msra.mxu0 %v1543
    %1564 = vmatmul.f32.gmra.mxu0 %v1546
    %v1565 = vpop.f32.mrf.mxu0
    %v1566 = vadd.f32 0.0, %v1565
    %1567 = vdwg.mxu0
    %1570 = vrot.lane.b32.xlu0 %v1436, 8
    %v1571 = vpop.permute.xlu0 %1570
    %1572 = vrot.lane.b32.xlu0 %v1462, 8
    %v1573 = vpop.permute.xlu0 %1572
    %1578 = vrot.lane.b32.xlu0 %v1488, 16
    %v1579 = vpop.permute.xlu0 %1578
    %1580 = vrot.lane.b32.xlu0 %v1514, 16
    %v1581 = vpop.permute.xlu0 %1580
    %1586 = vrot.lane.b32.xlu0 %v1540, 24
    %v1587 = vpop.permute.xlu0 %1586
    %1588 = vrot.lane.b32.xlu0 %v1566, 24
    %v1589 = vpop.permute.xlu0 %1588
    %v1592 = vsel %vm348, %v1384, %v1571
    %v1593 = vsel %vm348, %v1410, %v1573
    %v1594 = vsel %vm887, %v1592, %v1579
    %v1595 = vsel %vm887, %v1593, %v1581
    %v1596 = vsel %vm890, %v1594, %v1587
    %v1597 = vsel %vm890, %v1595, %v1589
    %v1599 = vperm.slane %v270, 0
    %v1602 = vsel %vm302, %v1596, 0
    %v1605 = vsel %vm302, %v1597, 0
    %1607 = vmatpush.msra.mxu0 0.0
    %1608 = vmatpush.msra.mxu0 0.0
    %1609 = vmatpush.msra.mxu0 0.0
    %1610 = vmatpush.msra.mxu0 0.0
    %1611 = vmatpush.msra.mxu0 0.0
    %1612 = vmatpush.msra.mxu0 0.0
    %1613 = vmatpush.msra.mxu0 0.0
    %1614 = vmatpush.msra.mxu0 0.0
    %1615 = vmatpush.msra.mxu0 0.0
    %1616 = vmatpush.msra.mxu0 0.0
    %1617 = vmatpush.msra.mxu0 0.0
    %1618 = vmatpush.msra.mxu0 0.0
    %1619 = vmatpush.msra.mxu0 %v269
    %1620 = vmatpush.msra.mxu0 %v268
    %1621 = vmatpush.msra.mxu0 %v267
    %1622 = vmatpush.msra.mxu0 %v266
    %1623 = vmatmul.f32.gmra.mxu0 %v1602
    %v1624 = vpop.f32.mrf.mxu0
    %v1625 = vadd.f32 %v1599, %v1624
    %1626 = vmatmul.f32.gmra.mxu0 %v1605
    %v1627 = vpop.f32.mrf.mxu0
    %v1628 = vadd.f32 %v1599, %v1627
    %1629 = vdwg.mxu0
    %v1630 = vadd.f32 %v986, %v1625
    %v1631 = vadd.f32 %v987, %v1628
    %v1632 = vsel %vm302, %v1630, 0.0
    %1633 = vadd.xlane.f32.xlu0 %v1632
    %v1634 = vpop.xlane.xlu0 %1633
    %v1635 = vsel %vm302, %v1631, 0.0
    %1636 = vadd.xlane.f32.xlu0 %v1635
    %v1637 = vpop.xlane.xlu0 %1636
    %v1638 = vmul.f32 %v1634, %v939
    %v1639 = vmul.f32 %v1637, %v939
    %v1640 = vsub.f32 %v1630, %v1638
    %v1641 = vsub.f32 %v1631, %v1639
    %v1642 = vmul.f32 %v1640, %v1640
    %v1643 = vmul.f32 %v1641, %v1641
    %v1644 = vsel %vm302, %v1642, 0.0
    %1645 = vadd.xlane.f32.xlu0 %v1644
    %v1646 = vpop.xlane.xlu0 %1645
    %v1647 = vsel %vm302, %v1643, 0.0
    %1648 = vadd.xlane.f32.xlu0 %v1647
    %v1649 = vpop.xlane.xlu0 %1648
    %v1650 = vmul.f32 %v1646, %v939
    %v1651 = vmul.f32 %v1649, %v939
    %v1652 = vadd.f32 %v1650, 1e-05
    %v1653 = vadd.f32 %v1651, 1e-05
    %v1654 = vrsqrt.pop %v1652
    %v1655 = vmul.f32 %v1654, %v1652
    %v1656 = vmul.f32 %v1655, %v1654
    %v1657 = vmul.f32 0.5, %v1656
    %v1658 = vsub.f32 1.5, %v1657
    %v1659 = vmul.f32 %v1654, %v1658
    %vm1660 = vweird.f32 %v1652
    %vm1661 = vweird.f32 %v1654
    %vm1662 = vmor %vm1660, %vm1661
    %v1663 = vsel %vm1662, %v1654, %v1659
    %v1664 = vrsqrt.pop %v1653
    %v1665 = vmul.f32 %v1664, %v1653
    %v1666 = vmul.f32 %v1665, %v1664
    %v1667 = vmul.f32 0.5, %v1666
    %v1668 = vsub.f32 1.5, %v1667
    %v1669 = vmul.f32 %v1664, %v1668
    %vm1670 = vweird.f32 %v1653
    %vm1671 = vweird.f32 %v1664
    %vm1672 = vmor %vm1670, %vm1671
    %v1673 = vsel %vm1672, %v1664, %v1669
    %v1674 = vmul.f32 %v1640, %v1663
    %v1675 = vmul.f32 %v1641, %v1673
    %v1677 = vperm.slane %v295, 0
    %v1679 = vmul.f32 %v1674, %v1677
    %v1680 = vmul.f32 %v1675, %v1677
    %v1682 = vperm.slane %v296, 0
    %v1684 = vadd.f32 %v1679, %v1682
    %v1685 = vadd.f32 %v1680, %v1682
    %v1687 = vperm.slane %v275, 0
    %v1690 = vsel %vm302, %v1684, 0
    %v1693 = vsel %vm302, %v1685, 0
    %1695 = vmatpush.msra.mxu0 0.0
    %1696 = vmatpush.msra.mxu0 0.0
    %1697 = vmatpush.msra.mxu0 0.0
    %1698 = vmatpush.msra.mxu0 0.0
    %1699 = vmatpush.msra.mxu0 0.0
    %1700 = vmatpush.msra.mxu0 0.0
    %1701 = vmatpush.msra.mxu0 0.0
    %1702 = vmatpush.msra.mxu0 0.0
    %1703 = vmatpush.msra.mxu0 0.0
    %1704 = vmatpush.msra.mxu0 0.0
    %1705 = vmatpush.msra.mxu0 0.0
    %1706 = vmatpush.msra.mxu0 0.0
    %1707 = vmatpush.msra.mxu0 %v274
    %1708 = vmatpush.msra.mxu0 %v273
    %1709 = vmatpush.msra.mxu0 %v272
    %1710 = vmatpush.msra.mxu0 %v271
    %1711 = vmatmul.f32.gmra.mxu0 %v1690
    %v1712 = vpop.f32.mrf.mxu0
    %v1713 = vadd.f32 %v1687, %v1712
    %1714 = vmatmul.f32.gmra.mxu0 %v1693
    %v1715 = vpop.f32.mrf.mxu0
    %v1716 = vadd.f32 %v1687, %v1715
    %1717 = vdwg.mxu0
    %v1718 = vmax.f32 %v1713, 0.0
    %v1719 = vmax.f32 %v1716, 0.0
    %v1721 = vperm.slane %v292, 0
    %1723 = vmatpush.msra.mxu0 %v291
    %1724 = vmatpush.msra.mxu0 %v290
    %1725 = vmatpush.msra.mxu0 %v289
    %1726 = vmatpush.msra.mxu0 %v288
    %1727 = vmatpush.msra.mxu0 %v287
    %1728 = vmatpush.msra.mxu0 %v286
    %1729 = vmatpush.msra.mxu0 %v285
    %1730 = vmatpush.msra.mxu0 %v284
    %1731 = vmatpush.msra.mxu0 %v283
    %1732 = vmatpush.msra.mxu0 %v282
    %1733 = vmatpush.msra.mxu0 %v281
    %1734 = vmatpush.msra.mxu0 %v280
    %1735 = vmatpush.msra.mxu0 %v279
    %1736 = vmatpush.msra.mxu0 %v278
    %1737 = vmatpush.msra.mxu0 %v277
    %1738 = vmatpush.msra.mxu0 %v276
    %1739 = vmatmul.f32.gmra.mxu0 %v1718
    %v1740 = vpop.f32.mrf.mxu0
    %v1741 = vadd.f32 %v1721, %v1740
    %1742 = vmatmul.f32.gmra.mxu0 %v1719
    %v1743 = vpop.f32.mrf.mxu0
    %v1744 = vadd.f32 %v1721, %v1743
    %1745 = vdwg.mxu0
    %v1746 = vadd.f32 %v1684, %v1741
    %v1747 = vadd.f32 %v1685, %v1744
    %v1748 = vsel %vm302, %v1746, 0.0
    %1749 = vadd.xlane.f32.xlu0 %v1748
    %v1750 = vpop.xlane.xlu0 %1749
    %v1751 = vsel %vm302, %v1747, 0.0
    %1752 = vadd.xlane.f32.xlu0 %v1751
    %v1753 = vpop.xlane.xlu0 %1752
    %v1754 = vmul.f32 %v1750, %v939
    %v1755 = vmul.f32 %v1753, %v939
    %v1756 = vsub.f32 %v1746, %v1754
    %v1757 = vsub.f32 %v1747, %v1755
    %v1758 = vmul.f32 %v1756, %v1756
    %v1759 = vmul.f32 %v1757, %v1757
    %v1760 = vsel %vm302, %v1758, 0.0
    %1761 = vadd.xlane.f32.xlu0 %v1760
    %v1762 = vpop.xlane.xlu0 %1761
    %v1763 = vsel %vm302, %v1759, 0.0
    %1764 = vadd.xlane.f32.xlu0 %v1763
    %v1765 = vpop.xlane.xlu0 %1764
    %v1766 = vmul.f32 %v1762, %v939
    %v1767 = vmul.f32 %v1765, %v939
    %v1768 = vadd.f32 %v1766, 1e-05
    %v1769 = vadd.f32 %v1767, 1e-05
    %v1770 = vrsqrt.pop %v1768
    %v1771 = vmul.f32 %v1770, %v1768
    %v1772 = vmul.f32 %v1771, %v1770
    %v1773 = vmul.f32 0.5, %v1772
    %v1774 = vsub.f32 1.5, %v1773
    %v1775 = vmul.f32 %v1770, %v1774
    %vm1776 = vweird.f32 %v1768
    %vm1777 = vweird.f32 %v1770
    %vm1778 = vmor %vm1776, %vm1777
    %v1779 = vsel %vm1778, %v1770, %v1775
    %v1780 = vrsqrt.pop %v1769
    %v1781 = vmul.f32 %v1780, %v1769
    %v1782 = vmul.f32 %v1781, %v1780
    %v1783 = vmul.f32 0.5, %v1782
    %v1784 = vsub.f32 1.5, %v1783
    %v1785 = vmul.f32 %v1780, %v1784
    %vm1786 = vweird.f32 %v1769
    %vm1787 = vweird.f32 %v1780
    %vm1788 = vmor %vm1786, %vm1787
    %v1789 = vsel %vm1788, %v1780, %v1785
    %v1790 = vmul.f32 %v1756, %v1779
    %v1791 = vmul.f32 %v1757, %v1789
    %v1793 = vperm.slane %v297, 0
    %v1795 = vmul.f32 %v1790, %v1793
    %v1796 = vmul.f32 %v1791, %v1793
    %v1798 = vperm.slane %v298, 0
    %v1800 = vadd.f32 %v1795, %v1798
    %v1801 = vadd.f32 %v1796, %v1798
    %v1802 = vld [vmem:[%s45] sm:$0xff]
    %v1803 = vld [vmem:[%s45 + $0x8] sm:$0xff]
    %v1804 = vld [vmem:[%s45 + $0x10] sm:$0xff]
    %v1805 = vld [vmem:[%s45 + $0x18] sm:$0xff]
    %v1806 = vld [vmem:[%s47] sm:$0x1]
    %v1807 = vld [vmem:[%s49] sm:$0xff]
    %v1808 = vld [vmem:[%s49 + $0x8] sm:$0xff]
    %v1809 = vld [vmem:[%s49 + $0x10] sm:$0xff]
    %v1810 = vld [vmem:[%s49 + $0x18] sm:$0xff]
    %v1811 = vld [vmem:[%s51] sm:$0x1]
    %v1812 = vld [vmem:[%s53] sm:$0xff]
    %v1813 = vld [vmem:[%s53 + $0x8] sm:$0xff]
    %v1814 = vld [vmem:[%s53 + $0x10] sm:$0xff]
    %v1815 = vld [vmem:[%s53 + $0x18] sm:$0xff]
    %v1816 = vld [vmem:[%s55] sm:$0x1]
    %v1817 = vld [vmem:[%s57] sm:$0xff]
    %v1818 = vld [vmem:[%s57 + $0x8] sm:$0xff]
    %v1819 = vld [vmem:[%s57 + $0x10] sm:$0xff]
    %v1820 = vld [vmem:[%s57 + $0x18] sm:$0xff]
    %v1821 = vld [vmem:[%s59] sm:$0x1]
    %v1822 = vld [vmem:[%s61] sm:$0xff]
    %v1823 = vld [vmem:[%s61 + $0x8] sm:$0xff]
    %v1824 = vld [vmem:[%s61 + $0x10] sm:$0xff]
    %v1825 = vld [vmem:[%s61 + $0x18] sm:$0xff]
    %v1826 = vld [vmem:[%s63] sm:$0x1]
    %v1827 = vld [vmem:[%s65] sm:$0xff]
    %v1828 = vld [vmem:[%s65 + $0x8] sm:$0xff]
    %v1829 = vld [vmem:[%s65 + $0x10] sm:$0xff]
    %v1830 = vld [vmem:[%s65 + $0x18] sm:$0xff]
    %v1831 = vld [vmem:[%s67] sm:$0x1]
    %v1832 = vld [vmem:[%s69] sm:$0xff]
    %v1833 = vld [vmem:[%s69 + $0x8] sm:$0xff]
    %v1834 = vld [vmem:[%s69 + $0x10] sm:$0xff]
    %v1835 = vld [vmem:[%s69 + $0x18] sm:$0xff]
    %v1836 = vld [vmem:[%s69 + $0x20] sm:$0xff]
    %v1837 = vld [vmem:[%s69 + $0x28] sm:$0xff]
    %v1838 = vld [vmem:[%s69 + $0x30] sm:$0xff]
    %v1839 = vld [vmem:[%s69 + $0x38] sm:$0xff]
    %v1840 = vld [vmem:[%s69 + $0x40] sm:$0xff]
    %v1841 = vld [vmem:[%s69 + $0x48] sm:$0xff]
    %v1842 = vld [vmem:[%s69 + $0x50] sm:$0xff]
    %v1843 = vld [vmem:[%s69 + $0x58] sm:$0xff]
    %v1844 = vld [vmem:[%s69 + $0x60] sm:$0xff]
    %v1845 = vld [vmem:[%s69 + $0x68] sm:$0xff]
    %v1846 = vld [vmem:[%s69 + $0x70] sm:$0xff]
    %v1847 = vld [vmem:[%s69 + $0x78] sm:$0xff]
    %v1848 = vld [vmem:[%s71] sm:$0x1]
    %v1849 = vld [vmem:[%s73] sm:$0x1]
    %v1850 = vld [vmem:[%s75] sm:$0x1]
    %v1851 = vld [vmem:[%s77] sm:$0x1]
    %v1852 = vld [vmem:[#allocation2] sm:$0x1]
    %v1853 = vld [vmem:[#allocation4] sm:$0x1]
    %v1854 = vld [vmem:[#allocation6] sm:$0x1]
    %v1856 = vperm.slane %v1806, 0
    %v1859 = vsel %vm302, %v1800, 0
    %v1862 = vsel %vm302, %v1801, 0
    %1864 = vmatpush.msra.mxu0 0.0
    %1865 = vmatpush.msra.mxu0 0.0
    %1866 = vmatpush.msra.mxu0 0.0
    %1867 = vmatpush.msra.mxu0 0.0
    %1868 = vmatpush.msra.mxu0 0.0
    %1869 = vmatpush.msra.mxu0 0.0
    %1870 = vmatpush.msra.mxu0 0.0
    %1871 = vmatpush.msra.mxu0 0.0
    %1872 = vmatpush.msra.mxu0 0.0
    %1873 = vmatpush.msra.mxu0 0.0
    %1874 = vmatpush.msra.mxu0 0.0
    %1875 = vmatpush.msra.mxu0 0.0
    %1876 = vmatpush.msra.mxu0 %v1805
    %1877 = vmatpush.msra.mxu0 %v1804
    %1878 = vmatpush.msra.mxu0 %v1803
    %1879 = vmatpush.msra.mxu0 %v1802
    %1880 = vmatmul.f32.gmra.mxu0 %v1859
    %v1881 = vpop.f32.mrf.mxu0
    %v1882 = vadd.f32 %v1856, %v1881
    %1883 = vmatmul.f32.gmra.mxu0 %v1862
    %v1884 = vpop.f32.mrf.mxu0
    %v1885 = vadd.f32 %v1856, %v1884
    %1886 = vdwg.mxu0
    %1889 = vrot.lane.b32.xlu0 %v1882, 120
    %v1890 = vpop.permute.xlu0 %1889
    %1891 = vrot.lane.b32.xlu0 %v1885, 120
    %v1892 = vpop.permute.xlu0 %1891
    %1893 = vrot.lane.b32.xlu0 %v1882, 112
    %v1894 = vpop.permute.xlu0 %1893
    %1895 = vrot.lane.b32.xlu0 %v1885, 112
    %v1896 = vpop.permute.xlu0 %1895
    %1897 = vrot.lane.b32.xlu0 %v1882, 104
    %v1898 = vpop.permute.xlu0 %1897
    %1899 = vrot.lane.b32.xlu0 %v1885, 104
    %v1900 = vpop.permute.xlu0 %1899
    %1901 = vrot.lane.b32.xlu0 %v1882, 96
    %v1902 = vpop.permute.xlu0 %1901
    %v1903 = vsel %vm348, %v1882, 0
    %v1905 = vsel %vm348, %v1902, 0
    %1907 = vmatpush.xpose.msra.mxu0 0.0
    %1908 = vmatpush.xpose.msra.mxu0 0.0
    %1909 = vmatpush.xpose.msra.mxu0 0.0
    %1910 = vmatpush.xpose.msra.mxu0 0.0
    %1911 = vmatpush.xpose.msra.mxu0 0.0
    %1912 = vmatpush.xpose.msra.mxu0 0.0
    %1913 = vmatpush.xpose.msra.mxu0 0.0
    %1914 = vmatpush.xpose.msra.mxu0 0.0
    %1915 = vmatpush.xpose.msra.mxu0 0.0
    %1916 = vmatpush.xpose.msra.mxu0 0.0
    %1917 = vmatpush.xpose.msra.mxu0 0.0
    %1918 = vmatpush.xpose.msra.mxu0 0.0
    %1919 = vmatpush.xpose.msra.mxu0 0.0
    %1920 = vmatpush.xpose.msra.mxu0 0.0
    %1921 = vmatpush.xpose.msra.mxu0 0.0
    %1922 = vmatpush.xpose.msra.mxu0 %v1905
    %1923 = vmatmul.f32.gmra.mxu0 %v1903
    %v1924 = vpop.f32.mrf.mxu0
    %v1925 = vadd.f32 0.0, %v1924
    %1926 = vdwg.mxu0
    %1927 = vrot.lane.b32.xlu0 %v1885, 96
    %v1928 = vpop.permute.xlu0 %1927
    %v1929 = vsel %vm348, %v1885, 0
    %v1931 = vsel %vm348, %v1928, 0
    %1933 = vmatpush.xpose.msra.mxu0 0.0
    %1934 = vmatpush.xpose.msra.mxu0 0.0
    %1935 = vmatpush.xpose.msra.mxu0 0.0
    %1936 = vmatpush.xpose.msra.mxu0 0.0
    %1937 = vmatpush.xpose.msra.mxu0 0.0
    %1938 = vmatpush.xpose.msra.mxu0 0.0
    %1939 = vmatpush.xpose.msra.mxu0 0.0
    %1940 = vmatpush.xpose.msra.mxu0 0.0
    %1941 = vmatpush.xpose.msra.mxu0 0.0
    %1942 = vmatpush.xpose.msra.mxu0 0.0
    %1943 = vmatpush.xpose.msra.mxu0 0.0
    %1944 = vmatpush.xpose.msra.mxu0 0.0
    %1945 = vmatpush.xpose.msra.mxu0 0.0
    %1946 = vmatpush.xpose.msra.mxu0 0.0
    %1947 = vmatpush.xpose.msra.mxu0 0.0
    %1948 = vmatpush.xpose.msra.mxu0 %v1931
    %1949 = vmatmul.f32.gmra.mxu0 %v1929
    %v1950 = vpop.f32.mrf.mxu0
    %v1951 = vadd.f32 0.0, %v1950
    %1952 = vdwg.mxu0
    %1953 = vrot.lane.b32.xlu0 %v1890, 96
    %v1954 = vpop.permute.xlu0 %1953
    %v1955 = vsel %vm348, %v1890, 0
    %v1957 = vsel %vm348, %v1954, 0
    %1959 = vmatpush.xpose.msra.mxu0 0.0
    %1960 = vmatpush.xpose.msra.mxu0 0.0
    %1961 = vmatpush.xpose.msra.mxu0 0.0
    %1962 = vmatpush.xpose.msra.mxu0 0.0
    %1963 = vmatpush.xpose.msra.mxu0 0.0
    %1964 = vmatpush.xpose.msra.mxu0 0.0
    %1965 = vmatpush.xpose.msra.mxu0 0.0
    %1966 = vmatpush.xpose.msra.mxu0 0.0
    %1967 = vmatpush.xpose.msra.mxu0 0.0
    %1968 = vmatpush.xpose.msra.mxu0 0.0
    %1969 = vmatpush.xpose.msra.mxu0 0.0
    %1970 = vmatpush.xpose.msra.mxu0 0.0
    %1971 = vmatpush.xpose.msra.mxu0 0.0
    %1972 = vmatpush.xpose.msra.mxu0 0.0
    %1973 = vmatpush.xpose.msra.mxu0 0.0
    %1974 = vmatpush.xpose.msra.mxu0 %v1957
    %1975 = vmatmul.f32.gmra.mxu0 %v1955
    %v1976 = vpop.f32.mrf.mxu0
    %v1977 = vadd.f32 0.0, %v1976
    %1978 = vdwg.mxu0
    %1979 = vrot.lane.b32.xlu0 %v1892, 96
    %v1980 = vpop.permute.xlu0 %1979
    %v1981 = vsel %vm348, %v1892, 0
    %v1983 = vsel %vm348, %v1980, 0
    %1985 = vmatpush.xpose.msra.mxu0 0.0
    %1986 = vmatpush.xpose.msra.mxu0 0.0
    %1987 = vmatpush.xpose.msra.mxu0 0.0
    %1988 = vmatpush.xpose.msra.mxu0 0.0
    %1989 = vmatpush.xpose.msra.mxu0 0.0
    %1990 = vmatpush.xpose.msra.mxu0 0.0
    %1991 = vmatpush.xpose.msra.mxu0 0.0
    %1992 = vmatpush.xpose.msra.mxu0 0.0
    %1993 = vmatpush.xpose.msra.mxu0 0.0
    %1994 = vmatpush.xpose.msra.mxu0 0.0
    %1995 = vmatpush.xpose.msra.mxu0 0.0
    %1996 = vmatpush.xpose.msra.mxu0 0.0
    %1997 = vmatpush.xpose.msra.mxu0 0.0
    %1998 = vmatpush.xpose.msra.mxu0 0.0
    %1999 = vmatpush.xpose.msra.mxu0 0.0
    %2000 = vmatpush.xpose.msra.mxu0 %v1983
    %2001 = vmatmul.f32.gmra.mxu0 %v1981
    %v2002 = vpop.f32.mrf.mxu0
    %v2003 = vadd.f32 0.0, %v2002
    %2004 = vdwg.mxu0
    %2005 = vrot.lane.b32.xlu0 %v1894, 96
    %v2006 = vpop.permute.xlu0 %2005
    %v2007 = vsel %vm348, %v1894, 0
    %v2009 = vsel %vm348, %v2006, 0
    %2011 = vmatpush.xpose.msra.mxu0 0.0
    %2012 = vmatpush.xpose.msra.mxu0 0.0
    %2013 = vmatpush.xpose.msra.mxu0 0.0
    %2014 = vmatpush.xpose.msra.mxu0 0.0
    %2015 = vmatpush.xpose.msra.mxu0 0.0
    %2016 = vmatpush.xpose.msra.mxu0 0.0
    %2017 = vmatpush.xpose.msra.mxu0 0.0
    %2018 = vmatpush.xpose.msra.mxu0 0.0
    %2019 = vmatpush.xpose.msra.mxu0 0.0
    %2020 = vmatpush.xpose.msra.mxu0 0.0
    %2021 = vmatpush.xpose.msra.mxu0 0.0
    %2022 = vmatpush.xpose.msra.mxu0 0.0
    %2023 = vmatpush.xpose.msra.mxu0 0.0
    %2024 = vmatpush.xpose.msra.mxu0 0.0
    %2025 = vmatpush.xpose.msra.mxu0 0.0
    %2026 = vmatpush.xpose.msra.mxu0 %v2009
    %2027 = vmatmul.f32.gmra.mxu0 %v2007
    %v2028 = vpop.f32.mrf.mxu0
    %v2029 = vadd.f32 0.0, %v2028
    %2030 = vdwg.mxu0
    %2031 = vrot.lane.b32.xlu0 %v1896, 96
    %v2032 = vpop.permute.xlu0 %2031
    %v2033 = vsel %vm348, %v1896, 0
    %v2035 = vsel %vm348, %v2032, 0
    %2037 = vmatpush.xpose.msra.mxu0 0.0
    %2038 = vmatpush.xpose.msra.mxu0 0.0
    %2039 = vmatpush.xpose.msra.mxu0 0.0
    %2040 = vmatpush.xpose.msra.mxu0 0.0
    %2041 = vmatpush.xpose.msra.mxu0 0.0
    %2042 = vmatpush.xpose.msra.mxu0 0.0
    %2043 = vmatpush.xpose.msra.mxu0 0.0
    %2044 = vmatpush.xpose.msra.mxu0 0.0
    %2045 = vmatpush.xpose.msra.mxu0 0.0
    %2046 = vmatpush.xpose.msra.mxu0 0.0
    %2047 = vmatpush.xpose.msra.mxu0 0.0
    %2048 = vmatpush.xpose.msra.mxu0 0.0
    %2049 = vmatpush.xpose.msra.mxu0 0.0
    %2050 = vmatpush.xpose.msra.mxu0 0.0
    %2051 = vmatpush.xpose.msra.mxu0 0.0
    %2052 = vmatpush.xpose.msra.mxu0 %v2035
    %2053 = vmatmul.f32.gmra.mxu0 %v2033
    %v2054 = vpop.f32.mrf.mxu0
    %v2055 = vadd.f32 0.0, %v2054
    %2056 = vdwg.mxu0
    %2057 = vrot.lane.b32.xlu0 %v1898, 96
    %v2058 = vpop.permute.xlu0 %2057
    %v2059 = vsel %vm348, %v1898, 0
    %v2061 = vsel %vm348, %v2058, 0
    %2063 = vmatpush.xpose.msra.mxu0 0.0
    %2064 = vmatpush.xpose.msra.mxu0 0.0
    %2065 = vmatpush.xpose.msra.mxu0 0.0
    %2066 = vmatpush.xpose.msra.mxu0 0.0
    %2067 = vmatpush.xpose.msra.mxu0 0.0
    %2068 = vmatpush.xpose.msra.mxu0 0.0
    %2069 = vmatpush.xpose.msra.mxu0 0.0
    %2070 = vmatpush.xpose.msra.mxu0 0.0
    %2071 = vmatpush.xpose.msra.mxu0 0.0
    %2072 = vmatpush.xpose.msra.mxu0 0.0
    %2073 = vmatpush.xpose.msra.mxu0 0.0
    %2074 = vmatpush.xpose.msra.mxu0 0.0
    %2075 = vmatpush.xpose.msra.mxu0 0.0
    %2076 = vmatpush.xpose.msra.mxu0 0.0
    %2077 = vmatpush.xpose.msra.mxu0 0.0
    %2078 = vmatpush.xpose.msra.mxu0 %v2061
    %2079 = vmatmul.f32.gmra.mxu0 %v2059
    %v2080 = vpop.f32.mrf.mxu0
    %v2081 = vadd.f32 0.0, %v2080
    %2082 = vdwg.mxu0
    %2083 = vrot.lane.b32.xlu0 %v1900, 96
    %v2084 = vpop.permute.xlu0 %2083
    %v2085 = vsel %vm348, %v1900, 0
    %v2087 = vsel %vm348, %v2084, 0
    %2089 = vmatpush.xpose.msra.mxu0 0.0
    %2090 = vmatpush.xpose.msra.mxu0 0.0
    %2091 = vmatpush.xpose.msra.mxu0 0.0
    %2092 = vmatpush.xpose.msra.mxu0 0.0
    %2093 = vmatpush.xpose.msra.mxu0 0.0
    %2094 = vmatpush.xpose.msra.mxu0 0.0
    %2095 = vmatpush.xpose.msra.mxu0 0.0
    %2096 = vmatpush.xpose.msra.mxu0 0.0
    %2097 = vmatpush.xpose.msra.mxu0 0.0
    %2098 = vmatpush.xpose.msra.mxu0 0.0
    %2099 = vmatpush.xpose.msra.mxu0 0.0
    %2100 = vmatpush.xpose.msra.mxu0 0.0
    %2101 = vmatpush.xpose.msra.mxu0 0.0
    %2102 = vmatpush.xpose.msra.mxu0 0.0
    %2103 = vmatpush.xpose.msra.mxu0 0.0
    %2104 = vmatpush.xpose.msra.mxu0 %v2087
    %2105 = vmatmul.f32.gmra.mxu0 %v2085
    %v2106 = vpop.f32.mrf.mxu0
    %v2107 = vadd.f32 0.0, %v2106
    %2108 = vdwg.mxu0
    %v2109 = vsel %vm556, -1e+30, %v1925
    %v2110 = vsel %vm556, -1e+30, %v1951
    %v2111 = vsel %vm556, -1e+30, %v1977
    %v2112 = vsel %vm556, -1e+30, %v2003
    %v2113 = vsel %vm556, -1e+30, %v2029
    %v2114 = vsel %vm556, -1e+30, %v2055
    %v2115 = vsel %vm556, -1e+30, %v2081
    %v2116 = vsel %vm556, -1e+30, %v2107
    %v2117 = vsel %vm348, %v2109, -inf
    %2118 = vmax.xlane.f32.xlu0 %v2117
    %v2119 = vpop.xlane.xlu0 %2118
    %v2120 = vsel %vm348, %v2110, -inf
    %2121 = vmax.xlane.f32.xlu0 %v2120
    %v2122 = vpop.xlane.xlu0 %2121
    %v2123 = vsel %vm348, %v2111, -inf
    %2124 = vmax.xlane.f32.xlu0 %v2123
    %v2125 = vpop.xlane.xlu0 %2124
    %v2126 = vsel %vm348, %v2112, -inf
    %2127 = vmax.xlane.f32.xlu0 %v2126
    %v2128 = vpop.xlane.xlu0 %2127
    %v2129 = vsel %vm348, %v2113, -inf
    %2130 = vmax.xlane.f32.xlu0 %v2129
    %v2131 = vpop.xlane.xlu0 %2130
    %v2132 = vsel %vm348, %v2114, -inf
    %2133 = vmax.xlane.f32.xlu0 %v2132
    %v2134 = vpop.xlane.xlu0 %2133
    %v2135 = vsel %vm348, %v2115, -inf
    %2136 = vmax.xlane.f32.xlu0 %v2135
    %v2137 = vpop.xlane.xlu0 %2136
    %v2138 = vsel %vm348, %v2116, -inf
    %2139 = vmax.xlane.f32.xlu0 %v2138
    %v2140 = vpop.xlane.xlu0 %2139
    %v2141 = vsub.f32 %v2109, %v2119
    %v2142 = vsub.f32 %v2110, %v2122
    %v2143 = vsub.f32 %v2111, %v2125
    %v2144 = vsub.f32 %v2112, %v2128
    %v2145 = vsub.f32 %v2113, %v2131
    %v2146 = vsub.f32 %v2114, %v2134
    %v2147 = vsub.f32 %v2115, %v2137
    %v2148 = vsub.f32 %v2116, %v2140
    %v2149 = vmul.f32 %v2141, 1.442695
    %v2150 = vpow.pop %v2149
    %v2151 = vmul.f32 %v2142, 1.442695
    %v2152 = vpow.pop %v2151
    %v2153 = vmul.f32 %v2143, 1.442695
    %v2154 = vpow.pop %v2153
    %v2155 = vmul.f32 %v2144, 1.442695
    %v2156 = vpow.pop %v2155
    %v2157 = vmul.f32 %v2145, 1.442695
    %v2158 = vpow.pop %v2157
    %v2159 = vmul.f32 %v2146, 1.442695
    %v2160 = vpow.pop %v2159
    %v2161 = vmul.f32 %v2147, 1.442695
    %v2162 = vpow.pop %v2161
    %v2163 = vmul.f32 %v2148, 1.442695
    %v2164 = vpow.pop %v2163
    %v2165 = vsel %vm348, %v2150, 0.0
    %2166 = vadd.xlane.f32.xlu0 %v2165
    %v2167 = vpop.xlane.xlu0 %2166
    %v2168 = vsel %vm348, %v2152, 0.0
    %2169 = vadd.xlane.f32.xlu0 %v2168
    %v2170 = vpop.xlane.xlu0 %2169
    %v2171 = vsel %vm348, %v2154, 0.0
    %2172 = vadd.xlane.f32.xlu0 %v2171
    %v2173 = vpop.xlane.xlu0 %2172
    %v2174 = vsel %vm348, %v2156, 0.0
    %2175 = vadd.xlane.f32.xlu0 %v2174
    %v2176 = vpop.xlane.xlu0 %2175
    %v2177 = vsel %vm348, %v2158, 0.0
    %2178 = vadd.xlane.f32.xlu0 %v2177
    %v2179 = vpop.xlane.xlu0 %2178
    %v2180 = vsel %vm348, %v2160, 0.0
    %2181 = vadd.xlane.f32.xlu0 %v2180
    %v2182 = vpop.xlane.xlu0 %2181
    %v2183 = vsel %vm348, %v2162, 0.0
    %2184 = vadd.xlane.f32.xlu0 %v2183
    %v2185 = vpop.xlane.xlu0 %2184
    %v2186 = vsel %vm348, %v2164, 0.0
    %2187 = vadd.xlane.f32.xlu0 %v2186
    %v2188 = vpop.xlane.xlu0 %2187
    %v2189 = vrcp.pop %v2167
    %v2190 = vrcp.pop %v2170
    %v2191 = vrcp.pop %v2173
    %v2192 = vrcp.pop %v2176
    %v2193 = vrcp.pop %v2179
    %v2194 = vrcp.pop %v2182
    %v2195 = vrcp.pop %v2185
    %v2196 = vrcp.pop %v2188
    %v2197 = vmul.f32 %v2150, %v2189
    %v2198 = vmul.f32 %v2152, %v2190
    %v2199 = vmul.f32 %v2154, %v2191
    %v2200 = vmul.f32 %v2156, %v2192
    %v2201 = vmul.f32 %v2158, %v2193
    %v2202 = vmul.f32 %v2160, %v2194
    %v2203 = vmul.f32 %v2162, %v2195
    %v2204 = vmul.f32 %v2164, %v2196
    %2205 = vrot.lane.b32.xlu0 %v1882, 64
    %v2206 = vpop.permute.xlu0 %2205
    %v2209 = vsel %vm348, %v2197, 0
    %2211 = vmatpush.msra.mxu0 0.0
    %2212 = vmatpush.msra.mxu0 0.0
    %2213 = vmatpush.msra.mxu0 0.0
    %2214 = vmatpush.msra.mxu0 0.0
    %2215 = vmatpush.msra.mxu0 0.0
    %2216 = vmatpush.msra.mxu0 0.0
    %2217 = vmatpush.msra.mxu0 0.0
    %2218 = vmatpush.msra.mxu0 0.0
    %2219 = vmatpush.msra.mxu0 0.0
    %2220 = vmatpush.msra.mxu0 0.0
    %2221 = vmatpush.msra.mxu0 0.0
    %2222 = vmatpush.msra.mxu0 0.0
    %2223 = vmatpush.msra.mxu0 0.0
    %2224 = vmatpush.msra.mxu0 0.0
    %2225 = vmatpush.msra.mxu0 0.0
    %2226 = vmatpush.msra.mxu0 %v2206
    %2227 = vmatmul.f32.gmra.mxu0 %v2209
    %v2228 = vpop.f32.mrf.mxu0
    %v2229 = vadd.f32 0.0, %v2228
    %2230 = vdwg.mxu0
    %2231 = vrot.lane.b32.xlu0 %v1885, 64
    %v2232 = vpop.permute.xlu0 %2231
    %v2235 = vsel %vm348, %v2198, 0
    %2237 = vmatpush.msra.mxu0 0.0
    %2238 = vmatpush.msra.mxu0 0.0
    %2239 = vmatpush.msra.mxu0 0.0
    %2240 = vmatpush.msra.mxu0 0.0
    %2241 = vmatpush.msra.mxu0 0.0
    %2242 = vmatpush.msra.mxu0 0.0
    %2243 = vmatpush.msra.mxu0 0.0
    %2244 = vmatpush.msra.mxu0 0.0
    %2245 = vmatpush.msra.mxu0 0.0
    %2246 = vmatpush.msra.mxu0 0.0
    %2247 = vmatpush.msra.mxu0 0.0
    %2248 = vmatpush.msra.mxu0 0.0
    %2249 = vmatpush.msra.mxu0 0.0
    %2250 = vmatpush.msra.mxu0 0.0
    %2251 = vmatpush.msra.mxu0 0.0
    %2252 = vmatpush.msra.mxu0 %v2232
    %2253 = vmatmul.f32.gmra.mxu0 %v2235
    %v2254 = vpop.f32.mrf.mxu0
    %v2255 = vadd.f32 0.0, %v2254
    %2256 = vdwg.mxu0
    %2257 = vrot.lane.b32.xlu0 %v1890, 64
    %v2258 = vpop.permute.xlu0 %2257
    %v2261 = vsel %vm348, %v2199, 0
    %2263 = vmatpush.msra.mxu0 0.0
    %2264 = vmatpush.msra.mxu0 0.0
    %2265 = vmatpush.msra.mxu0 0.0
    %2266 = vmatpush.msra.mxu0 0.0
    %2267 = vmatpush.msra.mxu0 0.0
    %2268 = vmatpush.msra.mxu0 0.0
    %2269 = vmatpush.msra.mxu0 0.0
    %2270 = vmatpush.msra.mxu0 0.0
    %2271 = vmatpush.msra.mxu0 0.0
    %2272 = vmatpush.msra.mxu0 0.0
    %2273 = vmatpush.msra.mxu0 0.0
    %2274 = vmatpush.msra.mxu0 0.0
    %2275 = vmatpush.msra.mxu0 0.0
    %2276 = vmatpush.msra.mxu0 0.0
    %2277 = vmatpush.msra.mxu0 0.0
    %2278 = vmatpush.msra.mxu0 %v2258
    %2279 = vmatmul.f32.gmra.mxu0 %v2261
    %v2280 = vpop.f32.mrf.mxu0
    %v2281 = vadd.f32 0.0, %v2280
    %2282 = vdwg.mxu0
    %2283 = vrot.lane.b32.xlu0 %v1892, 64
    %v2284 = vpop.permute.xlu0 %2283
    %v2287 = vsel %vm348, %v2200, 0
    %2289 = vmatpush.msra.mxu0 0.0
    %2290 = vmatpush.msra.mxu0 0.0
    %2291 = vmatpush.msra.mxu0 0.0
    %2292 = vmatpush.msra.mxu0 0.0
    %2293 = vmatpush.msra.mxu0 0.0
    %2294 = vmatpush.msra.mxu0 0.0
    %2295 = vmatpush.msra.mxu0 0.0
    %2296 = vmatpush.msra.mxu0 0.0
    %2297 = vmatpush.msra.mxu0 0.0
    %2298 = vmatpush.msra.mxu0 0.0
    %2299 = vmatpush.msra.mxu0 0.0
    %2300 = vmatpush.msra.mxu0 0.0
    %2301 = vmatpush.msra.mxu0 0.0
    %2302 = vmatpush.msra.mxu0 0.0
    %2303 = vmatpush.msra.mxu0 0.0
    %2304 = vmatpush.msra.mxu0 %v2284
    %2305 = vmatmul.f32.gmra.mxu0 %v2287
    %v2306 = vpop.f32.mrf.mxu0
    %v2307 = vadd.f32 0.0, %v2306
    %2308 = vdwg.mxu0
    %2309 = vrot.lane.b32.xlu0 %v1894, 64
    %v2310 = vpop.permute.xlu0 %2309
    %v2313 = vsel %vm348, %v2201, 0
    %2315 = vmatpush.msra.mxu0 0.0
    %2316 = vmatpush.msra.mxu0 0.0
    %2317 = vmatpush.msra.mxu0 0.0
    %2318 = vmatpush.msra.mxu0 0.0
    %2319 = vmatpush.msra.mxu0 0.0
    %2320 = vmatpush.msra.mxu0 0.0
    %2321 = vmatpush.msra.mxu0 0.0
    %2322 = vmatpush.msra.mxu0 0.0
    %2323 = vmatpush.msra.mxu0 0.0
    %2324 = vmatpush.msra.mxu0 0.0
    %2325 = vmatpush.msra.mxu0 0.0
    %2326 = vmatpush.msra.mxu0 0.0
    %2327 = vmatpush.msra.mxu0 0.0
    %2328 = vmatpush.msra.mxu0 0.0
    %2329 = vmatpush.msra.mxu0 0.0
    %2330 = vmatpush.msra.mxu0 %v2310
    %2331 = vmatmul.f32.gmra.mxu0 %v2313
    %v2332 = vpop.f32.mrf.mxu0
    %v2333 = vadd.f32 0.0, %v2332
    %2334 = vdwg.mxu0
    %2335 = vrot.lane.b32.xlu0 %v1896, 64
    %v2336 = vpop.permute.xlu0 %2335
    %v2339 = vsel %vm348, %v2202, 0
    %2341 = vmatpush.msra.mxu0 0.0
    %2342 = vmatpush.msra.mxu0 0.0
    %2343 = vmatpush.msra.mxu0 0.0
    %2344 = vmatpush.msra.mxu0 0.0
    %2345 = vmatpush.msra.mxu0 0.0
    %2346 = vmatpush.msra.mxu0 0.0
    %2347 = vmatpush.msra.mxu0 0.0
    %2348 = vmatpush.msra.mxu0 0.0
    %2349 = vmatpush.msra.mxu0 0.0
    %2350 = vmatpush.msra.mxu0 0.0
    %2351 = vmatpush.msra.mxu0 0.0
    %2352 = vmatpush.msra.mxu0 0.0
    %2353 = vmatpush.msra.mxu0 0.0
    %2354 = vmatpush.msra.mxu0 0.0
    %2355 = vmatpush.msra.mxu0 0.0
    %2356 = vmatpush.msra.mxu0 %v2336
    %2357 = vmatmul.f32.gmra.mxu0 %v2339
    %v2358 = vpop.f32.mrf.mxu0
    %v2359 = vadd.f32 0.0, %v2358
    %2360 = vdwg.mxu0
    %2361 = vrot.lane.b32.xlu0 %v1898, 64
    %v2362 = vpop.permute.xlu0 %2361
    %v2365 = vsel %vm348, %v2203, 0
    %2367 = vmatpush.msra.mxu0 0.0
    %2368 = vmatpush.msra.mxu0 0.0
    %2369 = vmatpush.msra.mxu0 0.0
    %2370 = vmatpush.msra.mxu0 0.0
    %2371 = vmatpush.msra.mxu0 0.0
    %2372 = vmatpush.msra.mxu0 0.0
    %2373 = vmatpush.msra.mxu0 0.0
    %2374 = vmatpush.msra.mxu0 0.0
    %2375 = vmatpush.msra.mxu0 0.0
    %2376 = vmatpush.msra.mxu0 0.0
    %2377 = vmatpush.msra.mxu0 0.0
    %2378 = vmatpush.msra.mxu0 0.0
    %2379 = vmatpush.msra.mxu0 0.0
    %2380 = vmatpush.msra.mxu0 0.0
    %2381 = vmatpush.msra.mxu0 0.0
    %2382 = vmatpush.msra.mxu0 %v2362
    %2383 = vmatmul.f32.gmra.mxu0 %v2365
    %v2384 = vpop.f32.mrf.mxu0
    %v2385 = vadd.f32 0.0, %v2384
    %2386 = vdwg.mxu0
    %2387 = vrot.lane.b32.xlu0 %v1900, 64
    %v2388 = vpop.permute.xlu0 %2387
    %v2391 = vsel %vm348, %v2204, 0
    %2393 = vmatpush.msra.mxu0 0.0
    %2394 = vmatpush.msra.mxu0 0.0
    %2395 = vmatpush.msra.mxu0 0.0
    %2396 = vmatpush.msra.mxu0 0.0
    %2397 = vmatpush.msra.mxu0 0.0
    %2398 = vmatpush.msra.mxu0 0.0
    %2399 = vmatpush.msra.mxu0 0.0
    %2400 = vmatpush.msra.mxu0 0.0
    %2401 = vmatpush.msra.mxu0 0.0
    %2402 = vmatpush.msra.mxu0 0.0
    %2403 = vmatpush.msra.mxu0 0.0
    %2404 = vmatpush.msra.mxu0 0.0
    %2405 = vmatpush.msra.mxu0 0.0
    %2406 = vmatpush.msra.mxu0 0.0
    %2407 = vmatpush.msra.mxu0 0.0
    %2408 = vmatpush.msra.mxu0 %v2388
    %2409 = vmatmul.f32.gmra.mxu0 %v2391
    %v2410 = vpop.f32.mrf.mxu0
    %v2411 = vadd.f32 0.0, %v2410
    %2412 = vdwg.mxu0
    %2415 = vrot.lane.b32.xlu0 %v2281, 8
    %v2416 = vpop.permute.xlu0 %2415
    %2417 = vrot.lane.b32.xlu0 %v2307, 8
    %v2418 = vpop.permute.xlu0 %2417
    %2423 = vrot.lane.b32.xlu0 %v2333, 16
    %v2424 = vpop.permute.xlu0 %2423
    %2425 = vrot.lane.b32.xlu0 %v2359, 16
    %v2426 = vpop.permute.xlu0 %2425
    %2431 = vrot.lane.b32.xlu0 %v2385, 24
    %v2432 = vpop.permute.xlu0 %2431
    %2433 = vrot.lane.b32.xlu0 %v2411, 24
    %v2434 = vpop.permute.xlu0 %2433
    %v2437 = vsel %vm348, %v2229, %v2416
    %v2438 = vsel %vm348, %v2255, %v2418
    %v2439 = vsel %vm887, %v2437, %v2424
    %v2440 = vsel %vm887, %v2438, %v2426
    %v2441 = vsel %vm890, %v2439, %v2432
    %v2442 = vsel %vm890, %v2440, %v2434
    %v2444 = vperm.slane %v1811, 0
    %v2447 = vsel %vm302, %v2441, 0
    %v2450 = vsel %vm302, %v2442, 0
    %2452 = vmatpush.msra.mxu0 0.0
    %2453 = vmatpush.msra.mxu0 0.0
    %2454 = vmatpush.msra.mxu0 0.0
    %2455 = vmatpush.msra.mxu0 0.0
    %2456 = vmatpush.msra.mxu0 0.0
    %2457 = vmatpush.msra.mxu0 0.0
    %2458 = vmatpush.msra.mxu0 0.0
    %2459 = vmatpush.msra.mxu0 0.0
    %2460 = vmatpush.msra.mxu0 0.0
    %2461 = vmatpush.msra.mxu0 0.0
    %2462 = vmatpush.msra.mxu0 0.0
    %2463 = vmatpush.msra.mxu0 0.0
    %2464 = vmatpush.msra.mxu0 %v1810
    %2465 = vmatpush.msra.mxu0 %v1809
    %2466 = vmatpush.msra.mxu0 %v1808
    %2467 = vmatpush.msra.mxu0 %v1807
    %2468 = vmatmul.f32.gmra.mxu0 %v2447
    %v2469 = vpop.f32.mrf.mxu0
    %v2470 = vadd.f32 %v2444, %v2469
    %2471 = vmatmul.f32.gmra.mxu0 %v2450
    %v2472 = vpop.f32.mrf.mxu0
    %v2473 = vadd.f32 %v2444, %v2472
    %2474 = vdwg.mxu0
    %v2475 = vadd.f32 %v1800, %v2470
    %v2476 = vadd.f32 %v1801, %v2473
    %v2477 = vsel %vm302, %v2475, 0.0
    %2478 = vadd.xlane.f32.xlu0 %v2477
    %v2479 = vpop.xlane.xlu0 %2478
    %v2480 = vsel %vm302, %v2476, 0.0
    %2481 = vadd.xlane.f32.xlu0 %v2480
    %v2482 = vpop.xlane.xlu0 %2481
    %v2483 = vmul.f32 %v2479, %v939
    %v2484 = vmul.f32 %v2482, %v939
    %v2485 = vsub.f32 %v2475, %v2483
    %v2486 = vsub.f32 %v2476, %v2484
    %v2487 = vmul.f32 %v2485, %v2485
    %v2488 = vmul.f32 %v2486, %v2486
    %v2489 = vsel %vm302, %v2487, 0.0
    %2490 = vadd.xlane.f32.xlu0 %v2489
    %v2491 = vpop.xlane.xlu0 %2490
    %v2492 = vsel %vm302, %v2488, 0.0
    %2493 = vadd.xlane.f32.xlu0 %v2492
    %v2494 = vpop.xlane.xlu0 %2493
    %v2495 = vmul.f32 %v2491, %v939
    %v2496 = vmul.f32 %v2494, %v939
    %v2497 = vadd.f32 %v2495, 1e-05
    %v2498 = vadd.f32 %v2496, 1e-05
    %v2499 = vrsqrt.pop %v2497
    %v2500 = vmul.f32 %v2499, %v2497
    %v2501 = vmul.f32 %v2500, %v2499
    %v2502 = vmul.f32 0.5, %v2501
    %v2503 = vsub.f32 1.5, %v2502
    %v2504 = vmul.f32 %v2499, %v2503
    %vm2505 = vweird.f32 %v2497
    %vm2506 = vweird.f32 %v2499
    %vm2507 = vmor %vm2505, %vm2506
    %v2508 = vsel %vm2507, %v2499, %v2504
    %v2509 = vrsqrt.pop %v2498
    %v2510 = vmul.f32 %v2509, %v2498
    %v2511 = vmul.f32 %v2510, %v2509
    %v2512 = vmul.f32 0.5, %v2511
    %v2513 = vsub.f32 1.5, %v2512
    %v2514 = vmul.f32 %v2509, %v2513
    %vm2515 = vweird.f32 %v2498
    %vm2516 = vweird.f32 %v2509
    %vm2517 = vmor %vm2515, %vm2516
    %v2518 = vsel %vm2517, %v2509, %v2514
    %v2519 = vmul.f32 %v2485, %v2508
    %v2520 = vmul.f32 %v2486, %v2518
    %v2522 = vperm.slane %v1849, 0
    %v2524 = vmul.f32 %v2519, %v2522
    %v2525 = vmul.f32 %v2520, %v2522
    %v2527 = vperm.slane %v1850, 0
    %v2529 = vadd.f32 %v2524, %v2527
    %v2530 = vadd.f32 %v2525, %v2527
    %v2532 = vperm.slane %v1816, 0
    %v2535 = vsel %vm302, %v2529, 0
    %v2538 = vsel %vm302, %v2530, 0
    %2540 = vmatpush.msra.mxu0 0.0
    %2541 = vmatpush.msra.mxu0 0.0
    %2542 = vmatpush.msra.mxu0 0.0
    %2543 = vmatpush.msra.mxu0 0.0
    %2544 = vmatpush.msra.mxu0 0.0
    %2545 = vmatpush.msra.mxu0 0.0
    %2546 = vmatpush.msra.mxu0 0.0
    %2547 = vmatpush.msra.mxu0 0.0
    %2548 = vmatpush.msra.mxu0 0.0
    %2549 = vmatpush.msra.mxu0 0.0
    %2550 = vmatpush.msra.mxu0 0.0
    %2551 = vmatpush.msra.mxu0 0.0
    %2552 = vmatpush.msra.mxu0 %v1815
    %2553 = vmatpush.msra.mxu0 %v1814
    %2554 = vmatpush.msra.mxu0 %v1813
    %2555 = vmatpush.msra.mxu0 %v1812
    %2556 = vmatmul.f32.gmra.mxu0 %v2535
    %v2557 = vpop.f32.mrf.mxu0
    %v2558 = vadd.f32 %v2532, %v2557
    %2559 = vmatmul.f32.gmra.mxu0 %v2538
    %v2560 = vpop.f32.mrf.mxu0
    %v2561 = vadd.f32 %v2532, %v2560
    %2562 = vdwg.mxu0
    %v2564 = vperm.slane %v1821, 0
    %2566 = vmatpush.msra.mxu0 0.0
    %2567 = vmatpush.msra.mxu0 0.0
    %2568 = vmatpush.msra.mxu0 0.0
    %2569 = vmatpush.msra.mxu0 0.0
    %2570 = vmatpush.msra.mxu0 0.0
    %2571 = vmatpush.msra.mxu0 0.0
    %2572 = vmatpush.msra.mxu0 0.0
    %2573 = vmatpush.msra.mxu0 0.0
    %2574 = vmatpush.msra.mxu0 0.0
    %2575 = vmatpush.msra.mxu0 0.0
    %2576 = vmatpush.msra.mxu0 0.0
    %2577 = vmatpush.msra.mxu0 0.0
    %2578 = vmatpush.msra.mxu0 %v1820
    %2579 = vmatpush.msra.mxu0 %v1819
    %2580 = vmatpush.msra.mxu0 %v1818
    %2581 = vmatpush.msra.mxu0 %v1817
    %2582 = vmatmul.f32.gmra.mxu0 %v1024
    %v2583 = vpop.f32.mrf.mxu0
    %v2584 = vadd.f32 %v2564, %v2583
    %2585 = vmatmul.f32.gmra.mxu0 %v1027
    %v2586 = vpop.f32.mrf.mxu0
    %v2587 = vadd.f32 %v2564, %v2586
    %2588 = vdwg.mxu0
    %2591 = vrot.lane.b32.xlu0 %v2558, 120
    %v2592 = vpop.permute.xlu0 %2591
    %2593 = vrot.lane.b32.xlu0 %v2561, 120
    %v2594 = vpop.permute.xlu0 %2593
    %2595 = vrot.lane.b32.xlu0 %v2558, 112
    %v2596 = vpop.permute.xlu0 %2595
    %2597 = vrot.lane.b32.xlu0 %v2561, 112
    %v2598 = vpop.permute.xlu0 %2597
    %2599 = vrot.lane.b32.xlu0 %v2558, 104
    %v2600 = vpop.permute.xlu0 %2599
    %2601 = vrot.lane.b32.xlu0 %v2561, 104
    %v2602 = vpop.permute.xlu0 %2601
    %2605 = vrot.lane.b32.xlu0 %v2584, 120
    %v2606 = vpop.permute.xlu0 %2605
    %2607 = vrot.lane.b32.xlu0 %v2587, 120
    %v2608 = vpop.permute.xlu0 %2607
    %2609 = vrot.lane.b32.xlu0 %v2584, 112
    %v2610 = vpop.permute.xlu0 %2609
    %2611 = vrot.lane.b32.xlu0 %v2587, 112
    %v2612 = vpop.permute.xlu0 %2611
    %2613 = vrot.lane.b32.xlu0 %v2584, 104
    %v2614 = vpop.permute.xlu0 %2613
    %2615 = vrot.lane.b32.xlu0 %v2587, 104
    %v2616 = vpop.permute.xlu0 %2615
    %v2617 = vsel %vm348, %v2558, 0
    %v2619 = vsel %vm348, %v2584, 0
    %2621 = vmatpush.xpose.msra.mxu0 0.0
    %2622 = vmatpush.xpose.msra.mxu0 0.0
    %2623 = vmatpush.xpose.msra.mxu0 0.0
    %2624 = vmatpush.xpose.msra.mxu0 0.0
    %2625 = vmatpush.xpose.msra.mxu0 0.0
    %2626 = vmatpush.xpose.msra.mxu0 0.0
    %2627 = vmatpush.xpose.msra.mxu0 0.0
    %2628 = vmatpush.xpose.msra.mxu0 0.0
    %2629 = vmatpush.xpose.msra.mxu0 0.0
    %2630 = vmatpush.xpose.msra.mxu0 0.0
    %2631 = vmatpush.xpose.msra.mxu0 0.0
    %2632 = vmatpush.xpose.msra.mxu0 0.0
    %2633 = vmatpush.xpose.msra.mxu0 0.0
    %2634 = vmatpush.xpose.msra.mxu0 0.0
    %2635 = vmatpush.xpose.msra.mxu0 0.0
    %2636 = vmatpush.xpose.msra.mxu0 %v2619
    %2637 = vmatmul.f32.gmra.mxu0 %v2617
    %v2638 = vpop.f32.mrf.mxu0
    %v2639 = vadd.f32 0.0, %v2638
    %2640 = vdwg.mxu0
    %v2641 = vsel %vm348, %v2561, 0
    %v2643 = vsel %vm348, %v2587, 0
    %2645 = vmatpush.xpose.msra.mxu0 0.0
    %2646 = vmatpush.xpose.msra.mxu0 0.0
    %2647 = vmatpush.xpose.msra.mxu0 0.0
    %2648 = vmatpush.xpose.msra.mxu0 0.0
    %2649 = vmatpush.xpose.msra.mxu0 0.0
    %2650 = vmatpush.xpose.msra.mxu0 0.0
    %2651 = vmatpush.xpose.msra.mxu0 0.0
    %2652 = vmatpush.xpose.msra.mxu0 0.0
    %2653 = vmatpush.xpose.msra.mxu0 0.0
    %2654 = vmatpush.xpose.msra.mxu0 0.0
    %2655 = vmatpush.xpose.msra.mxu0 0.0
    %2656 = vmatpush.xpose.msra.mxu0 0.0
    %2657 = vmatpush.xpose.msra.mxu0 0.0
    %2658 = vmatpush.xpose.msra.mxu0 0.0
    %2659 = vmatpush.xpose.msra.mxu0 0.0
    %2660 = vmatpush.xpose.msra.mxu0 %v2643
    %2661 = vmatmul.f32.gmra.mxu0 %v2641
    %v2662 = vpop.f32.mrf.mxu0
    %v2663 = vadd.f32 0.0, %v2662
    %2664 = vdwg.mxu0
    %v2665 = vsel %vm348, %v2592, 0
    %v2667 = vsel %vm348, %v2606, 0
    %2669 = vmatpush.xpose.msra.mxu0 0.0
    %2670 = vmatpush.xpose.msra.mxu0 0.0
    %2671 = vmatpush.xpose.msra.mxu0 0.0
    %2672 = vmatpush.xpose.msra.mxu0 0.0
    %2673 = vmatpush.xpose.msra.mxu0 0.0
    %2674 = vmatpush.xpose.msra.mxu0 0.0
    %2675 = vmatpush.xpose.msra.mxu0 0.0
    %2676 = vmatpush.xpose.msra.mxu0 0.0
    %2677 = vmatpush.xpose.msra.mxu0 0.0
    %2678 = vmatpush.xpose.msra.mxu0 0.0
    %2679 = vmatpush.xpose.msra.mxu0 0.0
    %2680 = vmatpush.xpose.msra.mxu0 0.0
    %2681 = vmatpush.xpose.msra.mxu0 0.0
    %2682 = vmatpush.xpose.msra.mxu0 0.0
    %2683 = vmatpush.xpose.msra.mxu0 0.0
    %2684 = vmatpush.xpose.msra.mxu0 %v2667
    %2685 = vmatmul.f32.gmra.mxu0 %v2665
    %v2686 = vpop.f32.mrf.mxu0
    %v2687 = vadd.f32 0.0, %v2686
    %2688 = vdwg.mxu0
    %v2689 = vsel %vm348, %v2594, 0
    %v2691 = vsel %vm348, %v2608, 0
    %2693 = vmatpush.xpose.msra.mxu0 0.0
    %2694 = vmatpush.xpose.msra.mxu0 0.0
    %2695 = vmatpush.xpose.msra.mxu0 0.0
    %2696 = vmatpush.xpose.msra.mxu0 0.0
    %2697 = vmatpush.xpose.msra.mxu0 0.0
    %2698 = vmatpush.xpose.msra.mxu0 0.0
    %2699 = vmatpush.xpose.msra.mxu0 0.0
    %2700 = vmatpush.xpose.msra.mxu0 0.0
    %2701 = vmatpush.xpose.msra.mxu0 0.0
    %2702 = vmatpush.xpose.msra.mxu0 0.0
    %2703 = vmatpush.xpose.msra.mxu0 0.0
    %2704 = vmatpush.xpose.msra.mxu0 0.0
    %2705 = vmatpush.xpose.msra.mxu0 0.0
    %2706 = vmatpush.xpose.msra.mxu0 0.0
    %2707 = vmatpush.xpose.msra.mxu0 0.0
    %2708 = vmatpush.xpose.msra.mxu0 %v2691
    %2709 = vmatmul.f32.gmra.mxu0 %v2689
    %v2710 = vpop.f32.mrf.mxu0
    %v2711 = vadd.f32 0.0, %v2710
    %2712 = vdwg.mxu0
    %v2713 = vsel %vm348, %v2596, 0
    %v2715 = vsel %vm348, %v2610, 0
    %2717 = vmatpush.xpose.msra.mxu0 0.0
    %2718 = vmatpush.xpose.msra.mxu0 0.0
    %2719 = vmatpush.xpose.msra.mxu0 0.0
    %2720 = vmatpush.xpose.msra.mxu0 0.0
    %2721 = vmatpush.xpose.msra.mxu0 0.0
    %2722 = vmatpush.xpose.msra.mxu0 0.0
    %2723 = vmatpush.xpose.msra.mxu0 0.0
    %2724 = vmatpush.xpose.msra.mxu0 0.0
    %2725 = vmatpush.xpose.msra.mxu0 0.0
    %2726 = vmatpush.xpose.msra.mxu0 0.0
    %2727 = vmatpush.xpose.msra.mxu0 0.0
    %2728 = vmatpush.xpose.msra.mxu0 0.0
    %2729 = vmatpush.xpose.msra.mxu0 0.0
    %2730 = vmatpush.xpose.msra.mxu0 0.0
    %2731 = vmatpush.xpose.msra.mxu0 0.0
    %2732 = vmatpush.xpose.msra.mxu0 %v2715
    %2733 = vmatmul.f32.gmra.mxu0 %v2713
    %v2734 = vpop.f32.mrf.mxu0
    %v2735 = vadd.f32 0.0, %v2734
    %2736 = vdwg.mxu0
    %v2737 = vsel %vm348, %v2598, 0
    %v2739 = vsel %vm348, %v2612, 0
    %2741 = vmatpush.xpose.msra.mxu0 0.0
    %2742 = vmatpush.xpose.msra.mxu0 0.0
    %2743 = vmatpush.xpose.msra.mxu0 0.0
    %2744 = vmatpush.xpose.msra.mxu0 0.0
    %2745 = vmatpush.xpose.msra.mxu0 0.0
    %2746 = vmatpush.xpose.msra.mxu0 0.0
    %2747 = vmatpush.xpose.msra.mxu0 0.0
    %2748 = vmatpush.xpose.msra.mxu0 0.0
    %2749 = vmatpush.xpose.msra.mxu0 0.0
    %2750 = vmatpush.xpose.msra.mxu0 0.0
    %2751 = vmatpush.xpose.msra.mxu0 0.0
    %2752 = vmatpush.xpose.msra.mxu0 0.0
    %2753 = vmatpush.xpose.msra.mxu0 0.0
    %2754 = vmatpush.xpose.msra.mxu0 0.0
    %2755 = vmatpush.xpose.msra.mxu0 0.0
    %2756 = vmatpush.xpose.msra.mxu0 %v2739
    %2757 = vmatmul.f32.gmra.mxu0 %v2737
    %v2758 = vpop.f32.mrf.mxu0
    %v2759 = vadd.f32 0.0, %v2758
    %2760 = vdwg.mxu0
    %v2761 = vsel %vm348, %v2600, 0
    %v2763 = vsel %vm348, %v2614, 0
    %2765 = vmatpush.xpose.msra.mxu0 0.0
    %2766 = vmatpush.xpose.msra.mxu0 0.0
    %2767 = vmatpush.xpose.msra.mxu0 0.0
    %2768 = vmatpush.xpose.msra.mxu0 0.0
    %2769 = vmatpush.xpose.msra.mxu0 0.0
    %2770 = vmatpush.xpose.msra.mxu0 0.0
    %2771 = vmatpush.xpose.msra.mxu0 0.0
    %2772 = vmatpush.xpose.msra.mxu0 0.0
    %2773 = vmatpush.xpose.msra.mxu0 0.0
    %2774 = vmatpush.xpose.msra.mxu0 0.0
    %2775 = vmatpush.xpose.msra.mxu0 0.0
    %2776 = vmatpush.xpose.msra.mxu0 0.0
    %2777 = vmatpush.xpose.msra.mxu0 0.0
    %2778 = vmatpush.xpose.msra.mxu0 0.0
    %2779 = vmatpush.xpose.msra.mxu0 0.0
    %2780 = vmatpush.xpose.msra.mxu0 %v2763
    %2781 = vmatmul.f32.gmra.mxu0 %v2761
    %v2782 = vpop.f32.mrf.mxu0
    %v2783 = vadd.f32 0.0, %v2782
    %2784 = vdwg.mxu0
    %v2785 = vsel %vm348, %v2602, 0
    %v2787 = vsel %vm348, %v2616, 0
    %2789 = vmatpush.xpose.msra.mxu0 0.0
    %2790 = vmatpush.xpose.msra.mxu0 0.0
    %2791 = vmatpush.xpose.msra.mxu0 0.0
    %2792 = vmatpush.xpose.msra.mxu0 0.0
    %2793 = vmatpush.xpose.msra.mxu0 0.0
    %2794 = vmatpush.xpose.msra.mxu0 0.0
    %2795 = vmatpush.xpose.msra.mxu0 0.0
    %2796 = vmatpush.xpose.msra.mxu0 0.0
    %2797 = vmatpush.xpose.msra.mxu0 0.0
    %2798 = vmatpush.xpose.msra.mxu0 0.0
    %2799 = vmatpush.xpose.msra.mxu0 0.0
    %2800 = vmatpush.xpose.msra.mxu0 0.0
    %2801 = vmatpush.xpose.msra.mxu0 0.0
    %2802 = vmatpush.xpose.msra.mxu0 0.0
    %2803 = vmatpush.xpose.msra.mxu0 0.0
    %2804 = vmatpush.xpose.msra.mxu0 %v2787
    %2805 = vmatmul.f32.gmra.mxu0 %v2785
    %v2806 = vpop.f32.mrf.mxu0
    %v2807 = vadd.f32 0.0, %v2806
    %2808 = vdwg.mxu0
    %v2809 = vsel %vm348, %v2639, -inf
    %2810 = vmax.xlane.f32.xlu0 %v2809
    %v2811 = vpop.xlane.xlu0 %2810
    %v2812 = vsel %vm348, %v2663, -inf
    %2813 = vmax.xlane.f32.xlu0 %v2812
    %v2814 = vpop.xlane.xlu0 %2813
    %v2815 = vsel %vm348, %v2687, -inf
    %2816 = vmax.xlane.f32.xlu0 %v2815
    %v2817 = vpop.xlane.xlu0 %2816
    %v2818 = vsel %vm348, %v2711, -inf
    %2819 = vmax.xlane.f32.xlu0 %v2818
    %v2820 = vpop.xlane.xlu0 %2819
    %v2821 = vsel %vm348, %v2735, -inf
    %2822 = vmax.xlane.f32.xlu0 %v2821
    %v2823 = vpop.xlane.xlu0 %2822
    %v2824 = vsel %vm348, %v2759, -inf
    %2825 = vmax.xlane.f32.xlu0 %v2824
    %v2826 = vpop.xlane.xlu0 %2825
    %v2827 = vsel %vm348, %v2783, -inf
    %2828 = vmax.xlane.f32.xlu0 %v2827
    %v2829 = vpop.xlane.xlu0 %2828
    %v2830 = vsel %vm348, %v2807, -inf
    %2831 = vmax.xlane.f32.xlu0 %v2830
    %v2832 = vpop.xlane.xlu0 %2831
    %v2833 = vsub.f32 %v2639, %v2811
    %v2834 = vsub.f32 %v2663, %v2814
    %v2835 = vsub.f32 %v2687, %v2817
    %v2836 = vsub.f32 %v2711, %v2820
    %v2837 = vsub.f32 %v2735, %v2823
    %v2838 = vsub.f32 %v2759, %v2826
    %v2839 = vsub.f32 %v2783, %v2829
    %v2840 = vsub.f32 %v2807, %v2832
    %v2841 = vmul.f32 %v2833, 1.442695
    %v2842 = vpow.pop %v2841
    %v2843 = vmul.f32 %v2834, 1.442695
    %v2844 = vpow.pop %v2843
    %v2845 = vmul.f32 %v2835, 1.442695
    %v2846 = vpow.pop %v2845
    %v2847 = vmul.f32 %v2836, 1.442695
    %v2848 = vpow.pop %v2847
    %v2849 = vmul.f32 %v2837, 1.442695
    %v2850 = vpow.pop %v2849
    %v2851 = vmul.f32 %v2838, 1.442695
    %v2852 = vpow.pop %v2851
    %v2853 = vmul.f32 %v2839, 1.442695
    %v2854 = vpow.pop %v2853
    %v2855 = vmul.f32 %v2840, 1.442695
    %v2856 = vpow.pop %v2855
    %v2857 = vsel %vm348, %v2842, 0.0
    %2858 = vadd.xlane.f32.xlu0 %v2857
    %v2859 = vpop.xlane.xlu0 %2858
    %v2860 = vsel %vm348, %v2844, 0.0
    %2861 = vadd.xlane.f32.xlu0 %v2860
    %v2862 = vpop.xlane.xlu0 %2861
    %v2863 = vsel %vm348, %v2846, 0.0
    %2864 = vadd.xlane.f32.xlu0 %v2863
    %v2865 = vpop.xlane.xlu0 %2864
    %v2866 = vsel %vm348, %v2848, 0.0
    %2867 = vadd.xlane.f32.xlu0 %v2866
    %v2868 = vpop.xlane.xlu0 %2867
    %v2869 = vsel %vm348, %v2850, 0.0
    %2870 = vadd.xlane.f32.xlu0 %v2869
    %v2871 = vpop.xlane.xlu0 %2870
    %v2872 = vsel %vm348, %v2852, 0.0
    %2873 = vadd.xlane.f32.xlu0 %v2872
    %v2874 = vpop.xlane.xlu0 %2873
    %v2875 = vsel %vm348, %v2854, 0.0
    %2876 = vadd.xlane.f32.xlu0 %v2875
    %v2877 = vpop.xlane.xlu0 %2876
    %v2878 = vsel %vm348, %v2856, 0.0
    %2879 = vadd.xlane.f32.xlu0 %v2878
    %v2880 = vpop.xlane.xlu0 %2879
    %v2881 = vrcp.pop %v2859
    %v2882 = vrcp.pop %v2862
    %v2883 = vrcp.pop %v2865
    %v2884 = vrcp.pop %v2868
    %v2885 = vrcp.pop %v2871
    %v2886 = vrcp.pop %v2874
    %v2887 = vrcp.pop %v2877
    %v2888 = vrcp.pop %v2880
    %v2889 = vmul.f32 %v2842, %v2881
    %v2890 = vmul.f32 %v2844, %v2882
    %v2891 = vmul.f32 %v2846, %v2883
    %v2892 = vmul.f32 %v2848, %v2884
    %v2893 = vmul.f32 %v2850, %v2885
    %v2894 = vmul.f32 %v2852, %v2886
    %v2895 = vmul.f32 %v2854, %v2887
    %v2896 = vmul.f32 %v2856, %v2888
    %2897 = vrot.lane.b32.xlu0 %v2584, 96
    %v2898 = vpop.permute.xlu0 %2897
    %v2901 = vsel %vm348, %v2889, 0
    %2903 = vmatpush.msra.mxu0 0.0
    %2904 = vmatpush.msra.mxu0 0.0
    %2905 = vmatpush.msra.mxu0 0.0
    %2906 = vmatpush.msra.mxu0 0.0
    %2907 = vmatpush.msra.mxu0 0.0
    %2908 = vmatpush.msra.mxu0 0.0
    %2909 = vmatpush.msra.mxu0 0.0
    %2910 = vmatpush.msra.mxu0 0.0
    %2911 = vmatpush.msra.mxu0 0.0
    %2912 = vmatpush.msra.mxu0 0.0
    %2913 = vmatpush.msra.mxu0 0.0
    %2914 = vmatpush.msra.mxu0 0.0
    %2915 = vmatpush.msra.mxu0 0.0
    %2916 = vmatpush.msra.mxu0 0.0
    %2917 = vmatpush.msra.mxu0 0.0
    %2918 = vmatpush.msra.mxu0 %v2898
    %2919 = vmatmul.f32.gmra.mxu0 %v2901
    %v2920 = vpop.f32.mrf.mxu0
    %v2921 = vadd.f32 0.0, %v2920
    %2922 = vdwg.mxu0
    %2923 = vrot.lane.b32.xlu0 %v2587, 96
    %v2924 = vpop.permute.xlu0 %2923
    %v2927 = vsel %vm348, %v2890, 0
    %2929 = vmatpush.msra.mxu0 0.0
    %2930 = vmatpush.msra.mxu0 0.0
    %2931 = vmatpush.msra.mxu0 0.0
    %2932 = vmatpush.msra.mxu0 0.0
    %2933 = vmatpush.msra.mxu0 0.0
    %2934 = vmatpush.msra.mxu0 0.0
    %2935 = vmatpush.msra.mxu0 0.0
    %2936 = vmatpush.msra.mxu0 0.0
    %2937 = vmatpush.msra.mxu0 0.0
    %2938 = vmatpush.msra.mxu0 0.0
    %2939 = vmatpush.msra.mxu0 0.0
    %2940 = vmatpush.msra.mxu0 0.0
    %2941 = vmatpush.msra.mxu0 0.0
    %2942 = vmatpush.msra.mxu0 0.0
    %2943 = vmatpush.msra.mxu0 0.0
    %2944 = vmatpush.msra.mxu0 %v2924
    %2945 = vmatmul.f32.gmra.mxu0 %v2927
    %v2946 = vpop.f32.mrf.mxu0
    %v2947 = vadd.f32 0.0, %v2946
    %2948 = vdwg.mxu0
    %2949 = vrot.lane.b32.xlu0 %v2606, 96
    %v2950 = vpop.permute.xlu0 %2949
    %v2953 = vsel %vm348, %v2891, 0
    %2955 = vmatpush.msra.mxu0 0.0
    %2956 = vmatpush.msra.mxu0 0.0
    %2957 = vmatpush.msra.mxu0 0.0
    %2958 = vmatpush.msra.mxu0 0.0
    %2959 = vmatpush.msra.mxu0 0.0
    %2960 = vmatpush.msra.mxu0 0.0
    %2961 = vmatpush.msra.mxu0 0.0
    %2962 = vmatpush.msra.mxu0 0.0
    %2963 = vmatpush.msra.mxu0 0.0
    %2964 = vmatpush.msra.mxu0 0.0
    %2965 = vmatpush.msra.mxu0 0.0
    %2966 = vmatpush.msra.mxu0 0.0
    %2967 = vmatpush.msra.mxu0 0.0
    %2968 = vmatpush.msra.mxu0 0.0
    %2969 = vmatpush.msra.mxu0 0.0
    %2970 = vmatpush.msra.mxu0 %v2950
    %2971 = vmatmul.f32.gmra.mxu0 %v2953
    %v2972 = vpop.f32.mrf.mxu0
    %v2973 = vadd.f32 0.0, %v2972
    %2974 = vdwg.mxu0
    %2975 = vrot.lane.b32.xlu0 %v2608, 96
    %v2976 = vpop.permute.xlu0 %2975
    %v2979 = vsel %vm348, %v2892, 0
    %2981 = vmatpush.msra.mxu0 0.0
    %2982 = vmatpush.msra.mxu0 0.0
    %2983 = vmatpush.msra.mxu0 0.0
    %2984 = vmatpush.msra.mxu0 0.0
    %2985 = vmatpush.msra.mxu0 0.0
    %2986 = vmatpush.msra.mxu0 0.0
    %2987 = vmatpush.msra.mxu0 0.0
    %2988 = vmatpush.msra.mxu0 0.0
    %2989 = vmatpush.msra.mxu0 0.0
    %2990 = vmatpush.msra.mxu0 0.0
    %2991 = vmatpush.msra.mxu0 0.0
    %2992 = vmatpush.msra.mxu0 0.0
    %2993 = vmatpush.msra.mxu0 0.0
    %2994 = vmatpush.msra.mxu0 0.0
    %2995 = vmatpush.msra.mxu0 0.0
    %2996 = vmatpush.msra.mxu0 %v2976
    %2997 = vmatmul.f32.gmra.mxu0 %v2979
    %v2998 = vpop.f32.mrf.mxu0
    %v2999 = vadd.f32 0.0, %v2998
    %3000 = vdwg.mxu0
    %3001 = vrot.lane.b32.xlu0 %v2610, 96
    %v3002 = vpop.permute.xlu0 %3001
    %v3005 = vsel %vm348, %v2893, 0
    %3007 = vmatpush.msra.mxu0 0.0
    %3008 = vmatpush.msra.mxu0 0.0
    %3009 = vmatpush.msra.mxu0 0.0
    %3010 = vmatpush.msra.mxu0 0.0
    %3011 = vmatpush.msra.mxu0 0.0
    %3012 = vmatpush.msra.mxu0 0.0
    %3013 = vmatpush.msra.mxu0 0.0
    %3014 = vmatpush.msra.mxu0 0.0
    %3015 = vmatpush.msra.mxu0 0.0
    %3016 = vmatpush.msra.mxu0 0.0
    %3017 = vmatpush.msra.mxu0 0.0
    %3018 = vmatpush.msra.mxu0 0.0
    %3019 = vmatpush.msra.mxu0 0.0
    %3020 = vmatpush.msra.mxu0 0.0
    %3021 = vmatpush.msra.mxu0 0.0
    %3022 = vmatpush.msra.mxu0 %v3002
    %3023 = vmatmul.f32.gmra.mxu0 %v3005
    %v3024 = vpop.f32.mrf.mxu0
    %v3025 = vadd.f32 0.0, %v3024
    %3026 = vdwg.mxu0
    %3027 = vrot.lane.b32.xlu0 %v2612, 96
    %v3028 = vpop.permute.xlu0 %3027
    %v3031 = vsel %vm348, %v2894, 0
    %3033 = vmatpush.msra.mxu0 0.0
    %3034 = vmatpush.msra.mxu0 0.0
    %3035 = vmatpush.msra.mxu0 0.0
    %3036 = vmatpush.msra.mxu0 0.0
    %3037 = vmatpush.msra.mxu0 0.0
    %3038 = vmatpush.msra.mxu0 0.0
    %3039 = vmatpush.msra.mxu0 0.0
    %3040 = vmatpush.msra.mxu0 0.0
    %3041 = vmatpush.msra.mxu0 0.0
    %3042 = vmatpush.msra.mxu0 0.0
    %3043 = vmatpush.msra.mxu0 0.0
    %3044 = vmatpush.msra.mxu0 0.0
    %3045 = vmatpush.msra.mxu0 0.0
    %3046 = vmatpush.msra.mxu0 0.0
    %3047 = vmatpush.msra.mxu0 0.0
    %3048 = vmatpush.msra.mxu0 %v3028
    %3049 = vmatmul.f32.gmra.mxu0 %v3031
    %v3050 = vpop.f32.mrf.mxu0
    %v3051 = vadd.f32 0.0, %v3050
    %3052 = vdwg.mxu0
    %3053 = vrot.lane.b32.xlu0 %v2614, 96
    %v3054 = vpop.permute.xlu0 %3053
    %v3057 = vsel %vm348, %v2895, 0
    %3059 = vmatpush.msra.mxu0 0.0
    %3060 = vmatpush.msra.mxu0 0.0
    %3061 = vmatpush.msra.mxu0 0.0
    %3062 = vmatpush.msra.mxu0 0.0
    %3063 = vmatpush.msra.mxu0 0.0
    %3064 = vmatpush.msra.mxu0 0.0
    %3065 = vmatpush.msra.mxu0 0.0
    %3066 = vmatpush.msra.mxu0 0.0
    %3067 = vmatpush.msra.mxu0 0.0
    %3068 = vmatpush.msra.mxu0 0.0
    %3069 = vmatpush.msra.mxu0 0.0
    %3070 = vmatpush.msra.mxu0 0.0
    %3071 = vmatpush.msra.mxu0 0.0
    %3072 = vmatpush.msra.mxu0 0.0
    %3073 = vmatpush.msra.mxu0 0.0
    %3074 = vmatpush.msra.mxu0 %v3054
    %3075 = vmatmul.f32.gmra.mxu0 %v3057
    %v3076 = vpop.f32.mrf.mxu0
    %v3077 = vadd.f32 0.0, %v3076
    %3078 = vdwg.mxu0
    %3079 = vrot.lane.b32.xlu0 %v2616, 96
    %v3080 = vpop.permute.xlu0 %3079
    %v3083 = vsel %vm348, %v2896, 0
    %3085 = vmatpush.msra.mxu0 0.0
    %3086 = vmatpush.msra.mxu0 0.0
    %3087 = vmatpush.msra.mxu0 0.0
    %3088 = vmatpush.msra.mxu0 0.0
    %3089 = vmatpush.msra.mxu0 0.0
    %3090 = vmatpush.msra.mxu0 0.0
    %3091 = vmatpush.msra.mxu0 0.0
    %3092 = vmatpush.msra.mxu0 0.0
    %3093 = vmatpush.msra.mxu0 0.0
    %3094 = vmatpush.msra.mxu0 0.0
    %3095 = vmatpush.msra.mxu0 0.0
    %3096 = vmatpush.msra.mxu0 0.0
    %3097 = vmatpush.msra.mxu0 0.0
    %3098 = vmatpush.msra.mxu0 0.0
    %3099 = vmatpush.msra.mxu0 0.0
    %3100 = vmatpush.msra.mxu0 %v3080
    %3101 = vmatmul.f32.gmra.mxu0 %v3083
    %v3102 = vpop.f32.mrf.mxu0
    %v3103 = vadd.f32 0.0, %v3102
    %3104 = vdwg.mxu0
    %3107 = vrot.lane.b32.xlu0 %v2973, 8
    %v3108 = vpop.permute.xlu0 %3107
    %3109 = vrot.lane.b32.xlu0 %v2999, 8
    %v3110 = vpop.permute.xlu0 %3109
    %3115 = vrot.lane.b32.xlu0 %v3025, 16
    %v3116 = vpop.permute.xlu0 %3115
    %3117 = vrot.lane.b32.xlu0 %v3051, 16
    %v3118 = vpop.permute.xlu0 %3117
    %3123 = vrot.lane.b32.xlu0 %v3077, 24
    %v3124 = vpop.permute.xlu0 %3123
    %3125 = vrot.lane.b32.xlu0 %v3103, 24
    %v3126 = vpop.permute.xlu0 %3125
    %v3129 = vsel %vm348, %v2921, %v3108
    %v3130 = vsel %vm348, %v2947, %v3110
    %v3131 = vsel %vm887, %v3129, %v3116
    %v3132 = vsel %vm887, %v3130, %v3118
    %v3133 = vsel %vm890, %v3131, %v3124
    %v3134 = vsel %vm890, %v3132, %v3126
    %v3136 = vperm.slane %v1826, 0
    %v3139 = vsel %vm302, %v3133, 0
    %v3142 = vsel %vm302, %v3134, 0
    %3144 = vmatpush.msra.mxu0 0.0
    %3145 = vmatpush.msra.mxu0 0.0
    %3146 = vmatpush.msra.mxu0 0.0
    %3147 = vmatpush.msra.mxu0 0.0
    %3148 = vmatpush.msra.mxu0 0.0
    %3149 = vmatpush.msra.mxu0 0.0
    %3150 = vmatpush.msra.mxu0 0.0
    %3151 = vmatpush.msra.mxu0 0.0
    %3152 = vmatpush.msra.mxu0 0.0
    %3153 = vmatpush.msra.mxu0 0.0
    %3154 = vmatpush.msra.mxu0 0.0
    %3155 = vmatpush.msra.mxu0 0.0
    %3156 = vmatpush.msra.mxu0 %v1825
    %3157 = vmatpush.msra.mxu0 %v1824
    %3158 = vmatpush.msra.mxu0 %v1823
    %3159 = vmatpush.msra.mxu0 %v1822
    %3160 = vmatmul.f32.gmra.mxu0 %v3139
    %v3161 = vpop.f32.mrf.mxu0
    %v3162 = vadd.f32 %v3136, %v3161
    %3163 = vmatmul.f32.gmra.mxu0 %v3142
    %v3164 = vpop.f32.mrf.mxu0
    %v3165 = vadd.f32 %v3136, %v3164
    %3166 = vdwg.mxu0
    %v3167 = vadd.f32 %v2529, %v3162
    %v3168 = vadd.f32 %v2530, %v3165
    %v3169 = vsel %vm302, %v3167, 0.0
    %3170 = vadd.xlane.f32.xlu0 %v3169
    %v3171 = vpop.xlane.xlu0 %3170
    %v3172 = vsel %vm302, %v3168, 0.0
    %3173 = vadd.xlane.f32.xlu0 %v3172
    %v3174 = vpop.xlane.xlu0 %3173
    %v3175 = vmul.f32 %v3171, %v939
    %v3176 = vmul.f32 %v3174, %v939
    %v3177 = vsub.f32 %v3167, %v3175
    %v3178 = vsub.f32 %v3168, %v3176
    %v3179 = vmul.f32 %v3177, %v3177
    %v3180 = vmul.f32 %v3178, %v3178
    %v3181 = vsel %vm302, %v3179, 0.0
    %3182 = vadd.xlane.f32.xlu0 %v3181
    %v3183 = vpop.xlane.xlu0 %3182
    %v3184 = vsel %vm302, %v3180, 0.0
    %3185 = vadd.xlane.f32.xlu0 %v3184
    %v3186 = vpop.xlane.xlu0 %3185
    %v3187 = vmul.f32 %v3183, %v939
    %v3188 = vmul.f32 %v3186, %v939
    %v3189 = vadd.f32 %v3187, 1e-05
    %v3190 = vadd.f32 %v3188, 1e-05
    %v3191 = vrsqrt.pop %v3189
    %v3192 = vmul.f32 %v3191, %v3189
    %v3193 = vmul.f32 %v3192, %v3191
    %v3194 = vmul.f32 0.5, %v3193
    %v3195 = vsub.f32 1.5, %v3194
    %v3196 = vmul.f32 %v3191, %v3195
    %vm3197 = vweird.f32 %v3189
    %vm3198 = vweird.f32 %v3191
    %vm3199 = vmor %vm3197, %vm3198
    %v3200 = vsel %vm3199, %v3191, %v3196
    %v3201 = vrsqrt.pop %v3190
    %v3202 = vmul.f32 %v3201, %v3190
    %v3203 = vmul.f32 %v3202, %v3201
    %v3204 = vmul.f32 0.5, %v3203
    %v3205 = vsub.f32 1.5, %v3204
    %v3206 = vmul.f32 %v3201, %v3205
    %vm3207 = vweird.f32 %v3190
    %vm3208 = vweird.f32 %v3201
    %vm3209 = vmor %vm3207, %vm3208
    %v3210 = vsel %vm3209, %v3201, %v3206
    %v3211 = vmul.f32 %v3177, %v3200
    %v3212 = vmul.f32 %v3178, %v3210
    %v3214 = vperm.slane %v1851, 0
    %v3216 = vmul.f32 %v3211, %v3214
    %v3217 = vmul.f32 %v3212, %v3214
    %v3219 = vperm.slane %v1852, 0
    %v3221 = vadd.f32 %v3216, %v3219
    %v3222 = vadd.f32 %v3217, %v3219
    %v3224 = vperm.slane %v1831, 0
    %v3227 = vsel %vm302, %v3221, 0
    %v3230 = vsel %vm302, %v3222, 0
    %3232 = vmatpush.msra.mxu0 0.0
    %3233 = vmatpush.msra.mxu0 0.0
    %3234 = vmatpush.msra.mxu0 0.0
    %3235 = vmatpush.msra.mxu0 0.0
    %3236 = vmatpush.msra.mxu0 0.0
    %3237 = vmatpush.msra.mxu0 0.0
    %3238 = vmatpush.msra.mxu0 0.0
    %3239 = vmatpush.msra.mxu0 0.0
    %3240 = vmatpush.msra.mxu0 0.0
    %3241 = vmatpush.msra.mxu0 0.0
    %3242 = vmatpush.msra.mxu0 0.0
    %3243 = vmatpush.msra.mxu0 0.0
    %3244 = vmatpush.msra.mxu0 %v1830
    %3245 = vmatpush.msra.mxu0 %v1829
    %3246 = vmatpush.msra.mxu0 %v1828
    %3247 = vmatpush.msra.mxu0 %v1827
    %3248 = vmatmul.f32.gmra.mxu0 %v3227
    %v3249 = vpop.f32.mrf.mxu0
    %v3250 = vadd.f32 %v3224, %v3249
    %3251 = vmatmul.f32.gmra.mxu0 %v3230
    %v3252 = vpop.f32.mrf.mxu0
    %v3253 = vadd.f32 %v3224, %v3252
    %3254 = vdwg.mxu0
    %v3255 = vmax.f32 %v3250, 0.0
    %v3256 = vmax.f32 %v3253, 0.0
    %v3258 = vperm.slane %v1848, 0
    %3260 = vmatpush.msra.mxu0 %v1847
    %3261 = vmatpush.msra.mxu0 %v1846
    %3262 = vmatpush.msra.mxu0 %v1845
    %3263 = vmatpush.msra.mxu0 %v1844
    %3264 = vmatpush.msra.mxu0 %v1843
    %3265 = vmatpush.msra.mxu0 %v1842
    %3266 = vmatpush.msra.mxu0 %v1841
    %3267 = vmatpush.msra.mxu0 %v1840
    %3268 = vmatpush.msra.mxu0 %v1839
    %3269 = vmatpush.msra.mxu0 %v1838
    %3270 = vmatpush.msra.mxu0 %v1837
    %3271 = vmatpush.msra.mxu0 %v1836
    %3272 = vmatpush.msra.mxu0 %v1835
    %3273 = vmatpush.msra.mxu0 %v1834
    %3274 = vmatpush.msra.mxu0 %v1833
    %3275 = vmatpush.msra.mxu0 %v1832
    %3276 = vmatmul.f32.gmra.mxu0 %v3255
    %v3277 = vpop.f32.mrf.mxu0
    %v3278 = vadd.f32 %v3258, %v3277
    %3279 = vmatmul.f32.gmra.mxu0 %v3256
    %v3280 = vpop.f32.mrf.mxu0
    %v3281 = vadd.f32 %v3258, %v3280
    %3282 = vdwg.mxu0
    %v3283 = vadd.f32 %v3221, %v3278
    %v3284 = vadd.f32 %v3222, %v3281
    %v3285 = vsel %vm302, %v3283, 0.0
    %3286 = vadd.xlane.f32.xlu0 %v3285
    %v3287 = vpop.xlane.xlu0 %3286
    %v3288 = vsel %vm302, %v3284, 0.0
    %3289 = vadd.xlane.f32.xlu0 %v3288
    %v3290 = vpop.xlane.xlu0 %3289
    %v3291 = vmul.f32 %v3287, %v939
    %v3292 = vmul.f32 %v3290, %v939
    %v3293 = vsub.f32 %v3283, %v3291
    %v3294 = vsub.f32 %v3284, %v3292
    %v3295 = vmul.f32 %v3293, %v3293
    %v3296 = vmul.f32 %v3294, %v3294
    %v3297 = vsel %vm302, %v3295, 0.0
    %3298 = vadd.xlane.f32.xlu0 %v3297
    %v3299 = vpop.xlane.xlu0 %3298
    %v3300 = vsel %vm302, %v3296, 0.0
    %3301 = vadd.xlane.f32.xlu0 %v3300
    %v3302 = vpop.xlane.xlu0 %3301
    %v3303 = vmul.f32 %v3299, %v939
    %v3304 = vmul.f32 %v3302, %v939
    %v3305 = vadd.f32 %v3303, 1e-05
    %v3306 = vadd.f32 %v3304, 1e-05
    %v3307 = vrsqrt.pop %v3305
    %v3308 = vmul.f32 %v3307, %v3305
    %v3309 = vmul.f32 %v3308, %v3307
    %v3310 = vmul.f32 0.5, %v3309
    %v3311 = vsub.f32 1.5, %v3310
    %v3312 = vmul.f32 %v3307, %v3311
    %vm3313 = vweird.f32 %v3305
    %vm3314 = vweird.f32 %v3307
    %vm3315 = vmor %vm3313, %vm3314
    %v3316 = vsel %vm3315, %v3307, %v3312
    %v3317 = vrsqrt.pop %v3306
    %v3318 = vmul.f32 %v3317, %v3306
    %v3319 = vmul.f32 %v3318, %v3317
    %v3320 = vmul.f32 0.5, %v3319
    %v3321 = vsub.f32 1.5, %v3320
    %v3322 = vmul.f32 %v3317, %v3321
    %vm3323 = vweird.f32 %v3306
    %vm3324 = vweird.f32 %v3317
    %vm3325 = vmor %vm3323, %vm3324
    %v3326 = vsel %vm3325, %v3317, %v3322
    %v3327 = vmul.f32 %v3293, %v3316
    %v3328 = vmul.f32 %v3294, %v3326
    %v3330 = vperm.slane %v1853, 0
    %v3332 = vmul.f32 %v3327, %v3330
    %v3333 = vmul.f32 %v3328, %v3330
    %v3335 = vperm.slane %v1854, 0
    %v3337 = vadd.f32 %v3332, %v3335
    %v3338 = vadd.f32 %v3333, %v3335
    %v3339 = vld [vmem:[%s85] sm:$0xff]
    %v3340 = vld [vmem:[%s85 + $0x8] sm:$0xff]
    %v3341 = vld [vmem:[%s85 + $0x10] sm:$0xff]
    %v3342 = vld [vmem:[%s85 + $0x18] sm:$0xff]
    %v3343 = vld [vmem:[#allocation7] sm:$0x1]
    %v3345 = vperm.slane %v3343, 0
    %v3348 = vsel %vm302, %v3337, 0
    %v3351 = vsel %vm302, %v3338, 0
    %3353 = vmatpush.msra.mxu0 0.0
    %3354 = vmatpush.msra.mxu0 0.0
    %3355 = vmatpush.msra.mxu0 0.0
    %3356 = vmatpush.msra.mxu0 0.0
    %3357 = vmatpush.msra.mxu0 0.0
    %3358 = vmatpush.msra.mxu0 0.0
    %3359 = vmatpush.msra.mxu0 0.0
    %3360 = vmatpush.msra.mxu0 0.0
    %3361 = vmatpush.msra.mxu0 0.0
    %3362 = vmatpush.msra.mxu0 0.0
    %3363 = vmatpush.msra.mxu0 0.0
    %3364 = vmatpush.msra.mxu0 0.0
    %3365 = vmatpush.msra.mxu0 %v3342
    %3366 = vmatpush.msra.mxu0 %v3341
    %3367 = vmatpush.msra.mxu0 %v3340
    %3368 = vmatpush.msra.mxu0 %v3339
    %3369 = vmatmul.f32.gmra.mxu0 %v3348
    %v3370 = vpop.f32.mrf.mxu0
    %v3371 = vadd.f32 %v3345, %v3370
    %3372 = vmatmul.f32.gmra.mxu0 %v3351
    %v3373 = vpop.f32.mrf.mxu0
    %v3374 = vadd.f32 %v3345, %v3373
    %3375 = vdwg.mxu0
    %3376 = vst [vmem:[%s89] sm:$0xff] %v3371
    %3377 = vst [vmem:[%s89 + $0x8] sm:$0xff] %v3374
    // Predicated region
    $region194: #{decoder_forward.1} parent=1 // pred_check
      _
    $region195: #{decoder_forward.1} parent=1 // pred_check_branch
      %3379 = sbr.rel (0) target = $region197
    $region196: #{decoder_forward.1} parent=1 // pred_region
      _
    $region197: #{decoder_forward.1} parent=1 // pred_fallthru
      _
    // Predicated region
    $region198: #{decoder_forward.1} parent=1 // pred_check
      _
    $region199: #{decoder_forward.1} parent=1 // pred_check_branch
      %3381 = sbr.rel (0) target = $region201
    $region200: #{decoder_forward.1} parent=1 // pred_region
      _
    $region201: #{decoder_forward.1} parent=1 // pred_fallthru
      _
    %3382 = vsyncpa [#allocation3], 1
    %3383 = vsyncpa [#allocation5], 1
    %3384 = vsyncpa [#allocation8], 1

</llo_original>
